<compile_context>
chip_gen: v7x
topology: tpu7x:2x2x1
jax: 0.10.0
libtpu: 0.0.40
codegen_flags: <defaults>
</compile_context>

<pallas_src>
import math
import functools
import numpy as np
import jax
import jax.numpy as jnp
from jax.experimental import pallas as pl
from jax.experimental.pallas import tpu as pltpu


_LAYER_KEYS = ('a1', 'g1', 'wq', 'bq', 'wk', 'bk', 'wv', 'bv',
               'wo', 'bo', 'a2', 'g2', 'w1', 'c1', 'w2', 'c2')

_FF_CHUNK = 1024  # chunk width for d_ff (no-op when d_ff <= 1024)


def _vmem_limit_bytes():
    """Per-generation VMEM limit: ~3/4 of physical, capped at 96 MiB.

    v7x (64 MiB physical) -> 48 MiB; v5e/v6e (128 MiB) -> 96 MiB; fallback 48 MiB.
    """
    cap = 64 * 1024 * 1024
    try:
        info = pltpu.get_tpu_info()
        cap = int(getattr(info, "vmem_capacity_bytes", cap))
    except Exception:
        pass
    return int(min(cap * 3 // 4, 96 * 1024 * 1024))


# ----------------------------- in-kernel helpers -----------------------------

def _norm(x, alpha, beta, eps=1e-6):
    """torch `Norm`: alpha*(x-mean)/(std+eps)+beta with *unbiased* std (n-1)."""
    d = x.shape[-1]
    m = jnp.mean(x, axis=-1, keepdims=True)
    c = x - m
    var = jnp.sum(c * c, axis=-1, keepdims=True) * (1.0 / (d - 1))
    inv = pl.reciprocal(jnp.sqrt(var) + eps, approx=True)
    return alpha * c * inv + beta


def _layer_body(x, mask_bias, w, *, B, S, D, heads, d_k):
    """One pre-norm encoder layer on the (B, S, D) residual slab; returns (B, S, D) f32."""
    (a1, g1, wq, bq, wk, bk, wv, bv, wo, bo, a2, g2, w1, c1, w2, c2) = w
    M = B * S
    d_ff = w1.shape[1]
    xf = x.reshape(M, D)

    # ---- pre-norm 1 + multi-head self-attention (projections batched: M = B*S) ----
    x2 = _norm(xf, a1, g1).astype(jnp.bfloat16)
    q = jnp.dot(x2, wq, preferred_element_type=jnp.float32) + bq
    k = jnp.dot(x2, wk, preferred_element_type=jnp.float32) + bk
    v = jnp.dot(x2, wv, preferred_element_type=jnp.float32) + bv

    # Fold 1/sqrt(d_k) into q once (M*D work, not heads*S*S per batch).
    qb = (q * (1.0 / math.sqrt(d_k))).astype(jnp.bfloat16).reshape(B, S, D)
    vb = v.astype(jnp.bfloat16).reshape(B, S, D)
    # Hoist the K transpose out of the head loop: one transpose per layer,
    # per-head slices of kt are aligned sublane slices (d_k % 8 == 0).
    kt = jnp.swapaxes(k.reshape(B, S, D), 1, 2).astype(jnp.bfloat16)   # (B, D, S)

    # Accumulate the out-projection head by head (no concat, no lane relayout):
    #   attn += (softmax(q_h kt_h) v_h) @ wo[h*d_k:(h+1)*d_k, :]
    attn = jnp.zeros((M, D), jnp.float32)
    for h in range(heads):                                   # static, unrolled
        sl = slice(h * d_k, (h + 1) * d_k)
        q_h = qb[:, :, sl]                                   # (B, S, d_k)
        kt_h = kt[:, sl, :]                                  # (B, d_k, S) sublane slice
        v_h = vb[:, :, sl]                                   # (B, S, d_k)
        s = jnp.einsum('bqd,bds->bqs', q_h, kt_h,
                       preferred_element_type=jnp.float32) + mask_bias   # (B, S, S)
        s = s - jnp.max(s, axis=-1, keepdims=True)           # stable softmax
        e = jnp.exp(s)
        p = e * pl.reciprocal(jnp.sum(e, axis=-1, keepdims=True), approx=True)
        o_h = jnp.einsum('bqk,bkd->bqd', p.astype(jnp.bfloat16), v_h,
                         preferred_element_type=jnp.float32)             # (B, S, d_k)
        attn = attn + jnp.dot(o_h.reshape(M, d_k).astype(jnp.bfloat16), wo[sl, :],
                              preferred_element_type=jnp.float32)        # M = B*S rows
    x1 = xf + attn + bo                                      # dropout_1 -> identity

    # ---- pre-norm 2 + feed-forward (M = B*S, d_ff chunked to bound VMEM) ----
    x2 = _norm(x1, a2, g2).astype(jnp.bfloat16)
    chunk = min(d_ff, _FF_CHUNK)
    n_chunks = max(1, d_ff // chunk)
    ff = jnp.zeros((M, D), jnp.float32)
    for ci in range(n_chunks):                               # static, unrolled
        cs = slice(ci * chunk, (ci + 1) * chunk)
        h1 = jnp.maximum(
            jnp.dot(x2, w1[:, cs], preferred_element_type=jnp.float32) + c1[:, cs], 0.0)
        ff = ff + jnp.dot(h1.astype(jnp.bfloat16), w2[cs, :],
                          preferred_element_type=jnp.float32)
    out = x1 + ff + c2                                       # dropout_2 -> identity
    return out.reshape(B, S, D)


# --------------------------------- kernel ------------------------------------

def fused_encoder_kernel(x_ref, mask_ref, *refs, B, S, D, heads, d_k, n_layers):
    # refs = 16 stacked layer params, 4 head params, logits_ref, x_scratch
    (a1_ref, g1_ref, wq_ref, bq_ref, wk_ref, bk_ref, wv_ref, bv_ref,
     wo_ref, bo_ref, a2_ref, g2_ref, w1_ref, c1_ref, w2_ref, c2_ref,
     na_ref, ng_ref, fcw_ref, fcb_ref, logits_ref, x_scratch) = refs

    l = pl.program_id(0)

    @pl.when(l == 0)
    def _():
        x_scratch[...] = x_ref[...]          # load residual stream once

    mask = mask_ref[...]                     # (B, 1, S) key mask {0,1}
    mask_bias = jnp.where(mask == 0.0, -1000000000.0, 0.0)

    w = (a1_ref[0], g1_ref[0], wq_ref[0], bq_ref[0], wk_ref[0], bk_ref[0],
         wv_ref[0], bv_ref[0], wo_ref[0], bo_ref[0], a2_ref[0], g2_ref[0],
         w1_ref[0], c1_ref[0], w2_ref[0], c2_ref[0])

    x_new = _layer_body(x_scratch[...], mask_bias, w,
                        B=B, S=S, D=D, heads=heads, d_k=d_k)
    x_scratch[...] = x_new

    @pl.when(l == n_layers - 1)
    def _():
        # Final encoder Norm + masked mean pooling + fc (fused epilogue).
        xn = _norm(x_new, na_ref[...], ng_ref[...])                        # (B, S, D)
        m = jnp.swapaxes(mask, 1, 2)                                       # (B, S, 1)
        sum_emb = jnp.sum(xn * m, axis=1)          # VPU mul + sublane reduce, (B, D)
        sum_mask = jnp.maximum(jnp.sum(m, axis=1), 1e-9)                   # (B, 1)
        pooled = sum_emb * pl.reciprocal(sum_mask, approx=True)
        logits_ref[...] = (jnp.dot(pooled.astype(jnp.bfloat16), fcw_ref[...],
                                   preferred_element_type=jnp.float32)
                           + fcb_ref[...])                                  # (B, 2)


# --------------------------------- wrapper -----------------------------------

def transformer_forward(params, input_emb, attn_mask, heads):
    B, S, D = input_emb.shape
    d_k = D // heads
    layers = params['layers']                      # dict of (L, ...)-stacked arrays
    n_layers = layers['wq'].shape[0]

    # Positional encoding in plain JAX; XLA fuses it into the producer.
    x = input_emb * math.sqrt(D) + params['pe'][:, :S, :]

    weights = [layers[k] for k in _LAYER_KEYS]
    head_params = [params['norm_a'], params['norm_g'], params['fc_w'], params['fc_b']]

    def stacked_spec(arr):                         # per-layer block, indexed by grid l
        nd = arr.ndim
        blk = (1,) + arr.shape[1:]
        return pl.BlockSpec(blk, lambda l, _nd=nd: (l,) + (0,) * (_nd - 1))

    def const_spec(arr):                           # whole array, constant block index
        nd = arr.ndim
        return pl.BlockSpec(arr.shape, lambda l, _nd=nd: (0,) * _nd)

    in_specs = ([const_spec(x), const_spec(attn_mask)]
                + [stacked_spec(w) for w in weights]
                + [const_spec(p) for p in head_params])

    kernel = functools.partial(fused_encoder_kernel, B=B, S=S, D=D,
                               heads=heads, d_k=d_k, n_layers=n_layers)

    logits = pl.pallas_call(
        kernel,
        out_shape=jax.ShapeDtypeStruct((B, 2), jnp.float32),
        grid=(n_layers,),
        in_specs=in_specs,
        out_specs=pl.BlockSpec((B, 2), lambda l: (0, 0)),
        scratch_shapes=[pltpu.VMEM((B, S, D), jnp.float32)],   # persistent residual
        compiler_params=pltpu.CompilerParams(
            dimension_semantics=("arbitrary",),                # layers are sequential
            vmem_limit_bytes=_vmem_limit_bytes()),
    )(x, attn_mask, *weights, *head_params)
    return logits                                  # (B, 2)


# ------------------------------ parameter setup -------------------------------

def make_pe_table(max_seq_len, d_model):
    pe = np.zeros((max_seq_len, d_model), np.float32)
    for pos in range(max_seq_len):
        for i in range(0, d_model, 2):
            pe[pos, i] = math.sin(pos / 10000 ** (2 * i / d_model))
            pe[pos, i + 1] = math.cos(pos / 10000 ** (2 * (i + 1) / d_model))
    return jnp.asarray(pe)[None]                   # (1, max_seq_len, d_model)


def init_params(key, d_model, n_layers, heads, d_ff, max_seq_len=64):
    def dense(k, fan_in, fan_out):
        k1, k2 = jax.random.split(k)
        # weights in bf16 (MXU operands), biases in f32 (added to f32 accumulators)
        w = (jax.random.normal(k1, (fan_in, fan_out), jnp.float32) * 0.02
             ).astype(jnp.bfloat16)
        b = jax.random.normal(k2, (1, fan_out), jnp.float32) * 0.02
        return w, b

    keys = jax.random.split(key, n_layers + 1)
    per_layer = []
    for i in range(n_layers):
        ks = jax.random.split(keys[i], 6)
        wq, bq = dense(ks[0], d_model, d_model)
        wk, bk = dense(ks[1], d_model, d_model)
        wv, bv = dense(ks[2], d_model, d_model)
        wo, bo = dense(ks[3], d_model, d_model)
        w1, c1 = dense(ks[4], d_model, d_ff)
        w2, c2 = dense(ks[5], d_ff, d_model)
        per_layer.append(dict(
            a1=jnp.ones((1, d_model), jnp.float32), g1=jnp.zeros((1, d_model), jnp.float32),
            a2=jnp.ones((1, d_model), jnp.float32), g2=jnp.zeros((1, d_model), jnp.float32),
            wq=wq, bq=bq, wk=wk, bk=bk, wv=wv, bv=bv, wo=wo, bo=bo,
            w1=w1, c1=c1, w2=w2, c2=c2))

    # Stack across layers -> leading "layer" dim consumed by the layer grid axis.
    stacked = {k: jnp.stack([lp[k] for lp in per_layer], axis=0) for k in _LAYER_KEYS}

    fc_w, fc_b = dense(keys[-1], d_model, 2)
    return dict(
        pe=make_pe_table(max_seq_len, d_model),
        layers=stacked,
        norm_a=jnp.ones((1, d_model), jnp.float32),
        norm_g=jnp.zeros((1, d_model), jnp.float32),
        fc_w=fc_w, fc_b=fc_b)


# ----------------------------------- main -------------------------------------

if __name__ == "__main__":
    # Small, module-consistent shapes (reference uses d_model=768, N=4, heads=8, d_ff=2048).
    B, S, D = 2, 8, 128
    HEADS, N_LAYERS, D_FF = 8, 2, 256

    key = jax.random.PRNGKey(0)
    kp, kx = jax.random.split(key)

    params = init_params(kp, D, N_LAYERS, HEADS, D_FF)

    input_emb = jax.random.normal(kx, (B, S, D), jnp.float32)
    lens = jnp.array([S, S - 3])
    attn_mask = (jnp.arange(S)[None, :] < lens[:, None]).astype(jnp.float32)[:, None, :]  # (B,1,S)

    fwd = jax.jit(transformer_forward, static_argnums=(3,))
    out = fwd(params, input_emb, attn_mask, HEADS)
    out = jax.block_until_ready(out)
    assert out.shape == (B, 2) and out.dtype == jnp.float32
    print("KERNEL_OK")
</pallas_src>

<mosaic_0001>
module attributes {stable_mosaic.version = 11 : i64} {
  func.func @fused_encoder_kernel(%arg0: i32, %arg1: memref<2x8x128xf32, #tpu.memory_space<vmem>>, %arg2: memref<2x1x8xf32, #tpu.memory_space<vmem>>, %arg3: memref<1x1x128xf32, #tpu.memory_space<vmem>>, %arg4: memref<1x1x128xf32, #tpu.memory_space<vmem>>, %arg5: memref<1x128x128xbf16, #tpu.memory_space<vmem>>, %arg6: memref<1x1x128xf32, #tpu.memory_space<vmem>>, %arg7: memref<1x128x128xbf16, #tpu.memory_space<vmem>>, %arg8: memref<1x1x128xf32, #tpu.memory_space<vmem>>, %arg9: memref<1x128x128xbf16, #tpu.memory_space<vmem>>, %arg10: memref<1x1x128xf32, #tpu.memory_space<vmem>>, %arg11: memref<1x128x128xbf16, #tpu.memory_space<vmem>>, %arg12: memref<1x1x128xf32, #tpu.memory_space<vmem>>, %arg13: memref<1x1x128xf32, #tpu.memory_space<vmem>>, %arg14: memref<1x1x128xf32, #tpu.memory_space<vmem>>, %arg15: memref<1x128x256xbf16, #tpu.memory_space<vmem>>, %arg16: memref<1x1x256xf32, #tpu.memory_space<vmem>>, %arg17: memref<1x256x128xbf16, #tpu.memory_space<vmem>>, %arg18: memref<1x1x128xf32, #tpu.memory_space<vmem>>, %arg19: memref<1x128xf32, #tpu.memory_space<vmem>>, %arg20: memref<1x128xf32, #tpu.memory_space<vmem>>, %arg21: memref<128x2xbf16, #tpu.memory_space<vmem>>, %arg22: memref<1x2xf32, #tpu.memory_space<vmem>>, %arg23: memref<2x2xf32, #tpu.memory_space<vmem>>, %arg24: memref<2x8x128xf32, #tpu.memory_space<vmem>>) attributes {dimension_semantics = [#tpu.dimension_semantics<arbitrary>], iteration_bounds = array<i64: 2>, scalar_prefetch = 0 : i64, scratch_operands = 1 : i64, tpu.core_type = #tpu.core_type<tc>, window_params = [{pipeline_mode = #tpu.pipeline_mode<synchronous>, transform_indices = @transform_0, window_bounds = array<i64: 2, 8, 128>}, {pipeline_mode = #tpu.pipeline_mode<synchronous>, transform_indices = @transform_1, window_bounds = array<i64: 2, 1, 8>}, {transform_indices = @transform_2, window_bounds = array<i64: 1, 1, 128>}, {transform_indices = @transform_3, window_bounds = array<i64: 1, 1, 128>}, {transform_indices = @transform_4, window_bounds = array<i64: 1, 128, 128>}, {transform_indices = @transform_5, window_bounds = array<i64: 1, 1, 128>}, {transform_indices = @transform_6, window_bounds = array<i64: 1, 128, 128>}, {transform_indices = @transform_7, window_bounds = array<i64: 1, 1, 128>}, {transform_indices = @transform_8, window_bounds = array<i64: 1, 128, 128>}, {transform_indices = @transform_9, window_bounds = array<i64: 1, 1, 128>}, {transform_indices = @transform_10, window_bounds = array<i64: 1, 128, 128>}, {transform_indices = @transform_11, window_bounds = array<i64: 1, 1, 128>}, {transform_indices = @transform_12, window_bounds = array<i64: 1, 1, 128>}, {transform_indices = @transform_13, window_bounds = array<i64: 1, 1, 128>}, {transform_indices = @transform_14, window_bounds = array<i64: 1, 128, 256>}, {transform_indices = @transform_15, window_bounds = array<i64: 1, 1, 256>}, {transform_indices = @transform_16, window_bounds = array<i64: 1, 256, 128>}, {transform_indices = @transform_17, window_bounds = array<i64: 1, 1, 128>}, {pipeline_mode = #tpu.pipeline_mode<synchronous>, transform_indices = @transform_18, window_bounds = array<i64: 1, 128>}, {pipeline_mode = #tpu.pipeline_mode<synchronous>, transform_indices = @transform_19, window_bounds = array<i64: 1, 128>}, {pipeline_mode = #tpu.pipeline_mode<synchronous>, transform_indices = @transform_20, window_bounds = array<i64: 128, 2>}, {pipeline_mode = #tpu.pipeline_mode<synchronous>, transform_indices = @transform_21, window_bounds = array<i64: 1, 2>}, {pipeline_mode = #tpu.pipeline_mode<synchronous>, transform_indices = @transform_22, window_bounds = array<i64: 2, 2>}]} {
    %c0_i32 = arith.constant 0 : i32
    %0 = arith.cmpi eq, %arg0, %c0_i32 : i32
    %1 = arith.extui %0 : i1 to i32
    %c0_i32_0 = arith.constant 0 : i32
    %2 = arith.cmpi ne, %1, %c0_i32_0 : i32
    scf.if %2 {
      %c0_119 = arith.constant 0 : index
      %c0_120 = arith.constant 0 : index
      %c0_121 = arith.constant 0 : index
      %310 = vector.load %arg1[%c0_119, %c0_120, %c0_121] : memref<2x8x128xf32, #tpu.memory_space<vmem>>, vector<2x8x128xf32>
      %c0_122 = arith.constant 0 : index
      %c0_123 = arith.constant 0 : index
      %c0_124 = arith.constant 0 : index
      %311 = vector.load %arg24[%c0_122, %c0_123, %c0_124] : memref<2x8x128xf32, #tpu.memory_space<vmem>>, vector<2x8x128xf32>
      tpu.vector_store %arg24[%c0_122, %c0_123, %c0_124], %310 {strides = array<i32>} : memref<2x8x128xf32, #tpu.memory_space<vmem>>, vector<2x8x128xf32>,
    } else {
    }
    %c0 = arith.constant 0 : index
    %c0_1 = arith.constant 0 : index
    %c0_2 = arith.constant 0 : index
    %3 = vector.load %arg2[%c0, %c0_1, %c0_2] : memref<2x1x8xf32, #tpu.memory_space<vmem>>, vector<2x1x8xf32>
    %cst = arith.constant 0.000000e+00 : f32
    %4 = vector.broadcast %cst : f32 to vector<2x1x8xf32>
    %5 = arith.cmpf oeq, %3, %4 : vector<2x1x8xf32>
    %cst_3 = arith.constant -1.000000e+09 : f32
    %cst_4 = arith.constant 0.000000e+00 : f32
    %6 = vector.broadcast %cst_3 : f32 to vector<2x1x8xf32>
    %7 = vector.broadcast %cst_4 : f32 to vector<2x1x8xf32>
    %8 = arith.select %5, %6, %7 : vector<2x1x8xi1>, vector<2x1x8xf32>
    %c0_5 = arith.constant 0 : index
    %c0_6 = arith.constant 0 : index
    %c0_7 = arith.constant 0 : index
    %9 = vector.load %arg3[%c0_5, %c0_6, %c0_7] : memref<1x1x128xf32, #tpu.memory_space<vmem>>, vector<1x1x128xf32>
    %10 = vector.shape_cast %9 : vector<1x1x128xf32> to vector<1x128xf32>
    %c0_8 = arith.constant 0 : index
    %c0_9 = arith.constant 0 : index
    %c0_10 = arith.constant 0 : index
    %11 = vector.load %arg4[%c0_8, %c0_9, %c0_10] : memref<1x1x128xf32, #tpu.memory_space<vmem>>, vector<1x1x128xf32>
    %12 = vector.shape_cast %11 : vector<1x1x128xf32> to vector<1x128xf32>
    %c0_11 = arith.constant 0 : index
    %c0_12 = arith.constant 0 : index
    %c0_13 = arith.constant 0 : index
    %13 = vector.load %arg5[%c0_11, %c0_12, %c0_13] : memref<1x128x128xbf16, #tpu.memory_space<vmem>>, vector<1x128x128xbf16>
    %14 = vector.shape_cast %13 : vector<1x128x128xbf16> to vector<128x128xbf16>
    %c0_14 = arith.constant 0 : index
    %c0_15 = arith.constant 0 : index
    %c0_16 = arith.constant 0 : index
    %15 = vector.load %arg6[%c0_14, %c0_15, %c0_16] : memref<1x1x128xf32, #tpu.memory_space<vmem>>, vector<1x1x128xf32>
    %16 = vector.shape_cast %15 : vector<1x1x128xf32> to vector<1x128xf32>
    %c0_17 = arith.constant 0 : index
    %c0_18 = arith.constant 0 : index
    %c0_19 = arith.constant 0 : index
    %17 = vector.load %arg7[%c0_17, %c0_18, %c0_19] : memref<1x128x128xbf16, #tpu.memory_space<vmem>>, vector<1x128x128xbf16>
    %18 = vector.shape_cast %17 : vector<1x128x128xbf16> to vector<128x128xbf16>
    %c0_20 = arith.constant 0 : index
    %c0_21 = arith.constant 0 : index
    %c0_22 = arith.constant 0 : index
    %19 = vector.load %arg8[%c0_20, %c0_21, %c0_22] : memref<1x1x128xf32, #tpu.memory_space<vmem>>, vector<1x1x128xf32>
    %20 = vector.shape_cast %19 : vector<1x1x128xf32> to vector<1x128xf32>
    %c0_23 = arith.constant 0 : index
    %c0_24 = arith.constant 0 : index
    %c0_25 = arith.constant 0 : index
    %21 = vector.load %arg9[%c0_23, %c0_24, %c0_25] : memref<1x128x128xbf16, #tpu.memory_space<vmem>>, vector<1x128x128xbf16>
    %22 = vector.shape_cast %21 : vector<1x128x128xbf16> to vector<128x128xbf16>
    %c0_26 = arith.constant 0 : index
    %c0_27 = arith.constant 0 : index
    %c0_28 = arith.constant 0 : index
    %23 = vector.load %arg10[%c0_26, %c0_27, %c0_28] : memref<1x1x128xf32, #tpu.memory_space<vmem>>, vector<1x1x128xf32>
    %24 = vector.shape_cast %23 : vector<1x1x128xf32> to vector<1x128xf32>
    %c0_29 = arith.constant 0 : index
    %c0_30 = arith.constant 0 : index
    %c0_31 = arith.constant 0 : index
    %25 = vector.load %arg11[%c0_29, %c0_30, %c0_31] : memref<1x128x128xbf16, #tpu.memory_space<vmem>>, vector<1x128x128xbf16>
    %26 = vector.shape_cast %25 : vector<1x128x128xbf16> to vector<128x128xbf16>
    %c0_32 = arith.constant 0 : index
    %c0_33 = arith.constant 0 : index
    %c0_34 = arith.constant 0 : index
    %27 = vector.load %arg12[%c0_32, %c0_33, %c0_34] : memref<1x1x128xf32, #tpu.memory_space<vmem>>, vector<1x1x128xf32>
    %28 = vector.shape_cast %27 : vector<1x1x128xf32> to vector<1x128xf32>
    %c0_35 = arith.constant 0 : index
    %c0_36 = arith.constant 0 : index
    %c0_37 = arith.constant 0 : index
    %29 = vector.load %arg13[%c0_35, %c0_36, %c0_37] : memref<1x1x128xf32, #tpu.memory_space<vmem>>, vector<1x1x128xf32>
    %30 = vector.shape_cast %29 : vector<1x1x128xf32> to vector<1x128xf32>
    %c0_38 = arith.constant 0 : index
    %c0_39 = arith.constant 0 : index
    %c0_40 = arith.constant 0 : index
    %31 = vector.load %arg14[%c0_38, %c0_39, %c0_40] : memref<1x1x128xf32, #tpu.memory_space<vmem>>, vector<1x1x128xf32>
    %32 = vector.shape_cast %31 : vector<1x1x128xf32> to vector<1x128xf32>
    %c0_41 = arith.constant 0 : index
    %c0_42 = arith.constant 0 : index
    %c0_43 = arith.constant 0 : index
    %33 = vector.load %arg15[%c0_41, %c0_42, %c0_43] : memref<1x128x256xbf16, #tpu.memory_space<vmem>>, vector<1x128x256xbf16>
    %34 = vector.shape_cast %33 : vector<1x128x256xbf16> to vector<128x256xbf16>
    %c0_44 = arith.constant 0 : index
    %c0_45 = arith.constant 0 : index
    %c0_46 = arith.constant 0 : index
    %35 = vector.load %arg16[%c0_44, %c0_45, %c0_46] : memref<1x1x256xf32, #tpu.memory_space<vmem>>, vector<1x1x256xf32>
    %36 = vector.shape_cast %35 : vector<1x1x256xf32> to vector<1x256xf32>
    %c0_47 = arith.constant 0 : index
    %c0_48 = arith.constant 0 : index
    %c0_49 = arith.constant 0 : index
    %37 = vector.load %arg17[%c0_47, %c0_48, %c0_49] : memref<1x256x128xbf16, #tpu.memory_space<vmem>>, vector<1x256x128xbf16>
    %38 = vector.shape_cast %37 : vector<1x256x128xbf16> to vector<256x128xbf16>
    %c0_50 = arith.constant 0 : index
    %c0_51 = arith.constant 0 : index
    %c0_52 = arith.constant 0 : index
    %39 = vector.load %arg18[%c0_50, %c0_51, %c0_52] : memref<1x1x128xf32, #tpu.memory_space<vmem>>, vector<1x1x128xf32>
    %40 = vector.shape_cast %39 : vector<1x1x128xf32> to vector<1x128xf32>
    %c0_53 = arith.constant 0 : index
    %c0_54 = arith.constant 0 : index
    %c0_55 = arith.constant 0 : index
    %41 = vector.load %arg24[%c0_53, %c0_54, %c0_55] : memref<2x8x128xf32, #tpu.memory_space<vmem>>, vector<2x8x128xf32>
    %42 = vector.shape_cast %41 : vector<2x8x128xf32> to vector<16x128xf32>
    %cst_56 = arith.constant dense<0.000000e+00> : vector<16xf32>
    %43 = vector.multi_reduction <add>, %42, %cst_56 [1] : vector<16x128xf32> to vector<16xf32>
    %44 = vector.shape_cast %43 : vector<16xf32> to vector<16x1xf32>
    %cst_57 = arith.constant 1.280000e+02 : f32
    %45 = vector.broadcast %cst_57 : f32 to vector<16x1xf32>
    %46 = arith.divf %44, %45 : vector<16x1xf32>
    %47 = vector.broadcast %46 : vector<16x1xf32> to vector<16x128xf32>
    %48 = arith.subf %42, %47 : vector<16x128xf32>
    %49 = arith.mulf %48, %48 : vector<16x128xf32>
    %cst_58 = arith.constant dense<0.000000e+00> : vector<16xf32>
    %50 = vector.multi_reduction <add>, %49, %cst_58 [1] : vector<16x128xf32> to vector<16xf32>
    %51 = vector.shape_cast %50 : vector<16xf32> to vector<16x1xf32>
    %cst_59 = arith.constant 0.00787401571 : f32
    %52 = vector.broadcast %cst_59 : f32 to vector<16x1xf32>
    %53 = arith.mulf %51, %52 : vector<16x1xf32>
    %54 = math.sqrt %53 : vector<16x1xf32>
    %cst_60 = arith.constant 9.99999997E-7 : f32
    %55 = vector.broadcast %cst_60 : f32 to vector<16x1xf32>
    %56 = arith.addf %54, %55 : vector<16x1xf32>
    %57 = tpu.reciprocal %56 {approx = true} : vector<16x1xf32> -> vector<16x1xf32>
    %58 = vector.broadcast %10 : vector<1x128xf32> to vector<16x128xf32>
    %59 = arith.mulf %58, %48 : vector<16x128xf32>
    %60 = vector.broadcast %57 : vector<16x1xf32> to vector<16x128xf32>
    %61 = arith.mulf %59, %60 : vector<16x128xf32>
    %62 = vector.broadcast %12 : vector<1x128xf32> to vector<16x128xf32>
    %63 = arith.addf %61, %62 : vector<16x128xf32>
    %64 = arith.truncf %63 : vector<16x128xf32> to vector<16x128xbf16>
    %cst_61 = arith.constant dense<0.000000e+00> : vector<16x128xf32>
    %65 = tpu.matmul %64, %14, %cst_61 {dimension_numbers = #tpu.dot_dimension_numbers<[1], [0], [0], [1], [0, 0, 1, 1], [], []>} : vector<16x128xbf16>, vector<128x128xbf16>, vector<16x128xf32> -> vector<16x128xf32>
    %66 = vector.broadcast %16 : vector<1x128xf32> to vector<16x128xf32>
    %67 = arith.addf %65, %66 : vector<16x128xf32>
    %cst_62 = arith.constant dense<0.000000e+00> : vector<16x128xf32>
    %68 = tpu.matmul %64, %18, %cst_62 {dimension_numbers = #tpu.dot_dimension_numbers<[1], [0], [0], [1], [0, 0, 1, 1], [], []>} : vector<16x128xbf16>, vector<128x128xbf16>, vector<16x128xf32> -> vector<16x128xf32>
    %69 = vector.broadcast %20 : vector<1x128xf32> to vector<16x128xf32>
    %70 = arith.addf %68, %69 : vector<16x128xf32>
    %cst_63 = arith.constant dense<0.000000e+00> : vector<16x128xf32>
    %71 = tpu.matmul %64, %22, %cst_63 {dimension_numbers = #tpu.dot_dimension_numbers<[1], [0], [0], [1], [0, 0, 1, 1], [], []>} : vector<16x128xbf16>, vector<128x128xbf16>, vector<16x128xf32> -> vector<16x128xf32>
    %72 = vector.broadcast %24 : vector<1x128xf32> to vector<16x128xf32>
    %73 = arith.addf %71, %72 : vector<16x128xf32>
    %cst_64 = arith.constant 2.500000e-01 : f32
    %74 = vector.broadcast %cst_64 : f32 to vector<16x128xf32>
    %75 = arith.mulf %67, %74 : vector<16x128xf32>
    %76 = arith.truncf %75 : vector<16x128xf32> to vector<16x128xbf16>
    %77 = vector.shape_cast %76 : vector<16x128xbf16> to vector<2x8x128xbf16>
    %78 = arith.truncf %73 : vector<16x128xf32> to vector<16x128xbf16>
    %79 = vector.shape_cast %78 : vector<16x128xbf16> to vector<2x8x128xbf16>
    %80 = vector.shape_cast %70 : vector<16x128xf32> to vector<2x8x128xf32>
    %81 = tpu.transpose %80, [0, 2, 1] : vector<2x8x128xf32> -> vector<2x128x8xf32>
    %82 = arith.truncf %81 : vector<2x128x8xf32> to vector<2x128x8xbf16>
    %cst_65 = arith.constant 0.000000e+00 : f32
    %83 = vector.broadcast %cst_65 : f32 to vector<16x128xf32>
    %84 = vector.extract_strided_slice %77 {offsets = [0, 0, 0], sizes = [2, 8, 16], strides = [1, 1, 1]} : vector<2x8x128xbf16> to vector<2x8x16xbf16>
    %85 = vector.extract_strided_slice %82 {offsets = [0, 0, 0], sizes = [2, 16, 8], strides = [1, 1, 1]} : vector<2x128x8xbf16> to vector<2x16x8xbf16>
    %86 = vector.extract_strided_slice %79 {offsets = [0, 0, 0], sizes = [2, 8, 16], strides = [1, 1, 1]} : vector<2x8x128xbf16> to vector<2x8x16xbf16>
    "tpu.trace_start"() <{level = 10 : i32, message = "bqd,bds->bqs"}> : () -> ()
    %cst_66 = arith.constant dense<0.000000e+00> : vector<2x8x8xf32>
    %87 = tpu.matmul %84, %85, %cst_66 {dimension_numbers = #tpu.dot_dimension_numbers<[2], [1], [1], [2], [0, 0, 0, 1, 1, 2], [0], [0]>} : vector<2x8x16xbf16>, vector<2x16x8xbf16>, vector<2x8x8xf32> -> vector<2x8x8xf32>
    "tpu.trace_stop"() : () -> ()
    %88 = vector.broadcast %8 : vector<2x1x8xf32> to vector<2x8x8xf32>
    %89 = arith.addf %87, %88 : vector<2x8x8xf32>
    %cst_67 = arith.constant dense<0xFF800000> : vector<2x8xf32>
    %90 = vector.multi_reduction <maximumf>, %89, %cst_67 [2] : vector<2x8x8xf32> to vector<2x8xf32>
    %91 = vector.shape_cast %90 : vector<2x8xf32> to vector<2x8x1xf32>
    %92 = vector.broadcast %91 : vector<2x8x1xf32> to vector<2x8x8xf32>
    %93 = arith.subf %89, %92 : vector<2x8x8xf32>
    %94 = math.exp %93 : vector<2x8x8xf32>
    %cst_68 = arith.constant dense<0.000000e+00> : vector<2x8xf32>
    %95 = vector.multi_reduction <add>, %94, %cst_68 [2] : vector<2x8x8xf32> to vector<2x8xf32>
    %96 = vector.shape_cast %95 : vector<2x8xf32> to vector<2x8x1xf32>
    %97 = tpu.reciprocal %96 {approx = true} : vector<2x8x1xf32> -> vector<2x8x1xf32>
    %98 = vector.broadcast %97 : vector<2x8x1xf32> to vector<2x8x8xf32>
    %99 = arith.mulf %94, %98 : vector<2x8x8xf32>
    %100 = arith.truncf %99 : vector<2x8x8xf32> to vector<2x8x8xbf16>
    "tpu.trace_start"() <{level = 10 : i32, message = "bqk,bkd->bqd"}> : () -> ()
    %cst_69 = arith.constant dense<0.000000e+00> : vector<2x8x16xf32>
    %101 = tpu.matmul %100, %86, %cst_69 {dimension_numbers = #tpu.dot_dimension_numbers<[2], [1], [1], [2], [0, 0, 0, 1, 1, 2], [0], [0]>} : vector<2x8x8xbf16>, vector<2x8x16xbf16>, vector<2x8x16xf32> -> vector<2x8x16xf32>
    "tpu.trace_stop"() : () -> ()
    %102 = vector.shape_cast %101 : vector<2x8x16xf32> to vector<16x16xf32>
    %103 = arith.truncf %102 : vector<16x16xf32> to vector<16x16xbf16>
    %104 = vector.extract_strided_slice %26 {offsets = [0, 0], sizes = [16, 128], strides = [1, 1]} : vector<128x128xbf16> to vector<16x128xbf16>
    %cst_70 = arith.constant dense<0.000000e+00> : vector<16x128xf32>
    %105 = tpu.matmul %103, %104, %cst_70 {dimension_numbers = #tpu.dot_dimension_numbers<[1], [0], [0], [1], [0, 0, 1, 1], [], []>} : vector<16x16xbf16>, vector<16x128xbf16>, vector<16x128xf32> -> vector<16x128xf32>
    %106 = arith.addf %83, %105 : vector<16x128xf32>
    %107 = vector.extract_strided_slice %77 {offsets = [0, 0, 16], sizes = [2, 8, 16], strides = [1, 1, 1]} : vector<2x8x128xbf16> to vector<2x8x16xbf16>
    %108 = vector.extract_strided_slice %82 {offsets = [0, 16, 0], sizes = [2, 16, 8], strides = [1, 1, 1]} : vector<2x128x8xbf16> to vector<2x16x8xbf16>
    %109 = vector.extract_strided_slice %79 {offsets = [0, 0, 16], sizes = [2, 8, 16], strides = [1, 1, 1]} : vector<2x8x128xbf16> to vector<2x8x16xbf16>
    "tpu.trace_start"() <{level = 10 : i32, message = "bqd,bds->bqs"}> : () -> ()
    %cst_71 = arith.constant dense<0.000000e+00> : vector<2x8x8xf32>
    %110 = tpu.matmul %107, %108, %cst_71 {dimension_numbers = #tpu.dot_dimension_numbers<[2], [1], [1], [2], [0, 0, 0, 1, 1, 2], [0], [0]>} : vector<2x8x16xbf16>, vector<2x16x8xbf16>, vector<2x8x8xf32> -> vector<2x8x8xf32>
    "tpu.trace_stop"() : () -> ()
    %111 = vector.broadcast %8 : vector<2x1x8xf32> to vector<2x8x8xf32>
    %112 = arith.addf %110, %111 : vector<2x8x8xf32>
    %cst_72 = arith.constant dense<0xFF800000> : vector<2x8xf32>
    %113 = vector.multi_reduction <maximumf>, %112, %cst_72 [2] : vector<2x8x8xf32> to vector<2x8xf32>
    %114 = vector.shape_cast %113 : vector<2x8xf32> to vector<2x8x1xf32>
    %115 = vector.broadcast %114 : vector<2x8x1xf32> to vector<2x8x8xf32>
    %116 = arith.subf %112, %115 : vector<2x8x8xf32>
    %117 = math.exp %116 : vector<2x8x8xf32>
    %cst_73 = arith.constant dense<0.000000e+00> : vector<2x8xf32>
    %118 = vector.multi_reduction <add>, %117, %cst_73 [2] : vector<2x8x8xf32> to vector<2x8xf32>
    %119 = vector.shape_cast %118 : vector<2x8xf32> to vector<2x8x1xf32>
    %120 = tpu.reciprocal %119 {approx = true} : vector<2x8x1xf32> -> vector<2x8x1xf32>
    %121 = vector.broadcast %120 : vector<2x8x1xf32> to vector<2x8x8xf32>
    %122 = arith.mulf %117, %121 : vector<2x8x8xf32>
    %123 = arith.truncf %122 : vector<2x8x8xf32> to vector<2x8x8xbf16>
    "tpu.trace_start"() <{level = 10 : i32, message = "bqk,bkd->bqd"}> : () -> ()
    %cst_74 = arith.constant dense<0.000000e+00> : vector<2x8x16xf32>
    %124 = tpu.matmul %123, %109, %cst_74 {dimension_numbers = #tpu.dot_dimension_numbers<[2], [1], [1], [2], [0, 0, 0, 1, 1, 2], [0], [0]>} : vector<2x8x8xbf16>, vector<2x8x16xbf16>, vector<2x8x16xf32> -> vector<2x8x16xf32>
    "tpu.trace_stop"() : () -> ()
    %125 = vector.shape_cast %124 : vector<2x8x16xf32> to vector<16x16xf32>
    %126 = arith.truncf %125 : vector<16x16xf32> to vector<16x16xbf16>
    %127 = vector.extract_strided_slice %26 {offsets = [16, 0], sizes = [16, 128], strides = [1, 1]} : vector<128x128xbf16> to vector<16x128xbf16>
    %cst_75 = arith.constant dense<0.000000e+00> : vector<16x128xf32>
    %128 = tpu.matmul %126, %127, %cst_75 {dimension_numbers = #tpu.dot_dimension_numbers<[1], [0], [0], [1], [0, 0, 1, 1], [], []>} : vector<16x16xbf16>, vector<16x128xbf16>, vector<16x128xf32> -> vector<16x128xf32>
    %129 = arith.addf %106, %128 : vector<16x128xf32>
    %130 = vector.extract_strided_slice %77 {offsets = [0, 0, 32], sizes = [2, 8, 16], strides = [1, 1, 1]} : vector<2x8x128xbf16> to vector<2x8x16xbf16>
    %131 = vector.extract_strided_slice %82 {offsets = [0, 32, 0], sizes = [2, 16, 8], strides = [1, 1, 1]} : vector<2x128x8xbf16> to vector<2x16x8xbf16>
    %132 = vector.extract_strided_slice %79 {offsets = [0, 0, 32], sizes = [2, 8, 16], strides = [1, 1, 1]} : vector<2x8x128xbf16> to vector<2x8x16xbf16>
    "tpu.trace_start"() <{level = 10 : i32, message = "bqd,bds->bqs"}> : () -> ()
    %cst_76 = arith.constant dense<0.000000e+00> : vector<2x8x8xf32>
    %133 = tpu.matmul %130, %131, %cst_76 {dimension_numbers = #tpu.dot_dimension_numbers<[2], [1], [1], [2], [0, 0, 0, 1, 1, 2], [0], [0]>} : vector<2x8x16xbf16>, vector<2x16x8xbf16>, vector<2x8x8xf32> -> vector<2x8x8xf32>
    "tpu.trace_stop"() : () -> ()
    %134 = vector.broadcast %8 : vector<2x1x8xf32> to vector<2x8x8xf32>
    %135 = arith.addf %133, %134 : vector<2x8x8xf32>
    %cst_77 = arith.constant dense<0xFF800000> : vector<2x8xf32>
    %136 = vector.multi_reduction <maximumf>, %135, %cst_77 [2] : vector<2x8x8xf32> to vector<2x8xf32>
    %137 = vector.shape_cast %136 : vector<2x8xf32> to vector<2x8x1xf32>
    %138 = vector.broadcast %137 : vector<2x8x1xf32> to vector<2x8x8xf32>
    %139 = arith.subf %135, %138 : vector<2x8x8xf32>
    %140 = math.exp %139 : vector<2x8x8xf32>
    %cst_78 = arith.constant dense<0.000000e+00> : vector<2x8xf32>
    %141 = vector.multi_reduction <add>, %140, %cst_78 [2] : vector<2x8x8xf32> to vector<2x8xf32>
    %142 = vector.shape_cast %141 : vector<2x8xf32> to vector<2x8x1xf32>
    %143 = tpu.reciprocal %142 {approx = true} : vector<2x8x1xf32> -> vector<2x8x1xf32>
    %144 = vector.broadcast %143 : vector<2x8x1xf32> to vector<2x8x8xf32>
    %145 = arith.mulf %140, %144 : vector<2x8x8xf32>
    %146 = arith.truncf %145 : vector<2x8x8xf32> to vector<2x8x8xbf16>
    "tpu.trace_start"() <{level = 10 : i32, message = "bqk,bkd->bqd"}> : () -> ()
    %cst_79 = arith.constant dense<0.000000e+00> : vector<2x8x16xf32>
    %147 = tpu.matmul %146, %132, %cst_79 {dimension_numbers = #tpu.dot_dimension_numbers<[2], [1], [1], [2], [0, 0, 0, 1, 1, 2], [0], [0]>} : vector<2x8x8xbf16>, vector<2x8x16xbf16>, vector<2x8x16xf32> -> vector<2x8x16xf32>
    "tpu.trace_stop"() : () -> ()
    %148 = vector.shape_cast %147 : vector<2x8x16xf32> to vector<16x16xf32>
    %149 = arith.truncf %148 : vector<16x16xf32> to vector<16x16xbf16>
    %150 = vector.extract_strided_slice %26 {offsets = [32, 0], sizes = [16, 128], strides = [1, 1]} : vector<128x128xbf16> to vector<16x128xbf16>
    %cst_80 = arith.constant dense<0.000000e+00> : vector<16x128xf32>
    %151 = tpu.matmul %149, %150, %cst_80 {dimension_numbers = #tpu.dot_dimension_numbers<[1], [0], [0], [1], [0, 0, 1, 1], [], []>} : vector<16x16xbf16>, vector<16x128xbf16>, vector<16x128xf32> -> vector<16x128xf32>
    %152 = arith.addf %129, %151 : vector<16x128xf32>
    %153 = vector.extract_strided_slice %77 {offsets = [0, 0, 48], sizes = [2, 8, 16], strides = [1, 1, 1]} : vector<2x8x128xbf16> to vector<2x8x16xbf16>
    %154 = vector.extract_strided_slice %82 {offsets = [0, 48, 0], sizes = [2, 16, 8], strides = [1, 1, 1]} : vector<2x128x8xbf16> to vector<2x16x8xbf16>
    %155 = vector.extract_strided_slice %79 {offsets = [0, 0, 48], sizes = [2, 8, 16], strides = [1, 1, 1]} : vector<2x8x128xbf16> to vector<2x8x16xbf16>
    "tpu.trace_start"() <{level = 10 : i32, message = "bqd,bds->bqs"}> : () -> ()
    %cst_81 = arith.constant dense<0.000000e+00> : vector<2x8x8xf32>
    %156 = tpu.matmul %153, %154, %cst_81 {dimension_numbers = #tpu.dot_dimension_numbers<[2], [1], [1], [2], [0, 0, 0, 1, 1, 2], [0], [0]>} : vector<2x8x16xbf16>, vector<2x16x8xbf16>, vector<2x8x8xf32> -> vector<2x8x8xf32>
    "tpu.trace_stop"() : () -> ()
    %157 = vector.broadcast %8 : vector<2x1x8xf32> to vector<2x8x8xf32>
    %158 = arith.addf %156, %157 : vector<2x8x8xf32>
    %cst_82 = arith.constant dense<0xFF800000> : vector<2x8xf32>
    %159 = vector.multi_reduction <maximumf>, %158, %cst_82 [2] : vector<2x8x8xf32> to vector<2x8xf32>
    %160 = vector.shape_cast %159 : vector<2x8xf32> to vector<2x8x1xf32>
    %161 = vector.broadcast %160 : vector<2x8x1xf32> to vector<2x8x8xf32>
    %162 = arith.subf %158, %161 : vector<2x8x8xf32>
    %163 = math.exp %162 : vector<2x8x8xf32>
    %cst_83 = arith.constant dense<0.000000e+00> : vector<2x8xf32>
    %164 = vector.multi_reduction <add>, %163, %cst_83 [2] : vector<2x8x8xf32> to vector<2x8xf32>
    %165 = vector.shape_cast %164 : vector<2x8xf32> to vector<2x8x1xf32>
    %166 = tpu.reciprocal %165 {approx = true} : vector<2x8x1xf32> -> vector<2x8x1xf32>
    %167 = vector.broadcast %166 : vector<2x8x1xf32> to vector<2x8x8xf32>
    %168 = arith.mulf %163, %167 : vector<2x8x8xf32>
    %169 = arith.truncf %168 : vector<2x8x8xf32> to vector<2x8x8xbf16>
    "tpu.trace_start"() <{level = 10 : i32, message = "bqk,bkd->bqd"}> : () -> ()
    %cst_84 = arith.constant dense<0.000000e+00> : vector<2x8x16xf32>
    %170 = tpu.matmul %169, %155, %cst_84 {dimension_numbers = #tpu.dot_dimension_numbers<[2], [1], [1], [2], [0, 0, 0, 1, 1, 2], [0], [0]>} : vector<2x8x8xbf16>, vector<2x8x16xbf16>, vector<2x8x16xf32> -> vector<2x8x16xf32>
    "tpu.trace_stop"() : () -> ()
    %171 = vector.shape_cast %170 : vector<2x8x16xf32> to vector<16x16xf32>
    %172 = arith.truncf %171 : vector<16x16xf32> to vector<16x16xbf16>
    %173 = vector.extract_strided_slice %26 {offsets = [48, 0], sizes = [16, 128], strides = [1, 1]} : vector<128x128xbf16> to vector<16x128xbf16>
    %cst_85 = arith.constant dense<0.000000e+00> : vector<16x128xf32>
    %174 = tpu.matmul %172, %173, %cst_85 {dimension_numbers = #tpu.dot_dimension_numbers<[1], [0], [0], [1], [0, 0, 1, 1], [], []>} : vector<16x16xbf16>, vector<16x128xbf16>, vector<16x128xf32> -> vector<16x128xf32>
    %175 = arith.addf %152, %174 : vector<16x128xf32>
    %176 = vector.extract_strided_slice %77 {offsets = [0, 0, 64], sizes = [2, 8, 16], strides = [1, 1, 1]} : vector<2x8x128xbf16> to vector<2x8x16xbf16>
    %177 = vector.extract_strided_slice %82 {offsets = [0, 64, 0], sizes = [2, 16, 8], strides = [1, 1, 1]} : vector<2x128x8xbf16> to vector<2x16x8xbf16>
    %178 = vector.extract_strided_slice %79 {offsets = [0, 0, 64], sizes = [2, 8, 16], strides = [1, 1, 1]} : vector<2x8x128xbf16> to vector<2x8x16xbf16>
    "tpu.trace_start"() <{level = 10 : i32, message = "bqd,bds->bqs"}> : () -> ()
    %cst_86 = arith.constant dense<0.000000e+00> : vector<2x8x8xf32>
    %179 = tpu.matmul %176, %177, %cst_86 {dimension_numbers = #tpu.dot_dimension_numbers<[2], [1], [1], [2], [0, 0, 0, 1, 1, 2], [0], [0]>} : vector<2x8x16xbf16>, vector<2x16x8xbf16>, vector<2x8x8xf32> -> vector<2x8x8xf32>
    "tpu.trace_stop"() : () -> ()
    %180 = vector.broadcast %8 : vector<2x1x8xf32> to vector<2x8x8xf32>
    %181 = arith.addf %179, %180 : vector<2x8x8xf32>
    %cst_87 = arith.constant dense<0xFF800000> : vector<2x8xf32>
    %182 = vector.multi_reduction <maximumf>, %181, %cst_87 [2] : vector<2x8x8xf32> to vector<2x8xf32>
    %183 = vector.shape_cast %182 : vector<2x8xf32> to vector<2x8x1xf32>
    %184 = vector.broadcast %183 : vector<2x8x1xf32> to vector<2x8x8xf32>
    %185 = arith.subf %181, %184 : vector<2x8x8xf32>
    %186 = math.exp %185 : vector<2x8x8xf32>
    %cst_88 = arith.constant dense<0.000000e+00> : vector<2x8xf32>
    %187 = vector.multi_reduction <add>, %186, %cst_88 [2] : vector<2x8x8xf32> to vector<2x8xf32>
    %188 = vector.shape_cast %187 : vector<2x8xf32> to vector<2x8x1xf32>
    %189 = tpu.reciprocal %188 {approx = true} : vector<2x8x1xf32> -> vector<2x8x1xf32>
    %190 = vector.broadcast %189 : vector<2x8x1xf32> to vector<2x8x8xf32>
    %191 = arith.mulf %186, %190 : vector<2x8x8xf32>
    %192 = arith.truncf %191 : vector<2x8x8xf32> to vector<2x8x8xbf16>
    "tpu.trace_start"() <{level = 10 : i32, message = "bqk,bkd->bqd"}> : () -> ()
    %cst_89 = arith.constant dense<0.000000e+00> : vector<2x8x16xf32>
    %193 = tpu.matmul %192, %178, %cst_89 {dimension_numbers = #tpu.dot_dimension_numbers<[2], [1], [1], [2], [0, 0, 0, 1, 1, 2], [0], [0]>} : vector<2x8x8xbf16>, vector<2x8x16xbf16>, vector<2x8x16xf32> -> vector<2x8x16xf32>
    "tpu.trace_stop"() : () -> ()
    %194 = vector.shape_cast %193 : vector<2x8x16xf32> to vector<16x16xf32>
    %195 = arith.truncf %194 : vector<16x16xf32> to vector<16x16xbf16>
    %196 = vector.extract_strided_slice %26 {offsets = [64, 0], sizes = [16, 128], strides = [1, 1]} : vector<128x128xbf16> to vector<16x128xbf16>
    %cst_90 = arith.constant dense<0.000000e+00> : vector<16x128xf32>
    %197 = tpu.matmul %195, %196, %cst_90 {dimension_numbers = #tpu.dot_dimension_numbers<[1], [0], [0], [1], [0, 0, 1, 1], [], []>} : vector<16x16xbf16>, vector<16x128xbf16>, vector<16x128xf32> -> vector<16x128xf32>
    %198 = arith.addf %175, %197 : vector<16x128xf32>
    %199 = vector.extract_strided_slice %77 {offsets = [0, 0, 80], sizes = [2, 8, 16], strides = [1, 1, 1]} : vector<2x8x128xbf16> to vector<2x8x16xbf16>
    %200 = vector.extract_strided_slice %82 {offsets = [0, 80, 0], sizes = [2, 16, 8], strides = [1, 1, 1]} : vector<2x128x8xbf16> to vector<2x16x8xbf16>
    %201 = vector.extract_strided_slice %79 {offsets = [0, 0, 80], sizes = [2, 8, 16], strides = [1, 1, 1]} : vector<2x8x128xbf16> to vector<2x8x16xbf16>
    "tpu.trace_start"() <{level = 10 : i32, message = "bqd,bds->bqs"}> : () -> ()
    %cst_91 = arith.constant dense<0.000000e+00> : vector<2x8x8xf32>
    %202 = tpu.matmul %199, %200, %cst_91 {dimension_numbers = #tpu.dot_dimension_numbers<[2], [1], [1], [2], [0, 0, 0, 1, 1, 2], [0], [0]>} : vector<2x8x16xbf16>, vector<2x16x8xbf16>, vector<2x8x8xf32> -> vector<2x8x8xf32>
    "tpu.trace_stop"() : () -> ()
    %203 = vector.broadcast %8 : vector<2x1x8xf32> to vector<2x8x8xf32>
    %204 = arith.addf %202, %203 : vector<2x8x8xf32>
    %cst_92 = arith.constant dense<0xFF800000> : vector<2x8xf32>
    %205 = vector.multi_reduction <maximumf>, %204, %cst_92 [2] : vector<2x8x8xf32> to vector<2x8xf32>
    %206 = vector.shape_cast %205 : vector<2x8xf32> to vector<2x8x1xf32>
    %207 = vector.broadcast %206 : vector<2x8x1xf32> to vector<2x8x8xf32>
    %208 = arith.subf %204, %207 : vector<2x8x8xf32>
    %209 = math.exp %208 : vector<2x8x8xf32>
    %cst_93 = arith.constant dense<0.000000e+00> : vector<2x8xf32>
    %210 = vector.multi_reduction <add>, %209, %cst_93 [2] : vector<2x8x8xf32> to vector<2x8xf32>
    %211 = vector.shape_cast %210 : vector<2x8xf32> to vector<2x8x1xf32>
    %212 = tpu.reciprocal %211 {approx = true} : vector<2x8x1xf32> -> vector<2x8x1xf32>
    %213 = vector.broadcast %212 : vector<2x8x1xf32> to vector<2x8x8xf32>
    %214 = arith.mulf %209, %213 : vector<2x8x8xf32>
    %215 = arith.truncf %214 : vector<2x8x8xf32> to vector<2x8x8xbf16>
    "tpu.trace_start"() <{level = 10 : i32, message = "bqk,bkd->bqd"}> : () -> ()
    %cst_94 = arith.constant dense<0.000000e+00> : vector<2x8x16xf32>
    %216 = tpu.matmul %215, %201, %cst_94 {dimension_numbers = #tpu.dot_dimension_numbers<[2], [1], [1], [2], [0, 0, 0, 1, 1, 2], [0], [0]>} : vector<2x8x8xbf16>, vector<2x8x16xbf16>, vector<2x8x16xf32> -> vector<2x8x16xf32>
    "tpu.trace_stop"() : () -> ()
    %217 = vector.shape_cast %216 : vector<2x8x16xf32> to vector<16x16xf32>
    %218 = arith.truncf %217 : vector<16x16xf32> to vector<16x16xbf16>
    %219 = vector.extract_strided_slice %26 {offsets = [80, 0], sizes = [16, 128], strides = [1, 1]} : vector<128x128xbf16> to vector<16x128xbf16>
    %cst_95 = arith.constant dense<0.000000e+00> : vector<16x128xf32>
    %220 = tpu.matmul %218, %219, %cst_95 {dimension_numbers = #tpu.dot_dimension_numbers<[1], [0], [0], [1], [0, 0, 1, 1], [], []>} : vector<16x16xbf16>, vector<16x128xbf16>, vector<16x128xf32> -> vector<16x128xf32>
    %221 = arith.addf %198, %220 : vector<16x128xf32>
    %222 = vector.extract_strided_slice %77 {offsets = [0, 0, 96], sizes = [2, 8, 16], strides = [1, 1, 1]} : vector<2x8x128xbf16> to vector<2x8x16xbf16>
    %223 = vector.extract_strided_slice %82 {offsets = [0, 96, 0], sizes = [2, 16, 8], strides = [1, 1, 1]} : vector<2x128x8xbf16> to vector<2x16x8xbf16>
    %224 = vector.extract_strided_slice %79 {offsets = [0, 0, 96], sizes = [2, 8, 16], strides = [1, 1, 1]} : vector<2x8x128xbf16> to vector<2x8x16xbf16>
    "tpu.trace_start"() <{level = 10 : i32, message = "bqd,bds->bqs"}> : () -> ()
    %cst_96 = arith.constant dense<0.000000e+00> : vector<2x8x8xf32>
    %225 = tpu.matmul %222, %223, %cst_96 {dimension_numbers = #tpu.dot_dimension_numbers<[2], [1], [1], [2], [0, 0, 0, 1, 1, 2], [0], [0]>} : vector<2x8x16xbf16>, vector<2x16x8xbf16>, vector<2x8x8xf32> -> vector<2x8x8xf32>
    "tpu.trace_stop"() : () -> ()
    %226 = vector.broadcast %8 : vector<2x1x8xf32> to vector<2x8x8xf32>
    %227 = arith.addf %225, %226 : vector<2x8x8xf32>
    %cst_97 = arith.constant dense<0xFF800000> : vector<2x8xf32>
    %228 = vector.multi_reduction <maximumf>, %227, %cst_97 [2] : vector<2x8x8xf32> to vector<2x8xf32>
    %229 = vector.shape_cast %228 : vector<2x8xf32> to vector<2x8x1xf32>
    %230 = vector.broadcast %229 : vector<2x8x1xf32> to vector<2x8x8xf32>
    %231 = arith.subf %227, %230 : vector<2x8x8xf32>
    %232 = math.exp %231 : vector<2x8x8xf32>
    %cst_98 = arith.constant dense<0.000000e+00> : vector<2x8xf32>
    %233 = vector.multi_reduction <add>, %232, %cst_98 [2] : vector<2x8x8xf32> to vector<2x8xf32>
    %234 = vector.shape_cast %233 : vector<2x8xf32> to vector<2x8x1xf32>
    %235 = tpu.reciprocal %234 {approx = true} : vector<2x8x1xf32> -> vector<2x8x1xf32>
    %236 = vector.broadcast %235 : vector<2x8x1xf32> to vector<2x8x8xf32>
    %237 = arith.mulf %232, %236 : vector<2x8x8xf32>
    %238 = arith.truncf %237 : vector<2x8x8xf32> to vector<2x8x8xbf16>
    "tpu.trace_start"() <{level = 10 : i32, message = "bqk,bkd->bqd"}> : () -> ()
    %cst_99 = arith.constant dense<0.000000e+00> : vector<2x8x16xf32>
    %239 = tpu.matmul %238, %224, %cst_99 {dimension_numbers = #tpu.dot_dimension_numbers<[2], [1], [1], [2], [0, 0, 0, 1, 1, 2], [0], [0]>} : vector<2x8x8xbf16>, vector<2x8x16xbf16>, vector<2x8x16xf32> -> vector<2x8x16xf32>
    "tpu.trace_stop"() : () -> ()
    %240 = vector.shape_cast %239 : vector<2x8x16xf32> to vector<16x16xf32>
    %241 = arith.truncf %240 : vector<16x16xf32> to vector<16x16xbf16>
    %242 = vector.extract_strided_slice %26 {offsets = [96, 0], sizes = [16, 128], strides = [1, 1]} : vector<128x128xbf16> to vector<16x128xbf16>
    %cst_100 = arith.constant dense<0.000000e+00> : vector<16x128xf32>
    %243 = tpu.matmul %241, %242, %cst_100 {dimension_numbers = #tpu.dot_dimension_numbers<[1], [0], [0], [1], [0, 0, 1, 1], [], []>} : vector<16x16xbf16>, vector<16x128xbf16>, vector<16x128xf32> -> vector<16x128xf32>
    %244 = arith.addf %221, %243 : vector<16x128xf32>
    %245 = vector.extract_strided_slice %77 {offsets = [0, 0, 112], sizes = [2, 8, 16], strides = [1, 1, 1]} : vector<2x8x128xbf16> to vector<2x8x16xbf16>
    %246 = vector.extract_strided_slice %82 {offsets = [0, 112, 0], sizes = [2, 16, 8], strides = [1, 1, 1]} : vector<2x128x8xbf16> to vector<2x16x8xbf16>
    %247 = vector.extract_strided_slice %79 {offsets = [0, 0, 112], sizes = [2, 8, 16], strides = [1, 1, 1]} : vector<2x8x128xbf16> to vector<2x8x16xbf16>
    "tpu.trace_start"() <{level = 10 : i32, message = "bqd,bds->bqs"}> : () -> ()
    %cst_101 = arith.constant dense<0.000000e+00> : vector<2x8x8xf32>
    %248 = tpu.matmul %245, %246, %cst_101 {dimension_numbers = #tpu.dot_dimension_numbers<[2], [1], [1], [2], [0, 0, 0, 1, 1, 2], [0], [0]>} : vector<2x8x16xbf16>, vector<2x16x8xbf16>, vector<2x8x8xf32> -> vector<2x8x8xf32>
    "tpu.trace_stop"() : () -> ()
    %249 = vector.broadcast %8 : vector<2x1x8xf32> to vector<2x8x8xf32>
    %250 = arith.addf %248, %249 : vector<2x8x8xf32>
    %cst_102 = arith.constant dense<0xFF800000> : vector<2x8xf32>
    %251 = vector.multi_reduction <maximumf>, %250, %cst_102 [2] : vector<2x8x8xf32> to vector<2x8xf32>
    %252 = vector.shape_cast %251 : vector<2x8xf32> to vector<2x8x1xf32>
    %253 = vector.broadcast %252 : vector<2x8x1xf32> to vector<2x8x8xf32>
    %254 = arith.subf %250, %253 : vector<2x8x8xf32>
    %255 = math.exp %254 : vector<2x8x8xf32>
    %cst_103 = arith.constant dense<0.000000e+00> : vector<2x8xf32>
    %256 = vector.multi_reduction <add>, %255, %cst_103 [2] : vector<2x8x8xf32> to vector<2x8xf32>
    %257 = vector.shape_cast %256 : vector<2x8xf32> to vector<2x8x1xf32>
    %258 = tpu.reciprocal %257 {approx = true} : vector<2x8x1xf32> -> vector<2x8x1xf32>
    %259 = vector.broadcast %258 : vector<2x8x1xf32> to vector<2x8x8xf32>
    %260 = arith.mulf %255, %259 : vector<2x8x8xf32>
    %261 = arith.truncf %260 : vector<2x8x8xf32> to vector<2x8x8xbf16>
    "tpu.trace_start"() <{level = 10 : i32, message = "bqk,bkd->bqd"}> : () -> ()
    %cst_104 = arith.constant dense<0.000000e+00> : vector<2x8x16xf32>
    %262 = tpu.matmul %261, %247, %cst_104 {dimension_numbers = #tpu.dot_dimension_numbers<[2], [1], [1], [2], [0, 0, 0, 1, 1, 2], [0], [0]>} : vector<2x8x8xbf16>, vector<2x8x16xbf16>, vector<2x8x16xf32> -> vector<2x8x16xf32>
    "tpu.trace_stop"() : () -> ()
    %263 = vector.shape_cast %262 : vector<2x8x16xf32> to vector<16x16xf32>
    %264 = arith.truncf %263 : vector<16x16xf32> to vector<16x16xbf16>
    %265 = vector.extract_strided_slice %26 {offsets = [112, 0], sizes = [16, 128], strides = [1, 1]} : vector<128x128xbf16> to vector<16x128xbf16>
    %cst_105 = arith.constant dense<0.000000e+00> : vector<16x128xf32>
    %266 = tpu.matmul %264, %265, %cst_105 {dimension_numbers = #tpu.dot_dimension_numbers<[1], [0], [0], [1], [0, 0, 1, 1], [], []>} : vector<16x16xbf16>, vector<16x128xbf16>, vector<16x128xf32> -> vector<16x128xf32>
    %267 = arith.addf %244, %266 : vector<16x128xf32>
    %268 = arith.addf %42, %267 : vector<16x128xf32>
    %269 = vector.broadcast %28 : vector<1x128xf32> to vector<16x128xf32>
    %270 = arith.addf %268, %269 : vector<16x128xf32>
    %cst_106 = arith.constant dense<0.000000e+00> : vector<16xf32>
    %271 = vector.multi_reduction <add>, %270, %cst_106 [1] : vector<16x128xf32> to vector<16xf32>
    %272 = vector.shape_cast %271 : vector<16xf32> to vector<16x1xf32>
    %cst_107 = arith.constant 1.280000e+02 : f32
    %273 = vector.broadcast %cst_107 : f32 to vector<16x1xf32>
    %274 = arith.divf %272, %273 : vector<16x1xf32>
    %275 = vector.broadcast %274 : vector<16x1xf32> to vector<16x128xf32>
    %276 = arith.subf %270, %275 : vector<16x128xf32>
    %277 = arith.mulf %276, %276 : vector<16x128xf32>
    %cst_108 = arith.constant dense<0.000000e+00> : vector<16xf32>
    %278 = vector.multi_reduction <add>, %277, %cst_108 [1] : vector<16x128xf32> to vector<16xf32>
    %279 = vector.shape_cast %278 : vector<16xf32> to vector<16x1xf32>
    %cst_109 = arith.constant 0.00787401571 : f32
    %280 = vector.broadcast %cst_109 : f32 to vector<16x1xf32>
    %281 = arith.mulf %279, %280 : vector<16x1xf32>
    %282 = math.sqrt %281 : vector<16x1xf32>
    %cst_110 = arith.constant 9.99999997E-7 : f32
    %283 = vector.broadcast %cst_110 : f32 to vector<16x1xf32>
    %284 = arith.addf %282, %283 : vector<16x1xf32>
    %285 = tpu.reciprocal %284 {approx = true} : vector<16x1xf32> -> vector<16x1xf32>
    %286 = vector.broadcast %30 : vector<1x128xf32> to vector<16x128xf32>
    %287 = arith.mulf %286, %276 : vector<16x128xf32>
    %288 = vector.broadcast %285 : vector<16x1xf32> to vector<16x128xf32>
    %289 = arith.mulf %287, %288 : vector<16x128xf32>
    %290 = vector.broadcast %32 : vector<1x128xf32> to vector<16x128xf32>
    %291 = arith.addf %289, %290 : vector<16x128xf32>
    %292 = arith.truncf %291 : vector<16x128xf32> to vector<16x128xbf16>
    %cst_111 = arith.constant 0.000000e+00 : f32
    %293 = vector.broadcast %cst_111 : f32 to vector<16x128xf32>
    %cst_112 = arith.constant dense<0.000000e+00> : vector<16x256xf32>
    %294 = tpu.matmul %292, %34, %cst_112 {dimension_numbers = #tpu.dot_dimension_numbers<[1], [0], [0], [1], [0, 0, 1, 1], [], []>} : vector<16x128xbf16>, vector<128x256xbf16>, vector<16x256xf32> -> vector<16x256xf32>
    %295 = vector.broadcast %36 : vector<1x256xf32> to vector<16x256xf32>
    %296 = arith.addf %294, %295 : vector<16x256xf32>
    %cst_113 = arith.constant 0.000000e+00 : f32
    %297 = vector.broadcast %cst_113 : f32 to vector<16x256xf32>
    %298 = arith.maximumf %296, %297 : vector<16x256xf32>
    %299 = arith.truncf %298 : vector<16x256xf32> to vector<16x256xbf16>
    %cst_114 = arith.constant dense<0.000000e+00> : vector<16x128xf32>
    %300 = tpu.matmul %299, %38, %cst_114 {dimension_numbers = #tpu.dot_dimension_numbers<[1], [0], [0], [1], [0, 0, 1, 1], [], []>} : vector<16x256xbf16>, vector<256x128xbf16>, vector<16x128xf32> -> vector<16x128xf32>
    %301 = arith.addf %293, %300 : vector<16x128xf32>
    %302 = arith.addf %270, %301 : vector<16x128xf32>
    %303 = vector.broadcast %40 : vector<1x128xf32> to vector<16x128xf32>
    %304 = arith.addf %302, %303 : vector<16x128xf32>
    %305 = vector.shape_cast %304 : vector<16x128xf32> to vector<2x8x128xf32>
    %c0_115 = arith.constant 0 : index
    %c0_116 = arith.constant 0 : index
    %c0_117 = arith.constant 0 : index
    %306 = vector.load %arg24[%c0_115, %c0_116, %c0_117] : memref<2x8x128xf32, #tpu.memory_space<vmem>>, vector<2x8x128xf32>
    tpu.vector_store %arg24[%c0_115, %c0_116, %c0_117], %305 {strides = array<i32>} : memref<2x8x128xf32, #tpu.memory_space<vmem>>, vector<2x8x128xf32>,
    %c1_i32 = arith.constant 1 : i32
    %307 = arith.cmpi eq, %arg0, %c1_i32 : i32
    %308 = arith.extui %307 : i1 to i32
    %c0_i32_118 = arith.constant 0 : i32
    %309 = arith.cmpi ne, %308, %c0_i32_118 : i32
    scf.if %309 {
      %c0_119 = arith.constant 0 : index
      %c0_120 = arith.constant 0 : index
      %310 = vector.load %arg19[%c0_119, %c0_120] : memref<1x128xf32, #tpu.memory_space<vmem>>, vector<1x128xf32>
      %c0_121 = arith.constant 0 : index
      %c0_122 = arith.constant 0 : index
      %311 = vector.load %arg20[%c0_121, %c0_122] : memref<1x128xf32, #tpu.memory_space<vmem>>, vector<1x128xf32>
      %cst_123 = arith.constant dense<0.000000e+00> : vector<2x8xf32>
      %312 = vector.multi_reduction <add>, %305, %cst_123 [2] : vector<2x8x128xf32> to vector<2x8xf32>
      %313 = vector.shape_cast %312 : vector<2x8xf32> to vector<2x8x1xf32>
      %cst_124 = arith.constant 1.280000e+02 : f32
      %314 = vector.broadcast %cst_124 : f32 to vector<2x8x1xf32>
      %315 = arith.divf %313, %314 : vector<2x8x1xf32>
      %316 = vector.broadcast %315 : vector<2x8x1xf32> to vector<2x8x128xf32>
      %317 = arith.subf %305, %316 : vector<2x8x128xf32>
      %318 = arith.mulf %317, %317 : vector<2x8x128xf32>
      %cst_125 = arith.constant dense<0.000000e+00> : vector<2x8xf32>
      %319 = vector.multi_reduction <add>, %318, %cst_125 [2] : vector<2x8x128xf32> to vector<2x8xf32>
      %320 = vector.shape_cast %319 : vector<2x8xf32> to vector<2x8x1xf32>
      %cst_126 = arith.constant 0.00787401571 : f32
      %321 = vector.broadcast %cst_126 : f32 to vector<2x8x1xf32>
      %322 = arith.mulf %320, %321 : vector<2x8x1xf32>
      %323 = math.sqrt %322 : vector<2x8x1xf32>
      %cst_127 = arith.constant 9.99999997E-7 : f32
      %324 = vector.broadcast %cst_127 : f32 to vector<2x8x1xf32>
      %325 = arith.addf %323, %324 : vector<2x8x1xf32>
      %326 = tpu.reciprocal %325 {approx = true} : vector<2x8x1xf32> -> vector<2x8x1xf32>
      %327 = vector.shape_cast %310 : vector<1x128xf32> to vector<1x1x128xf32>
      %328 = vector.broadcast %327 : vector<1x1x128xf32> to vector<2x8x128xf32>
      %329 = arith.mulf %328, %317 : vector<2x8x128xf32>
      %330 = vector.broadcast %326 : vector<2x8x1xf32> to vector<2x8x128xf32>
      %331 = arith.mulf %329, %330 : vector<2x8x128xf32>
      %332 = vector.shape_cast %311 : vector<1x128xf32> to vector<1x1x128xf32>
      %333 = vector.broadcast %332 : vector<1x1x128xf32> to vector<2x8x128xf32>
      %334 = arith.addf %331, %333 : vector<2x8x128xf32>
      %335 = tpu.transpose %3, [0, 2, 1] : vector<2x1x8xf32> -> vector<2x8x1xf32>
      %336 = vector.broadcast %335 : vector<2x8x1xf32> to vector<2x8x128xf32>
      %337 = arith.mulf %334, %336 : vector<2x8x128xf32>
      %cst_128 = arith.constant dense<0.000000e+00> : vector<2x128xf32>
      %338 = vector.multi_reduction <add>, %337, %cst_128 [1] : vector<2x8x128xf32> to vector<2x128xf32>
      %cst_129 = arith.constant dense<0.000000e+00> : vector<2x1xf32>
      %339 = vector.multi_reduction <add>, %335, %cst_129 [1] : vector<2x8x1xf32> to vector<2x1xf32>
      %cst_130 = arith.constant 9.99999971E-10 : f32
      %340 = vector.broadcast %cst_130 : f32 to vector<2x1xf32>
      %341 = arith.maximumf %339, %340 : vector<2x1xf32>
      %342 = tpu.reciprocal %341 {approx = true} : vector<2x1xf32> -> vector<2x1xf32>
      %343 = vector.broadcast %342 : vector<2x1xf32> to vector<2x128xf32>
      %344 = arith.mulf %338, %343 : vector<2x128xf32>
      %345 = arith.truncf %344 : vector<2x128xf32> to vector<2x128xbf16>
      %c0_131 = arith.constant 0 : index
      %c0_132 = arith.constant 0 : index
      %346 = vector.load %arg21[%c0_131, %c0_132] : memref<128x2xbf16, #tpu.memory_space<vmem>>, vector<128x2xbf16>
      %cst_133 = arith.constant dense<0.000000e+00> : vector<2x2xf32>
      %347 = tpu.matmul %345, %346, %cst_133 {dimension_numbers = #tpu.dot_dimension_numbers<[1], [0], [0], [1], [0, 0, 1, 1], [], []>} : vector<2x128xbf16>, vector<128x2xbf16>, vector<2x2xf32> -> vector<2x2xf32>
      %c0_134 = arith.constant 0 : index
      %c0_135 = arith.constant 0 : index
      %348 = vector.load %arg22[%c0_134, %c0_135] : memref<1x2xf32, #tpu.memory_space<vmem>>, vector<1x2xf32>
      %349 = vector.broadcast %348 : vector<1x2xf32> to vector<2x2xf32>
      %350 = arith.addf %347, %349 : vector<2x2xf32>
      %c0_136 = arith.constant 0 : index
      %c0_137 = arith.constant 0 : index
      %351 = vector.load %arg23[%c0_136, %c0_137] : memref<2x2xf32, #tpu.memory_space<vmem>>, vector<2x2xf32>
      tpu.vector_store %arg23[%c0_136, %c0_137], %350 {strides = array<i32>} : memref<2x2xf32, #tpu.memory_space<vmem>>, vector<2x2xf32>,
    } else {
    }
    return
  }
  func.func @transform_0(%arg0: i32) -> (i32, i32, i32) {
    %c0_i32 = arith.constant 0 : i32
    %c0_i32_0 = arith.constant 0 : i32
    %c0_i32_1 = arith.constant 0 : i32
    %c0_i32_2 = arith.constant 0 : i32
    return %c0_i32, %c0_i32_0, %c0_i32_1 : i32, i32, i32
  }
  func.func @transform_1(%arg0: i32) -> (i32, i32, i32) {
    %c0_i32 = arith.constant 0 : i32
    %c0_i32_0 = arith.constant 0 : i32
    %c0_i32_1 = arith.constant 0 : i32
    %c0_i32_2 = arith.constant 0 : i32
    return %c0_i32, %c0_i32_0, %c0_i32_1 : i32, i32, i32
  }
  func.func @transform_2(%arg0: i32) -> (i32, i32, i32) {
    %c0_i32 = arith.constant 0 : i32
    %c0_i32_0 = arith.constant 0 : i32
    %c0_i32_1 = arith.constant 0 : i32
    return %arg0, %c0_i32, %c0_i32_0 : i32, i32, i32
  }
  func.func @transform_3(%arg0: i32) -> (i32, i32, i32) {
    %c0_i32 = arith.constant 0 : i32
    %c0_i32_0 = arith.constant 0 : i32
    %c0_i32_1 = arith.constant 0 : i32
    return %arg0, %c0_i32, %c0_i32_0 : i32, i32, i32
  }
  func.func @transform_4(%arg0: i32) -> (i32, i32, i32) {
    %c0_i32 = arith.constant 0 : i32
    %c0_i32_0 = arith.constant 0 : i32
    %c0_i32_1 = arith.constant 0 : i32
    return %arg0, %c0_i32, %c0_i32_0 : i32, i32, i32
  }
  func.func @transform_5(%arg0: i32) -> (i32, i32, i32) {
    %c0_i32 = arith.constant 0 : i32
    %c0_i32_0 = arith.constant 0 : i32
    %c0_i32_1 = arith.constant 0 : i32
    return %arg0, %c0_i32, %c0_i32_0 : i32, i32, i32
  }
  func.func @transform_6(%arg0: i32) -> (i32, i32, i32) {
    %c0_i32 = arith.constant 0 : i32
    %c0_i32_0 = arith.constant 0 : i32
    %c0_i32_1 = arith.constant 0 : i32
    return %arg0, %c0_i32, %c0_i32_0 : i32, i32, i32
  }
  func.func @transform_7(%arg0: i32) -> (i32, i32, i32) {
    %c0_i32 = arith.constant 0 : i32
    %c0_i32_0 = arith.constant 0 : i32
    %c0_i32_1 = arith.constant 0 : i32
    return %arg0, %c0_i32, %c0_i32_0 : i32, i32, i32
  }
  func.func @transform_8(%arg0: i32) -> (i32, i32, i32) {
    %c0_i32 = arith.constant 0 : i32
    %c0_i32_0 = arith.constant 0 : i32
    %c0_i32_1 = arith.constant 0 : i32
    return %arg0, %c0_i32, %c0_i32_0 : i32, i32, i32
  }
  func.func @transform_9(%arg0: i32) -> (i32, i32, i32) {
    %c0_i32 = arith.constant 0 : i32
    %c0_i32_0 = arith.constant 0 : i32
    %c0_i32_1 = arith.constant 0 : i32
    return %arg0, %c0_i32, %c0_i32_0 : i32, i32, i32
  }
  func.func @transform_10(%arg0: i32) -> (i32, i32, i32) {
    %c0_i32 = arith.constant 0 : i32
    %c0_i32_0 = arith.constant 0 : i32
    %c0_i32_1 = arith.constant 0 : i32
    return %arg0, %c0_i32, %c0_i32_0 : i32, i32, i32
  }
  func.func @transform_11(%arg0: i32) -> (i32, i32, i32) {
    %c0_i32 = arith.constant 0 : i32
    %c0_i32_0 = arith.constant 0 : i32
    %c0_i32_1 = arith.constant 0 : i32
    return %arg0, %c0_i32, %c0_i32_0 : i32, i32, i32
  }
  func.func @transform_12(%arg0: i32) -> (i32, i32, i32) {
    %c0_i32 = arith.constant 0 : i32
    %c0_i32_0 = arith.constant 0 : i32
    %c0_i32_1 = arith.constant 0 : i32
    return %arg0, %c0_i32, %c0_i32_0 : i32, i32, i32
  }
  func.func @transform_13(%arg0: i32) -> (i32, i32, i32) {
    %c0_i32 = arith.constant 0 : i32
    %c0_i32_0 = arith.constant 0 : i32
    %c0_i32_1 = arith.constant 0 : i32
    return %arg0, %c0_i32, %c0_i32_0 : i32, i32, i32
  }
  func.func @transform_14(%arg0: i32) -> (i32, i32, i32) {
    %c0_i32 = arith.constant 0 : i32
    %c0_i32_0 = arith.constant 0 : i32
    %c0_i32_1 = arith.constant 0 : i32
    return %arg0, %c0_i32, %c0_i32_0 : i32, i32, i32
  }
  func.func @transform_15(%arg0: i32) -> (i32, i32, i32) {
    %c0_i32 = arith.constant 0 : i32
    %c0_i32_0 = arith.constant 0 : i32
    %c0_i32_1 = arith.constant 0 : i32
    return %arg0, %c0_i32, %c0_i32_0 : i32, i32, i32
  }
  func.func @transform_16(%arg0: i32) -> (i32, i32, i32) {
    %c0_i32 = arith.constant 0 : i32
    %c0_i32_0 = arith.constant 0 : i32
    %c0_i32_1 = arith.constant 0 : i32
    return %arg0, %c0_i32, %c0_i32_0 : i32, i32, i32
  }
  func.func @transform_17(%arg0: i32) -> (i32, i32, i32) {
    %c0_i32 = arith.constant 0 : i32
    %c0_i32_0 = arith.constant 0 : i32
    %c0_i32_1 = arith.constant 0 : i32
    return %arg0, %c0_i32, %c0_i32_0 : i32, i32, i32
  }
  func.func @transform_18(%arg0: i32) -> (i32, i32) {
    %c0_i32 = arith.constant 0 : i32
    %c0_i32_0 = arith.constant 0 : i32
    %c0_i32_1 = arith.constant 0 : i32
    return %c0_i32, %c0_i32_0 : i32, i32
  }
  func.func @transform_19(%arg0: i32) -> (i32, i32) {
    %c0_i32 = arith.constant 0 : i32
    %c0_i32_0 = arith.constant 0 : i32
    %c0_i32_1 = arith.constant 0 : i32
    return %c0_i32, %c0_i32_0 : i32, i32
  }
  func.func @transform_20(%arg0: i32) -> (i32, i32) {
    %c0_i32 = arith.constant 0 : i32
    %c0_i32_0 = arith.constant 0 : i32
    %c0_i32_1 = arith.constant 0 : i32
    return %c0_i32, %c0_i32_0 : i32, i32
  }
  func.func @transform_21(%arg0: i32) -> (i32, i32) {
    %c0_i32 = arith.constant 0 : i32
    %c0_i32_0 = arith.constant 0 : i32
    %c0_i32_1 = arith.constant 0 : i32
    return %c0_i32, %c0_i32_0 : i32, i32
  }
  func.func @transform_22(%arg0: i32) -> (i32, i32) {
    %c0_i32 = arith.constant 0 : i32
    %c0_i32_0 = arith.constant 0 : i32
    %c0_i32_1 = arith.constant 0 : i32
    return %c0_i32, %c0_i32_0 : i32, i32
  }
}

</mosaic_0001>

<llo_original>
// kernel: transformer_forward.1
$region0: #{transformer_forward.1}
  #allocation0 [shape = 'u32[]', space=smem, size = 0x4, offset = 0x4, fixed_abs, tag = 'smem constant byte address 0x4 - core index']
  #allocation1 [shape = 'u32[144,128]{1,0:T(1,128)}', space=vmem, size = 0x12000, scoped, tag = 'internal scratch']
  #allocation2 [shape = 'f32[2,8,128]{2,1,0:T(8,128)}', space=vmem, size = 0x2000, scoped, tag = 'scratch operand']
  %s0 = inlined_call_operand.vmem [shape: f32[2,8,128], index: 0, kind: input, shape index: {}]
  %s1 = inlined_call_operand.vmem [shape: f32[2,1,8], index: 1, kind: input, shape index: {}]
  %s2 = inlined_call_operand.vmem [shape: f32[2,1,128], index: 2, kind: input, shape index: {}]
  %s3 = inlined_call_operand.vmem [shape: f32[2,1,128], index: 3, kind: input, shape index: {}]
  %s4 = inlined_call_operand.vmem [shape: bf16[2,128,128], index: 4, kind: input, shape index: {}]
  %s5 = inlined_call_operand.vmem [shape: f32[2,1,128], index: 5, kind: input, shape index: {}]
  %s6 = inlined_call_operand.hbm [shape: bf16[2,128,128], index: 6, kind: input, shape index: {}]
  %s7 = inlined_call_operand.vmem [shape: f32[2,1,128], index: 7, kind: input, shape index: {}]
  %s8 = inlined_call_operand.hbm [shape: bf16[2,128,128], index: 8, kind: input, shape index: {}]
  %s9 = inlined_call_operand.vmem [shape: f32[2,1,128], index: 9, kind: input, shape index: {}]
  %s10 = inlined_call_operand.hbm [shape: bf16[2,128,128], index: 10, kind: input, shape index: {}]
  %s11 = inlined_call_operand.vmem [shape: f32[2,1,128], index: 11, kind: input, shape index: {}]
  %s12 = inlined_call_operand.vmem [shape: f32[2,1,128], index: 12, kind: input, shape index: {}]
  %s13 = inlined_call_operand.vmem [shape: f32[2,1,128], index: 13, kind: input, shape index: {}]
  %s14 = inlined_call_operand.hbm [shape: bf16[2,128,256], index: 14, kind: input, shape index: {}]
  %s15 = inlined_call_operand.vmem [shape: f32[2,1,256], index: 15, kind: input, shape index: {}]
  %s16 = inlined_call_operand.hbm [shape: bf16[2,256,128], index: 16, kind: input, shape index: {}]
  %s17 = inlined_call_operand.vmem [shape: f32[2,1,128], index: 17, kind: input, shape index: {}]
  %s18 = inlined_call_operand.vmem [shape: f32[1,128], index: 18, kind: input, shape index: {}]
  %s19 = inlined_call_operand.vmem [shape: f32[1,128], index: 19, kind: input, shape index: {}]
  %s20 = inlined_call_operand.vmem [shape: bf16[128,2], index: 20, kind: input, shape index: {}]
  %s21 = inlined_call_operand.vmem [shape: f32[1,2], index: 21, kind: input, shape index: {}]
  %s22 = inlined_call_operand.hbm [shape: f32[2,2], index: 22, kind: output, shape index: {}]
  %s23 = sld [smem:[#allocation0]]
  $region149: #{transformer_forward.1} parent=0
    _
  %s25 = ssub.s32 1, %s23
  %s26 = scalar_select 0, %s25, %s23
  $region1: #{transformer_forward.1} parent=0
    #allocation3 [shape = 'u8[65536]{0}', space=vmem, size = 0x10000, scoped, tag = 'input window, operand 6']
    #allocation4 [shape = 's32[2]{0}', space=sflag, size = 0x8, scoped, tag = 'scoped memory for transformer_forward.1']
    #allocation5 [shape = 's32[2]{0}', space=sflag, size = 0x8, scoped, tag = 'scoped memory for transformer_forward.1']
    #allocation6 [shape = 'u8[65536]{0}', space=vmem, size = 0x10000, scoped, tag = 'input window, operand 8']
    #allocation7 [shape = 's32[2]{0}', space=sflag, size = 0x8, scoped, tag = 'scoped memory for transformer_forward.1']
    #allocation8 [shape = 'u8[65536]{0}', space=vmem, size = 0x10000, scoped, tag = 'input window, operand 10']
    #allocation9 [shape = 'u8[131072]{0}', space=vmem, size = 0x20000, scoped, tag = 'input window, operand 14']
    #allocation10 [shape = 's32[2]{0}', space=sflag, size = 0x8, scoped, tag = 'scoped memory for transformer_forward.1']
    #allocation11 [shape = 'u8[131072]{0}', space=vmem, size = 0x20000, scoped, tag = 'input window, operand 16']
    #allocation12 [shape = 'u8[1024]{0}', space=vmem, size = 0x400, scoped, tag = 'output window, operand 0, single buffered']
    %27 = vsyncpa [#allocation4], 0
    %s28 = scalar_lea.sflag [#allocation4], 1
    %29 = vsyncpa %s28, 0
    %30 = vsyncpa [#allocation7], 0
    %s31 = scalar_lea.sflag [#allocation7], 1
    %32 = vsyncpa %s31, 0
    %33 = vsyncpa [#allocation10], 0
    %s34 = scalar_lea.sflag [#allocation10], 1
    %35 = vsyncpa %s34, 0
    %36 = vsyncpa [#allocation5], 0
    loop: start=0, step=1, limit=4
    $region2: #{transformer_forward.1} parent=1 // loop_pre_header
      _
    $region3: #{transformer_forward.1} parent=1 // loop_header
      %s38 = sphi 0, %s42
      %p39 = scmp.ge.s32.totalorder %s38, 4
      %s46 = sphi 0, %s46
      %s48 = sphi 0, %s46
      %s49 = sphi 0, %s48
      %s63 = sphi 0, %s49
      %s67 = sphi 0, %s67
      %s69 = sphi 0, %s67
      %s70 = sphi 0, %s69
      %s84 = sphi 0, %s70
      %s90 = sphi 0, %s92
      %s93 = sphi 0, %s90
      %s94 = sphi 0, %s93
      %s110 = sphi 0, %s94
      %s116 = sphi 0, %s118
      %s119 = sphi 0, %s116
      %s120 = sphi 0, %s119
      %s136 = sphi 0, %s120
      %s142 = sphi 0, %s144
      %s145 = sphi 0, %s142
      %s146 = sphi 0, %s145
      %s162 = sphi 0, %s146
      %s168 = sphi 0, %s170
      %s171 = sphi 0, %s168
      %s172 = sphi 0, %s171
      %s188 = sphi 0, %s172
      %s194 = sphi 0, %s196
      %s197 = sphi 0, %s194
      %s198 = sphi 0, %s197
      %s214 = sphi 0, %s198
      %s220 = sphi 0, %s222
      %s223 = sphi 0, %s220
      %s224 = sphi 0, %s223
      %s240 = sphi 0, %s224
      %s246 = sphi 0, %s248
      %s249 = sphi 0, %s246
      %s250 = sphi 0, %s249
      %s266 = sphi 0, %s250
      %s272 = sphi 0, %s274
      %s275 = sphi 0, %s272
      %s276 = sphi 0, %s275
      %s292 = sphi 0, %s276
      %s298 = sphi 0, %s300
      %s301 = sphi 0, %s298
      %s302 = sphi 0, %s301
      %s318 = sphi 0, %s302
      %s324 = sphi 0, %s326
      %s327 = sphi 0, %s324
      %s328 = sphi 0, %s327
      %s344 = sphi 0, %s328
      %s350 = sphi 0, %s352
      %s353 = sphi 0, %s350
      %s354 = sphi 0, %s353
      %s370 = sphi 0, %s354
      %s376 = sphi 0, %s378
      %s379 = sphi 0, %s376
      %s380 = sphi 0, %s379
      %s396 = sphi 0, %s380
      %s402 = sphi 0, %s404
      %s405 = sphi 0, %s402
      %s406 = sphi 0, %s405
      %s422 = sphi 0, %s406
      %s428 = sphi 0, %s430
      %s431 = sphi 0, %s428
      %s432 = sphi 0, %s431
      %s448 = sphi 0, %s432
      %s454 = sphi 0, %s456
      %s457 = sphi 0, %s454
      %s458 = sphi 0, %s457
      %s474 = sphi 0, %s458
      %s480 = sphi 0, %s482
      %s483 = sphi 0, %s480
      %s484 = sphi 0, %s483
      %s500 = sphi 0, %s484
      %s504 = sphi 0, %s504
      %s506 = sphi 0, %s504
      %s507 = sphi 0, %s506
      %s521 = sphi 0, %s507
      %s525 = sphi 0, %s525
      %s527 = sphi 0, %s525
      %s528 = sphi 0, %s527
      %s542 = sphi 0, %s528
      %s546 = sphi 0, %s546
      %s548 = sphi 0, %s546
      %s549 = sphi 0, %s548
      %s563 = sphi 0, %s549
      %s567 = sphi 0, %s567
      %s569 = sphi 0, %s567
      %s570 = sphi 0, %s569
      %s584 = sphi 0, %s570
      %s588 = sphi 0, %s588
      %s590 = sphi 0, %s588
      %s591 = sphi 0, %s590
      %s605 = sphi 0, %s591
    $region4: #{transformer_forward.1} parent=1 // loop_header_branch
      %41 = sbr.rel (%p39) target = $region8
    $region5: #{transformer_forward.1} parent=1 // loop_body
      %s43 = ssub.s32 %s38, 1
      %s44 = ssub.s32 %s38, 2
      %s45 = sadd.s32 %s38, 1
      %s47 = sadd.s32 %s46, 1
      %p50 = scmp.eq.s32.totalorder %s38, 1
      %p51 = scmp.ne.s32.totalorder %s46, %s48
      %p52 = scmp.eq.s32.totalorder %s38, 0
      %p53 = por %p51, %p52
      %p54 = scmp.ne.s32.totalorder %s46, %s48
      %p55 = scmp.eq.s32.totalorder %s43, 1
      %p56 = por %p54, %p55
      %p57 = scmp.ne.s32.totalorder %s48, %s49
      %p58 = scmp.eq.s32.totalorder %s43, 0
      %p59 = por %p57, %p58
      %p60 = scmp.ne.s32.totalorder %s48, %s49
      %p61 = scmp.eq.s32.totalorder %s44, 1
      %p62 = por %p60, %p61
      %p64 = scmp.ne.s32.totalorder %s49, %s63
      %p65 = scmp.eq.s32.totalorder %s44, 0
      %p66 = por %p64, %p65
      %s68 = sadd.s32 %s67, 1
      %p71 = scmp.eq.s32.totalorder %s38, 1
      %p72 = scmp.ne.s32.totalorder %s67, %s69
      %p73 = scmp.eq.s32.totalorder %s38, 0
      %p74 = por %p72, %p73
      %p75 = scmp.ne.s32.totalorder %s67, %s69
      %p76 = scmp.eq.s32.totalorder %s43, 1
      %p77 = por %p75, %p76
      %p78 = scmp.ne.s32.totalorder %s69, %s70
      %p79 = scmp.eq.s32.totalorder %s43, 0
      %p80 = por %p78, %p79
      %p81 = scmp.ne.s32.totalorder %s69, %s70
      %p82 = scmp.eq.s32.totalorder %s44, 1
      %p83 = por %p81, %p82
      %p85 = scmp.ne.s32.totalorder %s70, %s84
      %p86 = scmp.eq.s32.totalorder %s44, 0
      %p87 = por %p85, %p86
      %s88 = ssub.s32 %s38, %s45
      %p89 = scmp.eq.s32.totalorder %s88, 0
      %s91 = sadd.s32 %s90, 1
      %s92 = scalar_select %p89, %s90, %s91
      %p95 = pneg %p89
      %p96 = scmp.eq.s32.totalorder %s38, 1
      %p97 = por %p95, %p96
      %p98 = scmp.ne.s32.totalorder %s90, %s93
      %p99 = scmp.eq.s32.totalorder %s38, 0
      %p100 = por %p98, %p99
      %p101 = scmp.ne.s32.totalorder %s90, %s93
      %p102 = scmp.eq.s32.totalorder %s43, 1
      %p103 = por %p101, %p102
      %p104 = scmp.ne.s32.totalorder %s93, %s94
      %p105 = scmp.eq.s32.totalorder %s43, 0
      %p106 = por %p104, %p105
      %p107 = scmp.ne.s32.totalorder %s93, %s94
      %p108 = scmp.eq.s32.totalorder %s44, 1
      %p109 = por %p107, %p108
      %p111 = scmp.ne.s32.totalorder %s94, %s110
      %p112 = scmp.eq.s32.totalorder %s44, 0
      %p113 = por %p111, %p112
      %s114 = ssub.s32 %s38, %s45
      %p115 = scmp.eq.s32.totalorder %s114, 0
      %s117 = sadd.s32 %s116, 1
      %s118 = scalar_select %p115, %s116, %s117
      %p121 = pneg %p115
      %p122 = scmp.eq.s32.totalorder %s38, 1
      %p123 = por %p121, %p122
      %p124 = scmp.ne.s32.totalorder %s116, %s119
      %p125 = scmp.eq.s32.totalorder %s38, 0
      %p126 = por %p124, %p125
      %p127 = scmp.ne.s32.totalorder %s116, %s119
      %p128 = scmp.eq.s32.totalorder %s43, 1
      %p129 = por %p127, %p128
      %p130 = scmp.ne.s32.totalorder %s119, %s120
      %p131 = scmp.eq.s32.totalorder %s43, 0
      %p132 = por %p130, %p131
      %p133 = scmp.ne.s32.totalorder %s119, %s120
      %p134 = scmp.eq.s32.totalorder %s44, 1
      %p135 = por %p133, %p134
      %p137 = scmp.ne.s32.totalorder %s120, %s136
      %p138 = scmp.eq.s32.totalorder %s44, 0
      %p139 = por %p137, %p138
      %s140 = ssub.s32 %s38, %s45
      %p141 = scmp.eq.s32.totalorder %s140, 0
      %s143 = sadd.s32 %s142, 1
      %s144 = scalar_select %p141, %s142, %s143
      %p147 = pneg %p141
      %p148 = scmp.eq.s32.totalorder %s38, 1
      %p149 = por %p147, %p148
      %p150 = scmp.ne.s32.totalorder %s142, %s145
      %p151 = scmp.eq.s32.totalorder %s38, 0
      %p152 = por %p150, %p151
      %p153 = scmp.ne.s32.totalorder %s142, %s145
      %p154 = scmp.eq.s32.totalorder %s43, 1
      %p155 = por %p153, %p154
      %p156 = scmp.ne.s32.totalorder %s145, %s146
      %p157 = scmp.eq.s32.totalorder %s43, 0
      %p158 = por %p156, %p157
      %p159 = scmp.ne.s32.totalorder %s145, %s146
      %p160 = scmp.eq.s32.totalorder %s44, 1
      %p161 = por %p159, %p160
      %p163 = scmp.ne.s32.totalorder %s146, %s162
      %p164 = scmp.eq.s32.totalorder %s44, 0
      %p165 = por %p163, %p164
      %s166 = ssub.s32 %s38, %s45
      %p167 = scmp.eq.s32.totalorder %s166, 0
      %s169 = sadd.s32 %s168, 1
      %s170 = scalar_select %p167, %s168, %s169
      %p173 = pneg %p167
      %p174 = scmp.eq.s32.totalorder %s38, 1
      %p175 = por %p173, %p174
      %p176 = scmp.ne.s32.totalorder %s168, %s171
      %p177 = scmp.eq.s32.totalorder %s38, 0
      %p178 = por %p176, %p177
      %p179 = scmp.ne.s32.totalorder %s168, %s171
      %p180 = scmp.eq.s32.totalorder %s43, 1
      %p181 = por %p179, %p180
      %p182 = scmp.ne.s32.totalorder %s171, %s172
      %p183 = scmp.eq.s32.totalorder %s43, 0
      %p184 = por %p182, %p183
      %p185 = scmp.ne.s32.totalorder %s171, %s172
      %p186 = scmp.eq.s32.totalorder %s44, 1
      %p187 = por %p185, %p186
      %p189 = scmp.ne.s32.totalorder %s172, %s188
      %p190 = scmp.eq.s32.totalorder %s44, 0
      %p191 = por %p189, %p190
      %s192 = ssub.s32 %s38, %s45
      %p193 = scmp.eq.s32.totalorder %s192, 0
      %s195 = sadd.s32 %s194, 1
      %s196 = scalar_select %p193, %s194, %s195
      %p199 = pneg %p193
      %p200 = scmp.eq.s32.totalorder %s38, 1
      %p201 = por %p199, %p200
      %p202 = scmp.ne.s32.totalorder %s194, %s197
      %p203 = scmp.eq.s32.totalorder %s38, 0
      %p204 = por %p202, %p203
      %p205 = scmp.ne.s32.totalorder %s194, %s197
      %p206 = scmp.eq.s32.totalorder %s43, 1
      %p207 = por %p205, %p206
      %p208 = scmp.ne.s32.totalorder %s197, %s198
      %p209 = scmp.eq.s32.totalorder %s43, 0
      %p210 = por %p208, %p209
      %p211 = scmp.ne.s32.totalorder %s197, %s198
      %p212 = scmp.eq.s32.totalorder %s44, 1
      %p213 = por %p211, %p212
      %p215 = scmp.ne.s32.totalorder %s198, %s214
      %p216 = scmp.eq.s32.totalorder %s44, 0
      %p217 = por %p215, %p216
      %s218 = ssub.s32 %s38, %s45
      %p219 = scmp.eq.s32.totalorder %s218, 0
      %s221 = sadd.s32 %s220, 1
      %s222 = scalar_select %p219, %s220, %s221
      %p225 = pneg %p219
      %p226 = scmp.eq.s32.totalorder %s38, 1
      %p227 = por %p225, %p226
      %p228 = scmp.ne.s32.totalorder %s220, %s223
      %p229 = scmp.eq.s32.totalorder %s38, 0
      %p230 = por %p228, %p229
      %p231 = scmp.ne.s32.totalorder %s220, %s223
      %p232 = scmp.eq.s32.totalorder %s43, 1
      %p233 = por %p231, %p232
      %p234 = scmp.ne.s32.totalorder %s223, %s224
      %p235 = scmp.eq.s32.totalorder %s43, 0
      %p236 = por %p234, %p235
      %p237 = scmp.ne.s32.totalorder %s223, %s224
      %p238 = scmp.eq.s32.totalorder %s44, 1
      %p239 = por %p237, %p238
      %p241 = scmp.ne.s32.totalorder %s224, %s240
      %p242 = scmp.eq.s32.totalorder %s44, 0
      %p243 = por %p241, %p242
      %s244 = ssub.s32 %s38, %s45
      %p245 = scmp.eq.s32.totalorder %s244, 0
      %s247 = sadd.s32 %s246, 1
      %s248 = scalar_select %p245, %s246, %s247
      %p251 = pneg %p245
      %p252 = scmp.eq.s32.totalorder %s38, 1
      %p253 = por %p251, %p252
      %p254 = scmp.ne.s32.totalorder %s246, %s249
      %p255 = scmp.eq.s32.totalorder %s38, 0
      %p256 = por %p254, %p255
      %p257 = scmp.ne.s32.totalorder %s246, %s249
      %p258 = scmp.eq.s32.totalorder %s43, 1
      %p259 = por %p257, %p258
      %p260 = scmp.ne.s32.totalorder %s249, %s250
      %p261 = scmp.eq.s32.totalorder %s43, 0
      %p262 = por %p260, %p261
      %p263 = scmp.ne.s32.totalorder %s249, %s250
      %p264 = scmp.eq.s32.totalorder %s44, 1
      %p265 = por %p263, %p264
      %p267 = scmp.ne.s32.totalorder %s250, %s266
      %p268 = scmp.eq.s32.totalorder %s44, 0
      %p269 = por %p267, %p268
      %s270 = ssub.s32 %s38, %s45
      %p271 = scmp.eq.s32.totalorder %s270, 0
      %s273 = sadd.s32 %s272, 1
      %s274 = scalar_select %p271, %s272, %s273
      %p277 = pneg %p271
      %p278 = scmp.eq.s32.totalorder %s38, 1
      %p279 = por %p277, %p278
      %p280 = scmp.ne.s32.totalorder %s272, %s275
      %p281 = scmp.eq.s32.totalorder %s38, 0
      %p282 = por %p280, %p281
      %p283 = scmp.ne.s32.totalorder %s272, %s275
      %p284 = scmp.eq.s32.totalorder %s43, 1
      %p285 = por %p283, %p284
      %p286 = scmp.ne.s32.totalorder %s275, %s276
      %p287 = scmp.eq.s32.totalorder %s43, 0
      %p288 = por %p286, %p287
      %p289 = scmp.ne.s32.totalorder %s275, %s276
      %p290 = scmp.eq.s32.totalorder %s44, 1
      %p291 = por %p289, %p290
      %p293 = scmp.ne.s32.totalorder %s276, %s292
      %p294 = scmp.eq.s32.totalorder %s44, 0
      %p295 = por %p293, %p294
      %s296 = ssub.s32 %s38, %s45
      %p297 = scmp.eq.s32.totalorder %s296, 0
      %s299 = sadd.s32 %s298, 1
      %s300 = scalar_select %p297, %s298, %s299
      %p303 = pneg %p297
      %p304 = scmp.eq.s32.totalorder %s38, 1
      %p305 = por %p303, %p304
      %p306 = scmp.ne.s32.totalorder %s298, %s301
      %p307 = scmp.eq.s32.totalorder %s38, 0
      %p308 = por %p306, %p307
      %p309 = scmp.ne.s32.totalorder %s298, %s301
      %p310 = scmp.eq.s32.totalorder %s43, 1
      %p311 = por %p309, %p310
      %p312 = scmp.ne.s32.totalorder %s301, %s302
      %p313 = scmp.eq.s32.totalorder %s43, 0
      %p314 = por %p312, %p313
      %p315 = scmp.ne.s32.totalorder %s301, %s302
      %p316 = scmp.eq.s32.totalorder %s44, 1
      %p317 = por %p315, %p316
      %p319 = scmp.ne.s32.totalorder %s302, %s318
      %p320 = scmp.eq.s32.totalorder %s44, 0
      %p321 = por %p319, %p320
      %s322 = ssub.s32 %s38, %s45
      %p323 = scmp.eq.s32.totalorder %s322, 0
      %s325 = sadd.s32 %s324, 1
      %s326 = scalar_select %p323, %s324, %s325
      %p329 = pneg %p323
      %p330 = scmp.eq.s32.totalorder %s38, 1
      %p331 = por %p329, %p330
      %p332 = scmp.ne.s32.totalorder %s324, %s327
      %p333 = scmp.eq.s32.totalorder %s38, 0
      %p334 = por %p332, %p333
      %p335 = scmp.ne.s32.totalorder %s324, %s327
      %p336 = scmp.eq.s32.totalorder %s43, 1
      %p337 = por %p335, %p336
      %p338 = scmp.ne.s32.totalorder %s327, %s328
      %p339 = scmp.eq.s32.totalorder %s43, 0
      %p340 = por %p338, %p339
      %p341 = scmp.ne.s32.totalorder %s327, %s328
      %p342 = scmp.eq.s32.totalorder %s44, 1
      %p343 = por %p341, %p342
      %p345 = scmp.ne.s32.totalorder %s328, %s344
      %p346 = scmp.eq.s32.totalorder %s44, 0
      %p347 = por %p345, %p346
      %s348 = ssub.s32 %s38, %s45
      %p349 = scmp.eq.s32.totalorder %s348, 0
      %s351 = sadd.s32 %s350, 1
      %s352 = scalar_select %p349, %s350, %s351
      %p355 = pneg %p349
      %p356 = scmp.eq.s32.totalorder %s38, 1
      %p357 = por %p355, %p356
      %p358 = scmp.ne.s32.totalorder %s350, %s353
      %p359 = scmp.eq.s32.totalorder %s38, 0
      %p360 = por %p358, %p359
      %p361 = scmp.ne.s32.totalorder %s350, %s353
      %p362 = scmp.eq.s32.totalorder %s43, 1
      %p363 = por %p361, %p362
      %p364 = scmp.ne.s32.totalorder %s353, %s354
      %p365 = scmp.eq.s32.totalorder %s43, 0
      %p366 = por %p364, %p365
      %p367 = scmp.ne.s32.totalorder %s353, %s354
      %p368 = scmp.eq.s32.totalorder %s44, 1
      %p369 = por %p367, %p368
      %p371 = scmp.ne.s32.totalorder %s354, %s370
      %p372 = scmp.eq.s32.totalorder %s44, 0
      %p373 = por %p371, %p372
      %s374 = ssub.s32 %s38, %s45
      %p375 = scmp.eq.s32.totalorder %s374, 0
      %s377 = sadd.s32 %s376, 1
      %s378 = scalar_select %p375, %s376, %s377
      %p381 = pneg %p375
      %p382 = scmp.eq.s32.totalorder %s38, 1
      %p383 = por %p381, %p382
      %p384 = scmp.ne.s32.totalorder %s376, %s379
      %p385 = scmp.eq.s32.totalorder %s38, 0
      %p386 = por %p384, %p385
      %p387 = scmp.ne.s32.totalorder %s376, %s379
      %p388 = scmp.eq.s32.totalorder %s43, 1
      %p389 = por %p387, %p388
      %p390 = scmp.ne.s32.totalorder %s379, %s380
      %p391 = scmp.eq.s32.totalorder %s43, 0
      %p392 = por %p390, %p391
      %p393 = scmp.ne.s32.totalorder %s379, %s380
      %p394 = scmp.eq.s32.totalorder %s44, 1
      %p395 = por %p393, %p394
      %p397 = scmp.ne.s32.totalorder %s380, %s396
      %p398 = scmp.eq.s32.totalorder %s44, 0
      %p399 = por %p397, %p398
      %s400 = ssub.s32 %s38, %s45
      %p401 = scmp.eq.s32.totalorder %s400, 0
      %s403 = sadd.s32 %s402, 1
      %s404 = scalar_select %p401, %s402, %s403
      %p407 = pneg %p401
      %p408 = scmp.eq.s32.totalorder %s38, 1
      %p409 = por %p407, %p408
      %p410 = scmp.ne.s32.totalorder %s402, %s405
      %p411 = scmp.eq.s32.totalorder %s38, 0
      %p412 = por %p410, %p411
      %p413 = scmp.ne.s32.totalorder %s402, %s405
      %p414 = scmp.eq.s32.totalorder %s43, 1
      %p415 = por %p413, %p414
      %p416 = scmp.ne.s32.totalorder %s405, %s406
      %p417 = scmp.eq.s32.totalorder %s43, 0
      %p418 = por %p416, %p417
      %p419 = scmp.ne.s32.totalorder %s405, %s406
      %p420 = scmp.eq.s32.totalorder %s44, 1
      %p421 = por %p419, %p420
      %p423 = scmp.ne.s32.totalorder %s406, %s422
      %p424 = scmp.eq.s32.totalorder %s44, 0
      %p425 = por %p423, %p424
      %s426 = ssub.s32 %s38, %s45
      %p427 = scmp.eq.s32.totalorder %s426, 0
      %s429 = sadd.s32 %s428, 1
      %s430 = scalar_select %p427, %s428, %s429
      %p433 = pneg %p427
      %p434 = scmp.eq.s32.totalorder %s38, 1
      %p435 = por %p433, %p434
      %p436 = scmp.ne.s32.totalorder %s428, %s431
      %p437 = scmp.eq.s32.totalorder %s38, 0
      %p438 = por %p436, %p437
      %p439 = scmp.ne.s32.totalorder %s428, %s431
      %p440 = scmp.eq.s32.totalorder %s43, 1
      %p441 = por %p439, %p440
      %p442 = scmp.ne.s32.totalorder %s431, %s432
      %p443 = scmp.eq.s32.totalorder %s43, 0
      %p444 = por %p442, %p443
      %p445 = scmp.ne.s32.totalorder %s431, %s432
      %p446 = scmp.eq.s32.totalorder %s44, 1
      %p447 = por %p445, %p446
      %p449 = scmp.ne.s32.totalorder %s432, %s448
      %p450 = scmp.eq.s32.totalorder %s44, 0
      %p451 = por %p449, %p450
      %s452 = ssub.s32 %s38, %s45
      %p453 = scmp.eq.s32.totalorder %s452, 0
      %s455 = sadd.s32 %s454, 1
      %s456 = scalar_select %p453, %s454, %s455
      %p459 = pneg %p453
      %p460 = scmp.eq.s32.totalorder %s38, 1
      %p461 = por %p459, %p460
      %p462 = scmp.ne.s32.totalorder %s454, %s457
      %p463 = scmp.eq.s32.totalorder %s38, 0
      %p464 = por %p462, %p463
      %p465 = scmp.ne.s32.totalorder %s454, %s457
      %p466 = scmp.eq.s32.totalorder %s43, 1
      %p467 = por %p465, %p466
      %p468 = scmp.ne.s32.totalorder %s457, %s458
      %p469 = scmp.eq.s32.totalorder %s43, 0
      %p470 = por %p468, %p469
      %p471 = scmp.ne.s32.totalorder %s457, %s458
      %p472 = scmp.eq.s32.totalorder %s44, 1
      %p473 = por %p471, %p472
      %p475 = scmp.ne.s32.totalorder %s458, %s474
      %p476 = scmp.eq.s32.totalorder %s44, 0
      %p477 = por %p475, %p476
      %s478 = ssub.s32 %s38, %s45
      %p479 = scmp.eq.s32.totalorder %s478, 0
      %s481 = sadd.s32 %s480, 1
      %s482 = scalar_select %p479, %s480, %s481
      %p485 = pneg %p479
      %p486 = scmp.eq.s32.totalorder %s38, 1
      %p487 = por %p485, %p486
      %p488 = scmp.ne.s32.totalorder %s480, %s483
      %p489 = scmp.eq.s32.totalorder %s38, 0
      %p490 = por %p488, %p489
      %p491 = scmp.ne.s32.totalorder %s480, %s483
      %p492 = scmp.eq.s32.totalorder %s43, 1
      %p493 = por %p491, %p492
      %p494 = scmp.ne.s32.totalorder %s483, %s484
      %p495 = scmp.eq.s32.totalorder %s43, 0
      %p496 = por %p494, %p495
      %p497 = scmp.ne.s32.totalorder %s483, %s484
      %p498 = scmp.eq.s32.totalorder %s44, 1
      %p499 = por %p497, %p498
      %p501 = scmp.ne.s32.totalorder %s484, %s500
      %p502 = scmp.eq.s32.totalorder %s44, 0
      %p503 = por %p501, %p502
      %s505 = sadd.s32 %s504, 1
      %p508 = scmp.eq.s32.totalorder %s38, 1
      %p509 = scmp.ne.s32.totalorder %s504, %s506
      %p510 = scmp.eq.s32.totalorder %s38, 0
      %p511 = por %p509, %p510
      %p512 = scmp.ne.s32.totalorder %s504, %s506
      %p513 = scmp.eq.s32.totalorder %s43, 1
      %p514 = por %p512, %p513
      %p515 = scmp.ne.s32.totalorder %s506, %s507
      %p516 = scmp.eq.s32.totalorder %s43, 0
      %p517 = por %p515, %p516
      %p518 = scmp.ne.s32.totalorder %s506, %s507
      %p519 = scmp.eq.s32.totalorder %s44, 1
      %p520 = por %p518, %p519
      %p522 = scmp.ne.s32.totalorder %s507, %s521
      %p523 = scmp.eq.s32.totalorder %s44, 0
      %p524 = por %p522, %p523
      %s526 = sadd.s32 %s525, 1
      %p529 = scmp.eq.s32.totalorder %s38, 1
      %p530 = scmp.ne.s32.totalorder %s525, %s527
      %p531 = scmp.eq.s32.totalorder %s38, 0
      %p532 = por %p530, %p531
      %p533 = scmp.ne.s32.totalorder %s525, %s527
      %p534 = scmp.eq.s32.totalorder %s43, 1
      %p535 = por %p533, %p534
      %p536 = scmp.ne.s32.totalorder %s527, %s528
      %p537 = scmp.eq.s32.totalorder %s43, 0
      %p538 = por %p536, %p537
      %p539 = scmp.ne.s32.totalorder %s527, %s528
      %p540 = scmp.eq.s32.totalorder %s44, 1
      %p541 = por %p539, %p540
      %p543 = scmp.ne.s32.totalorder %s528, %s542
      %p544 = scmp.eq.s32.totalorder %s44, 0
      %p545 = por %p543, %p544
      %s547 = sadd.s32 %s546, 1
      %p550 = scmp.eq.s32.totalorder %s38, 1
      %p551 = scmp.ne.s32.totalorder %s546, %s548
      %p552 = scmp.eq.s32.totalorder %s38, 0
      %p553 = por %p551, %p552
      %p554 = scmp.ne.s32.totalorder %s546, %s548
      %p555 = scmp.eq.s32.totalorder %s43, 1
      %p556 = por %p554, %p555
      %p557 = scmp.ne.s32.totalorder %s548, %s549
      %p558 = scmp.eq.s32.totalorder %s43, 0
      %p559 = por %p557, %p558
      %p560 = scmp.ne.s32.totalorder %s548, %s549
      %p561 = scmp.eq.s32.totalorder %s44, 1
      %p562 = por %p560, %p561
      %p564 = scmp.ne.s32.totalorder %s549, %s563
      %p565 = scmp.eq.s32.totalorder %s44, 0
      %p566 = por %p564, %p565
      %s568 = sadd.s32 %s567, 1
      %p571 = scmp.eq.s32.totalorder %s38, 1
      %p572 = scmp.ne.s32.totalorder %s567, %s569
      %p573 = scmp.eq.s32.totalorder %s38, 0
      %p574 = por %p572, %p573
      %p575 = scmp.ne.s32.totalorder %s567, %s569
      %p576 = scmp.eq.s32.totalorder %s43, 1
      %p577 = por %p575, %p576
      %p578 = scmp.ne.s32.totalorder %s569, %s570
      %p579 = scmp.eq.s32.totalorder %s43, 0
      %p580 = por %p578, %p579
      %p581 = scmp.ne.s32.totalorder %s569, %s570
      %p582 = scmp.eq.s32.totalorder %s44, 1
      %p583 = por %p581, %p582
      %p585 = scmp.ne.s32.totalorder %s570, %s584
      %p586 = scmp.eq.s32.totalorder %s44, 0
      %p587 = por %p585, %p586
      %s589 = sadd.s32 %s588, 1
      %p592 = scmp.eq.s32.totalorder %s38, 1
      %p593 = scmp.ne.s32.totalorder %s588, %s590
      %p594 = scmp.eq.s32.totalorder %s38, 0
      %p595 = por %p593, %p594
      %p596 = scmp.ne.s32.totalorder %s588, %s590
      %p597 = scmp.eq.s32.totalorder %s43, 1
      %p598 = por %p596, %p597
      %p599 = scmp.ne.s32.totalorder %s590, %s591
      %p600 = scmp.eq.s32.totalorder %s43, 0
      %p601 = por %p599, %p600
      %p602 = scmp.ne.s32.totalorder %s590, %s591
      %p603 = scmp.eq.s32.totalorder %s44, 1
      %p604 = por %p602, %p603
      %p606 = scmp.ne.s32.totalorder %s591, %s605
      %p607 = scmp.eq.s32.totalorder %s44, 0
      %p608 = por %p606, %p607
      %p609 = scmp.le.s32.totalorder 1, %s38
      %p610 = scmp.lt.s32.totalorder %s38, 3
      %p611 = pnand %p609, %p610
      %p612 = pneg %p611
      // Predicated region
      $region9: #{transformer_forward.1} parent=5 // pred_check
        _
      $region10: #{transformer_forward.1} parent=5 // pred_check_branch
        %614 = sbr.rel (%p611) target = $region12
      $region11: #{transformer_forward.1} parent=5 // pred_region
        %s615 = ssub.s32 %s38, 1
        // Predicated region
        $region13: #{transformer_forward.1} parent=11 // pred_check
          %p616 = pneg %p59
        $region14: #{transformer_forward.1} parent=11 // pred_check_branch
          %618 = sbr.rel (%p616) target = $region16
        $region15: #{transformer_forward.1} parent=11 // pred_region
          _
        $region16: #{transformer_forward.1} parent=11 // pred_fallthru
          _
        // Predicated region
        $region17: #{transformer_forward.1} parent=11 // pred_check
          %p619 = pneg %p80
        $region18: #{transformer_forward.1} parent=11 // pred_check_branch
          %621 = sbr.rel (%p619) target = $region20
        $region19: #{transformer_forward.1} parent=11 // pred_region
          _
        $region20: #{transformer_forward.1} parent=11 // pred_fallthru
          _
        // Predicated region
        $region21: #{transformer_forward.1} parent=11 // pred_check
          %p622 = pneg %p517
        $region22: #{transformer_forward.1} parent=11 // pred_check_branch
          %624 = sbr.rel (%p622) target = $region24
        $region23: #{transformer_forward.1} parent=11 // pred_region
          _
        $region24: #{transformer_forward.1} parent=11 // pred_fallthru
          _
        // Predicated region
        $region25: #{transformer_forward.1} parent=11 // pred_check
          %p625 = pneg %p538
        $region26: #{transformer_forward.1} parent=11 // pred_check_branch
          %627 = sbr.rel (%p625) target = $region28
        $region27: #{transformer_forward.1} parent=11 // pred_region
          _
        $region28: #{transformer_forward.1} parent=11 // pred_fallthru
          _
        // Predicated region
        $region29: #{transformer_forward.1} parent=11 // pred_check
          %p628 = pneg %p559
        $region30: #{transformer_forward.1} parent=11 // pred_check_branch
          %630 = sbr.rel (%p628) target = $region32
        $region31: #{transformer_forward.1} parent=11 // pred_region
          _
        $region32: #{transformer_forward.1} parent=11 // pred_fallthru
          _
        // Predicated region
        $region33: #{transformer_forward.1} parent=11 // pred_check
          %p631 = pneg %p580
        $region34: #{transformer_forward.1} parent=11 // pred_check_branch
          %633 = sbr.rel (%p631) target = $region36
        $region35: #{transformer_forward.1} parent=11 // pred_region
          _
        $region36: #{transformer_forward.1} parent=11 // pred_fallthru
          _
      $region12: #{transformer_forward.1} parent=5 // pred_fallthru
        _
      %p634 = scmp.lt.s32.totalorder %s38, 2
      // Predicated region
      $region37: #{transformer_forward.1} parent=5 // pred_check
        %p635 = pneg %p634
      $region38: #{transformer_forward.1} parent=5 // pred_check_branch
        %637 = sbr.rel (%p635) target = $region40
      $region39: #{transformer_forward.1} parent=5 // pred_region
        // Predicated region
        $region41: #{transformer_forward.1} parent=39 // pred_check
          %p638 = pneg %p100
        $region42: #{transformer_forward.1} parent=39 // pred_check_branch
          %640 = sbr.rel (%p638) target = $region44
        $region43: #{transformer_forward.1} parent=39 // pred_region
          %p641 = scmp.lt.s32.totalorder %s38, 1
          %s642 = scalar_select %p641, %s38, 1
          %s643 = scalar_lea.vmem %s2, %s642
        $region44: #{transformer_forward.1} parent=39 // pred_fallthru
          _
        // Predicated region
        $region45: #{transformer_forward.1} parent=39 // pred_check
          %p644 = pneg %p126
        $region46: #{transformer_forward.1} parent=39 // pred_check_branch
          %646 = sbr.rel (%p644) target = $region48
        $region47: #{transformer_forward.1} parent=39 // pred_region
          %p647 = scmp.lt.s32.totalorder %s38, 1
          %s648 = scalar_select %p647, %s38, 1
          %s649 = scalar_lea.vmem %s3, %s648
        $region48: #{transformer_forward.1} parent=39 // pred_fallthru
          _
        // Predicated region
        $region49: #{transformer_forward.1} parent=39 // pred_check
          %p650 = pneg %p152
        $region50: #{transformer_forward.1} parent=39 // pred_check_branch
          %652 = sbr.rel (%p650) target = $region52
        $region51: #{transformer_forward.1} parent=39 // pred_region
          %p653 = scmp.lt.s32.totalorder %s38, 1
          %s654 = scalar_select %p653, %s38, 1
          %s655 = smul.addr %s654, 16
          %s656 = smul.addr %s655, 4
          %s657 = scalar_lea.vmem %s4, %s656
        $region52: #{transformer_forward.1} parent=39 // pred_fallthru
          _
        // Predicated region
        $region53: #{transformer_forward.1} parent=39 // pred_check
          %p658 = pneg %p178
        $region54: #{transformer_forward.1} parent=39 // pred_check_branch
          %660 = sbr.rel (%p658) target = $region56
        $region55: #{transformer_forward.1} parent=39 // pred_region
          %p661 = scmp.lt.s32.totalorder %s38, 1
          %s662 = scalar_select %p661, %s38, 1
          %s663 = scalar_lea.vmem %s5, %s662
        $region56: #{transformer_forward.1} parent=39 // pred_fallthru
          _
        // Predicated region
        $region57: #{transformer_forward.1} parent=39 // pred_check
          %p664 = pneg %p204
        $region58: #{transformer_forward.1} parent=39 // pred_check_branch
          %666 = sbr.rel (%p664) target = $region60
        $region59: #{transformer_forward.1} parent=39 // pred_region
          %s667 = sand.u32 %s194, 1
          %s668 = scalar_lea.sflag [#allocation4], %s667
          %s669 = sand.u32 %s194, 1
          %s670 = smul.addr %s669, 64
          %s671 = scalar_lea.vmem [#allocation3], %s670
          %s673 = ssub.s32 1024, 1024
          %674 = vsyncadd %s668, %s673
          %s675 = smul.addr %s38, 16
          %s676 = smul.addr %s675, 64
          %s677 = scalar_lea.hbm %s6, %s676
          %s678 = sshll.u32 %s671, 4
          %s679 = int_to_ptr.vmem [resolvable:$true] %s678
          %684 = dma.hbm_to_vmem [thread:$0]  %s677, 1024, %s679, %s668, 64, 64, 4
        $region60: #{transformer_forward.1} parent=39 // pred_fallthru
          _
        // Predicated region
        $region61: #{transformer_forward.1} parent=39 // pred_check
          %p685 = pneg %p230
        $region62: #{transformer_forward.1} parent=39 // pred_check_branch
          %687 = sbr.rel (%p685) target = $region64
        $region63: #{transformer_forward.1} parent=39 // pred_region
          %p688 = scmp.lt.s32.totalorder %s38, 1
          %s689 = scalar_select %p688, %s38, 1
          %s690 = scalar_lea.vmem %s7, %s689
        $region64: #{transformer_forward.1} parent=39 // pred_fallthru
          _
        // Predicated region
        $region65: #{transformer_forward.1} parent=39 // pred_check
          %p691 = pneg %p256
        $region66: #{transformer_forward.1} parent=39 // pred_check_branch
          %693 = sbr.rel (%p691) target = $region68
        $region67: #{transformer_forward.1} parent=39 // pred_region
          %s694 = sand.u32 %s38, 1
          %s695 = scalar_lea.sflag [#allocation7], %s694
          %s696 = sand.u32 %s246, 1
          %s697 = smul.addr %s696, 64
          %s698 = scalar_lea.vmem [#allocation6], %s697
          %s700 = ssub.s32 1024, 1024
          %701 = vsyncadd %s695, %s700
          %s702 = smul.addr %s38, 16
          %s703 = smul.addr %s702, 64
          %s704 = scalar_lea.hbm %s8, %s703
          %s705 = sshll.u32 %s698, 4
          %s706 = int_to_ptr.vmem [resolvable:$true] %s705
          %711 = dma.hbm_to_vmem [thread:$0]  %s704, 1024, %s706, %s695, 64, 64, 4
        $region68: #{transformer_forward.1} parent=39 // pred_fallthru
          _
        // Predicated region
        $region69: #{transformer_forward.1} parent=39 // pred_check
          %p712 = pneg %p282
        $region70: #{transformer_forward.1} parent=39 // pred_check_branch
          %714 = sbr.rel (%p712) target = $region72
        $region71: #{transformer_forward.1} parent=39 // pred_region
          %p715 = scmp.lt.s32.totalorder %s38, 1
          %s716 = scalar_select %p715, %s38, 1
          %s717 = scalar_lea.vmem %s9, %s716
        $region72: #{transformer_forward.1} parent=39 // pred_fallthru
          _
        // Predicated region
        $region73: #{transformer_forward.1} parent=39 // pred_check
          %p718 = pneg %p308
        $region74: #{transformer_forward.1} parent=39 // pred_check_branch
          %720 = sbr.rel (%p718) target = $region76
        $region75: #{transformer_forward.1} parent=39 // pred_region
          %s721 = sand.u32 %s38, 1
          %s722 = scalar_lea.sflag [#allocation7], %s721
          %s723 = sand.u32 %s298, 1
          %s724 = smul.addr %s723, 64
          %s725 = scalar_lea.vmem [#allocation8], %s724
          %s727 = ssub.s32 1024, 1024
          %728 = vsyncadd %s722, %s727
          %s729 = smul.addr %s38, 16
          %s730 = smul.addr %s729, 64
          %s731 = scalar_lea.hbm %s10, %s730
          %s732 = sshll.u32 %s725, 4
          %s733 = int_to_ptr.vmem [resolvable:$true] %s732
          %738 = dma.hbm_to_vmem [thread:$0]  %s731, 1024, %s733, %s722, 64, 64, 4
        $region76: #{transformer_forward.1} parent=39 // pred_fallthru
          _
        // Predicated region
        $region77: #{transformer_forward.1} parent=39 // pred_check
          %p739 = pneg %p334
        $region78: #{transformer_forward.1} parent=39 // pred_check_branch
          %741 = sbr.rel (%p739) target = $region80
        $region79: #{transformer_forward.1} parent=39 // pred_region
          %p742 = scmp.lt.s32.totalorder %s38, 1
          %s743 = scalar_select %p742, %s38, 1
          %s744 = scalar_lea.vmem %s11, %s743
        $region80: #{transformer_forward.1} parent=39 // pred_fallthru
          _
        // Predicated region
        $region81: #{transformer_forward.1} parent=39 // pred_check
          %p745 = pneg %p360
        $region82: #{transformer_forward.1} parent=39 // pred_check_branch
          %747 = sbr.rel (%p745) target = $region84
        $region83: #{transformer_forward.1} parent=39 // pred_region
          %p748 = scmp.lt.s32.totalorder %s38, 1
          %s749 = scalar_select %p748, %s38, 1
          %s750 = scalar_lea.vmem %s12, %s749
        $region84: #{transformer_forward.1} parent=39 // pred_fallthru
          _
        // Predicated region
        $region85: #{transformer_forward.1} parent=39 // pred_check
          %p751 = pneg %p386
        $region86: #{transformer_forward.1} parent=39 // pred_check_branch
          %753 = sbr.rel (%p751) target = $region88
        $region87: #{transformer_forward.1} parent=39 // pred_region
          %p754 = scmp.lt.s32.totalorder %s38, 1
          %s755 = scalar_select %p754, %s38, 1
          %s756 = scalar_lea.vmem %s13, %s755
        $region88: #{transformer_forward.1} parent=39 // pred_fallthru
          _
        // Predicated region
        $region89: #{transformer_forward.1} parent=39 // pred_check
          %p757 = pneg %p412
        $region90: #{transformer_forward.1} parent=39 // pred_check_branch
          %759 = sbr.rel (%p757) target = $region92
        $region91: #{transformer_forward.1} parent=39 // pred_region
          %s760 = sand.u32 %s38, 1
          %s761 = scalar_lea.sflag [#allocation10], %s760
          %s762 = sand.u32 %s402, 1
          %s763 = smul.addr %s762, 128
          %s764 = scalar_lea.vmem [#allocation9], %s763
          %s766 = ssub.s32 2048, 2048
          %767 = vsyncadd %s761, %s766
          %s768 = smul.addr %s38, 32
          %s769 = smul.addr %s768, 64
          %s770 = scalar_lea.hbm %s14, %s769
          %s771 = sshll.u32 %s764, 4
          %s772 = int_to_ptr.vmem [resolvable:$true] %s771
          %777 = dma.hbm_to_vmem [thread:$0]  %s770, 2048, %s772, %s761, 128, 128, 8
        $region92: #{transformer_forward.1} parent=39 // pred_fallthru
          _
        // Predicated region
        $region93: #{transformer_forward.1} parent=39 // pred_check
          %p778 = pneg %p438
        $region94: #{transformer_forward.1} parent=39 // pred_check_branch
          %780 = sbr.rel (%p778) target = $region96
        $region95: #{transformer_forward.1} parent=39 // pred_region
          %p781 = scmp.lt.s32.totalorder %s38, 1
          %s782 = scalar_select %p781, %s38, 1
          %s783 = smul.addr %s782, 2
          %s784 = scalar_lea.vmem %s15, %s783
        $region96: #{transformer_forward.1} parent=39 // pred_fallthru
          _
        // Predicated region
        $region97: #{transformer_forward.1} parent=39 // pred_check
          %p785 = pneg %p464
        $region98: #{transformer_forward.1} parent=39 // pred_check_branch
          %787 = sbr.rel (%p785) target = $region100
        $region99: #{transformer_forward.1} parent=39 // pred_region
          %s788 = sand.u32 %s38, 1
          %s789 = scalar_lea.sflag [#allocation10], %s788
          %s790 = sand.u32 %s454, 1
          %s791 = smul.addr %s790, 128
          %s792 = scalar_lea.vmem [#allocation11], %s791
          %s794 = ssub.s32 2048, 2048
          %795 = vsyncadd %s789, %s794
          %s796 = smul.addr %s38, 32
          %s797 = smul.addr %s796, 64
          %s798 = scalar_lea.hbm %s16, %s797
          %s799 = sshll.u32 %s792, 4
          %s800 = int_to_ptr.vmem [resolvable:$true] %s799
          %805 = dma.hbm_to_vmem [thread:$0]  %s798, 2048, %s800, %s789, 64, 64, 4
        $region100: #{transformer_forward.1} parent=39 // pred_fallthru
          _
        // Predicated region
        $region101: #{transformer_forward.1} parent=39 // pred_check
          %p806 = pneg %p490
        $region102: #{transformer_forward.1} parent=39 // pred_check_branch
          %808 = sbr.rel (%p806) target = $region104
        $region103: #{transformer_forward.1} parent=39 // pred_region
          %p809 = scmp.lt.s32.totalorder %s38, 1
          %s810 = scalar_select %p809, %s38, 1
          %s811 = scalar_lea.vmem %s17, %s810
        $region104: #{transformer_forward.1} parent=39 // pred_fallthru
          _
      $region40: #{transformer_forward.1} parent=5 // pred_fallthru
        _
      %p812 = scmp.le.s32.totalorder 1, %s38
      %p813 = scmp.lt.s32.totalorder %s38, 3
      %p814 = pnand %p812, %p813
      %p815 = pneg %p814
      // Predicated region
      $region105: #{transformer_forward.1} parent=5 // pred_check
        _
      $region106: #{transformer_forward.1} parent=5 // pred_check_branch
        %817 = sbr.rel (%p814) target = $region108
      $region107: #{transformer_forward.1} parent=5 // pred_region
        %s818 = ssub.s32 %s38, 1
        %s819 = sand.u32 %s197, 1
        %s820 = scalar_lea.sflag [#allocation4], %s819
        %s821 = sand.u32 %s197, 1
        %s822 = smul.addr %s821, 64
        %s823 = scalar_lea.vmem [#allocation3], %s822
        // Predicated region
        $region109: #{transformer_forward.1} parent=107 // pred_check
          %p824 = pneg %p210
        $region110: #{transformer_forward.1} parent=107 // pred_check_branch
          %826 = sbr.rel (%p824) target = $region112
        $region111: #{transformer_forward.1} parent=107 // pred_region
          %827 = dma.done %s820, 1024
        $region112: #{transformer_forward.1} parent=107 // pred_fallthru
          _
        %s828 = sand.u32 %s43, 1
        %s829 = scalar_lea.sflag [#allocation7], %s828
        %s830 = sand.u32 %s249, 1
        %s831 = smul.addr %s830, 64
        %s832 = scalar_lea.vmem [#allocation6], %s831
        // Predicated region
        $region113: #{transformer_forward.1} parent=107 // pred_check
          %p833 = pneg %p262
        $region114: #{transformer_forward.1} parent=107 // pred_check_branch
          %835 = sbr.rel (%p833) target = $region116
        $region115: #{transformer_forward.1} parent=107 // pred_region
          %836 = dma.done %s829, 1024
        $region116: #{transformer_forward.1} parent=107 // pred_fallthru
          _
        %s837 = sand.u32 %s43, 1
        %s838 = scalar_lea.sflag [#allocation7], %s837
        %s839 = sand.u32 %s301, 1
        %s840 = smul.addr %s839, 64
        %s841 = scalar_lea.vmem [#allocation8], %s840
        // Predicated region
        $region117: #{transformer_forward.1} parent=107 // pred_check
          %p842 = pneg %p314
        $region118: #{transformer_forward.1} parent=107 // pred_check_branch
          %844 = sbr.rel (%p842) target = $region120
        $region119: #{transformer_forward.1} parent=107 // pred_region
          %845 = dma.done %s838, 1024
        $region120: #{transformer_forward.1} parent=107 // pred_fallthru
          _
        %s846 = sand.u32 %s43, 1
        %s847 = scalar_lea.sflag [#allocation10], %s846
        %s848 = sand.u32 %s405, 1
        %s849 = smul.addr %s848, 128
        %s850 = scalar_lea.vmem [#allocation9], %s849
        // Predicated region
        $region121: #{transformer_forward.1} parent=107 // pred_check
          %p851 = pneg %p418
        $region122: #{transformer_forward.1} parent=107 // pred_check_branch
          %853 = sbr.rel (%p851) target = $region124
        $region123: #{transformer_forward.1} parent=107 // pred_region
          %854 = dma.done %s847, 2048
        $region124: #{transformer_forward.1} parent=107 // pred_fallthru
          _
        %s855 = sand.u32 %s43, 1
        %s856 = scalar_lea.sflag [#allocation10], %s855
        %s857 = sand.u32 %s457, 1
        %s858 = smul.addr %s857, 128
        %s859 = scalar_lea.vmem [#allocation11], %s858
        // Predicated region
        $region125: #{transformer_forward.1} parent=107 // pred_check
          %p860 = pneg %p470
        $region126: #{transformer_forward.1} parent=107 // pred_check_branch
          %862 = sbr.rel (%p860) target = $region128
        $region127: #{transformer_forward.1} parent=107 // pred_region
          %863 = dma.done %s856, 2048
        $region128: #{transformer_forward.1} parent=107 // pred_fallthru
          _
        %p864 = pneg %p59
        %p865 = pneg %p56
        %p866 = pneg %p80
        %p867 = pneg %p77
        %p868 = scmp.lt.s32.totalorder %s43, 1
        %s869 = scalar_select %p868, %s43, 1
        %s870 = scalar_lea.vmem %s2, %s869
        %p871 = pneg %p106
        %p872 = pneg %p103
        %p873 = scmp.lt.s32.totalorder %s43, 1
        %s874 = scalar_select %p873, %s43, 1
        %s875 = scalar_lea.vmem %s3, %s874
        %p876 = pneg %p132
        %p877 = pneg %p129
        %p878 = scmp.lt.s32.totalorder %s43, 1
        %s879 = scalar_select %p878, %s43, 1
        %s880 = smul.addr %s879, 16
        %s881 = smul.addr %s880, 4
        %s882 = scalar_lea.vmem %s4, %s881
        %p883 = pneg %p158
        %p884 = pneg %p155
        %p885 = scmp.lt.s32.totalorder %s43, 1
        %s886 = scalar_select %p885, %s43, 1
        %s887 = scalar_lea.vmem %s5, %s886
        %p888 = pneg %p184
        %p889 = pneg %p181
        %s890 = sand.u32 %s197, 1
        %s891 = scalar_lea.sflag [#allocation4], %s890
        %s892 = sand.u32 %s197, 1
        %s893 = smul.addr %s892, 64
        %s894 = scalar_lea.vmem [#allocation3], %s893
        %p895 = pneg %p210
        %p896 = pneg %p207
        %p897 = scmp.lt.s32.totalorder %s43, 1
        %s898 = scalar_select %p897, %s43, 1
        %s899 = scalar_lea.vmem %s7, %s898
        %p900 = pneg %p236
        %p901 = pneg %p233
        %s902 = sand.u32 %s43, 1
        %s903 = scalar_lea.sflag [#allocation7], %s902
        %s904 = sand.u32 %s249, 1
        %s905 = smul.addr %s904, 64
        %s906 = scalar_lea.vmem [#allocation6], %s905
        %p907 = pneg %p262
        %p908 = pneg %p259
        %p909 = scmp.lt.s32.totalorder %s43, 1
        %s910 = scalar_select %p909, %s43, 1
        %s911 = scalar_lea.vmem %s9, %s910
        %p912 = pneg %p288
        %p913 = pneg %p285
        %s914 = sand.u32 %s43, 1
        %s915 = scalar_lea.sflag [#allocation7], %s914
        %s916 = sand.u32 %s301, 1
        %s917 = smul.addr %s916, 64
        %s918 = scalar_lea.vmem [#allocation8], %s917
        %p919 = pneg %p314
        %p920 = pneg %p311
        %p921 = scmp.lt.s32.totalorder %s43, 1
        %s922 = scalar_select %p921, %s43, 1
        %s923 = scalar_lea.vmem %s11, %s922
        %p924 = pneg %p340
        %p925 = pneg %p337
        %p926 = scmp.lt.s32.totalorder %s43, 1
        %s927 = scalar_select %p926, %s43, 1
        %s928 = scalar_lea.vmem %s12, %s927
        %p929 = pneg %p366
        %p930 = pneg %p363
        %p931 = scmp.lt.s32.totalorder %s43, 1
        %s932 = scalar_select %p931, %s43, 1
        %s933 = scalar_lea.vmem %s13, %s932
        %p934 = pneg %p392
        %p935 = pneg %p389
        %s936 = sand.u32 %s43, 1
        %s937 = scalar_lea.sflag [#allocation10], %s936
        %s938 = sand.u32 %s405, 1
        %s939 = smul.addr %s938, 128
        %s940 = scalar_lea.vmem [#allocation9], %s939
        %p941 = pneg %p418
        %p942 = pneg %p415
        %p943 = scmp.lt.s32.totalorder %s43, 1
        %s944 = scalar_select %p943, %s43, 1
        %s945 = smul.addr %s944, 2
        %s946 = scalar_lea.vmem %s15, %s945
        %p947 = pneg %p444
        %p948 = pneg %p441
        %s949 = sand.u32 %s43, 1
        %s950 = scalar_lea.sflag [#allocation10], %s949
        %s951 = sand.u32 %s457, 1
        %s952 = smul.addr %s951, 128
        %s953 = scalar_lea.vmem [#allocation11], %s952
        %p954 = pneg %p470
        %p955 = pneg %p467
        %p956 = scmp.lt.s32.totalorder %s43, 1
        %s957 = scalar_select %p956, %s43, 1
        %s958 = scalar_lea.vmem %s17, %s957
        %p959 = pneg %p496
        %p960 = pneg %p493
        %p961 = pneg %p517
        %p962 = pneg %p514
        %p963 = pneg %p538
        %p964 = pneg %p535
        %p965 = pneg %p559
        %p966 = pneg %p556
        %p967 = pneg %p580
        %p968 = pneg %p577
        %p969 = pneg %p601
        %p970 = pneg %p598
        %p971 = scmp.lt.s32.totalorder %s43, 1
        %s972 = scalar_select %p971, %s43, 1
        %s973 = scalar_lea.vmem %s2, %s972
        %p974 = scmp.lt.s32.totalorder %s43, 1
        %s975 = scalar_select %p974, %s43, 1
        %s976 = scalar_lea.vmem %s3, %s975
        %p977 = scmp.lt.s32.totalorder %s43, 1
        %s978 = scalar_select %p977, %s43, 1
        %s979 = smul.addr %s978, 16
        %s980 = smul.addr %s979, 4
        %s981 = scalar_lea.vmem %s4, %s980
        %p982 = scmp.lt.s32.totalorder %s43, 1
        %s983 = scalar_select %p982, %s43, 1
        %s984 = scalar_lea.vmem %s5, %s983
        %p985 = scmp.lt.s32.totalorder %s43, 1
        %s986 = scalar_select %p985, %s43, 1
        %s987 = scalar_lea.vmem %s7, %s986
        %p988 = scmp.lt.s32.totalorder %s43, 1
        %s989 = scalar_select %p988, %s43, 1
        %s990 = scalar_lea.vmem %s9, %s989
        %p991 = scmp.lt.s32.totalorder %s43, 1
        %s992 = scalar_select %p991, %s43, 1
        %s993 = scalar_lea.vmem %s11, %s992
        %p994 = scmp.lt.s32.totalorder %s43, 1
        %s995 = scalar_select %p994, %s43, 1
        %s996 = scalar_lea.vmem %s12, %s995
        %p997 = scmp.lt.s32.totalorder %s43, 1
        %s998 = scalar_select %p997, %s43, 1
        %s999 = scalar_lea.vmem %s13, %s998
        %p1000 = scmp.lt.s32.totalorder %s43, 1
        %s1001 = scalar_select %p1000, %s43, 1
        %s1002 = smul.addr %s1001, 2
        %s1003 = scalar_lea.vmem %s15, %s1002
        %p1004 = scmp.lt.s32.totalorder %s43, 1
        %s1005 = scalar_select %p1004, %s43, 1
        %s1006 = scalar_lea.vmem %s17, %s1005
        %p1008 = scmp.eq.s32.totalorder %s43, 0
        // Predicated region
        $region129: #{transformer_forward.1} parent=107 // pred_check
          %p1009 = pneg %p1008
        $region130: #{transformer_forward.1} parent=107 // pred_check_branch
          %1011 = sbr.rel (%p1009) target = $region132
        $region131: #{transformer_forward.1} parent=107 // pred_region
          %v1012 = vld [vmem:[%s0] sm:$0xff]
          %v1013 = vld [vmem:[%s0 + $0x8] sm:$0xff]
          %1014 = vst [vmem:[#allocation2] sm:$0xff] %v1012
          %1015 = vst [vmem:[#allocation2 + $0x8] sm:$0xff] %v1013
        $region132: #{transformer_forward.1} parent=107 // pred_fallthru
          _
        %v1016 = vld [vmem:[%s1] sm:$0x1]
        %v1017 = vld [vmem:[%s1 + $0x1] sm:$0x1]
        %vm1018 = vcmp.eq.f32.partialorder %v1016, 0.0
        %vm1019 = vcmp.eq.f32.partialorder %v1017, 0.0
        %v1020 = vsel %vm1018, -1e+09, 0.0
        %v1021 = vsel %vm1019, -1e+09, 0.0
        %v1022 = vld [vmem:[%s973] sm:$0x1]
        %v1023 = vld [vmem:[%s976] sm:$0x1]
        %v1024 = vld [vmem:[%s981] sm:$0xf]
        %v1025 = vld [vmem:[%s981 + $0x4] sm:$0xf]
        %v1026 = vld [vmem:[%s981 + $0x8] sm:$0xf]
        %v1027 = vld [vmem:[%s981 + $0xc] sm:$0xf]
        %v1028 = vld [vmem:[%s981 + $0x10] sm:$0xf]
        %v1029 = vld [vmem:[%s981 + $0x14] sm:$0xf]
        %v1030 = vld [vmem:[%s981 + $0x18] sm:$0xf]
        %v1031 = vld [vmem:[%s981 + $0x1c] sm:$0xf]
        %v1032 = vld [vmem:[%s981 + $0x20] sm:$0xf]
        %v1033 = vld [vmem:[%s981 + $0x24] sm:$0xf]
        %v1034 = vld [vmem:[%s981 + $0x28] sm:$0xf]
        %v1035 = vld [vmem:[%s981 + $0x2c] sm:$0xf]
        %v1036 = vld [vmem:[%s981 + $0x30] sm:$0xf]
        %v1037 = vld [vmem:[%s981 + $0x34] sm:$0xf]
        %v1038 = vld [vmem:[%s981 + $0x38] sm:$0xf]
        %v1039 = vld [vmem:[%s981 + $0x3c] sm:$0xf]
        %v1040 = vld [vmem:[%s984] sm:$0x1]
        %v1041 = vld [vmem:[%s823] sm:$0xf]
        %v1042 = vld [vmem:[%s823 + $0x4] sm:$0xf]
        %v1043 = vld [vmem:[%s823 + $0x8] sm:$0xf]
        %v1044 = vld [vmem:[%s823 + $0xc] sm:$0xf]
        %v1045 = vld [vmem:[%s823 + $0x10] sm:$0xf]
        %v1046 = vld [vmem:[%s823 + $0x14] sm:$0xf]
        %v1047 = vld [vmem:[%s823 + $0x18] sm:$0xf]
        %v1048 = vld [vmem:[%s823 + $0x1c] sm:$0xf]
        %v1049 = vld [vmem:[%s823 + $0x20] sm:$0xf]
        %v1050 = vld [vmem:[%s823 + $0x24] sm:$0xf]
        %v1051 = vld [vmem:[%s823 + $0x28] sm:$0xf]
        %v1052 = vld [vmem:[%s823 + $0x2c] sm:$0xf]
        %v1053 = vld [vmem:[%s823 + $0x30] sm:$0xf]
        %v1054 = vld [vmem:[%s823 + $0x34] sm:$0xf]
        %v1055 = vld [vmem:[%s823 + $0x38] sm:$0xf]
        %v1056 = vld [vmem:[%s823 + $0x3c] sm:$0xf]
        %v1057 = vld [vmem:[%s987] sm:$0x1]
        %v1058 = vld [vmem:[%s832] sm:$0xf]
        %v1059 = vld [vmem:[%s832 + $0x4] sm:$0xf]
        %v1060 = vld [vmem:[%s832 + $0x8] sm:$0xf]
        %v1061 = vld [vmem:[%s832 + $0xc] sm:$0xf]
        %v1062 = vld [vmem:[%s832 + $0x10] sm:$0xf]
        %v1063 = vld [vmem:[%s832 + $0x14] sm:$0xf]
        %v1064 = vld [vmem:[%s832 + $0x18] sm:$0xf]
        %v1065 = vld [vmem:[%s832 + $0x1c] sm:$0xf]
        %v1066 = vld [vmem:[%s832 + $0x20] sm:$0xf]
        %v1067 = vld [vmem:[%s832 + $0x24] sm:$0xf]
        %v1068 = vld [vmem:[%s832 + $0x28] sm:$0xf]
        %v1069 = vld [vmem:[%s832 + $0x2c] sm:$0xf]
        %v1070 = vld [vmem:[%s832 + $0x30] sm:$0xf]
        %v1071 = vld [vmem:[%s832 + $0x34] sm:$0xf]
        %v1072 = vld [vmem:[%s832 + $0x38] sm:$0xf]
        %v1073 = vld [vmem:[%s832 + $0x3c] sm:$0xf]
        %v1074 = vld [vmem:[%s990] sm:$0x1]
        %v1075 = vld [vmem:[%s841] sm:$0xf]
        %v1076 = vld [vmem:[%s841 + $0x4] sm:$0xf]
        %v1077 = vld [vmem:[%s841 + $0x8] sm:$0xf]
        %v1078 = vld [vmem:[%s841 + $0xc] sm:$0xf]
        %v1079 = vld [vmem:[%s841 + $0x10] sm:$0xf]
        %v1080 = vld [vmem:[%s841 + $0x14] sm:$0xf]
        %v1081 = vld [vmem:[%s841 + $0x18] sm:$0xf]
        %v1082 = vld [vmem:[%s841 + $0x1c] sm:$0xf]
        %v1083 = vld [vmem:[%s841 + $0x20] sm:$0xf]
        %v1084 = vld [vmem:[%s841 + $0x24] sm:$0xf]
        %v1085 = vld [vmem:[%s841 + $0x28] sm:$0xf]
        %v1086 = vld [vmem:[%s841 + $0x2c] sm:$0xf]
        %v1087 = vld [vmem:[%s841 + $0x30] sm:$0xf]
        %v1088 = vld [vmem:[%s841 + $0x34] sm:$0xf]
        %v1089 = vld [vmem:[%s841 + $0x38] sm:$0xf]
        %v1090 = vld [vmem:[%s841 + $0x3c] sm:$0xf]
        %v1091 = vld [vmem:[%s993] sm:$0x1]
        %v1092 = vld [vmem:[%s996] sm:$0x1]
        %v1093 = vld [vmem:[%s999] sm:$0x1]
        %v1094 = vld [vmem:[%s850] sm:$0xff]
        %v1095 = vld [vmem:[%s850 + $0x8] sm:$0xff]
        %v1096 = vld [vmem:[%s850 + $0x10] sm:$0xff]
        %v1097 = vld [vmem:[%s850 + $0x18] sm:$0xff]
        %v1098 = vld [vmem:[%s850 + $0x20] sm:$0xff]
        %v1099 = vld [vmem:[%s850 + $0x28] sm:$0xff]
        %v1100 = vld [vmem:[%s850 + $0x30] sm:$0xff]
        %v1101 = vld [vmem:[%s850 + $0x38] sm:$0xff]
        %v1102 = vld [vmem:[%s850 + $0x40] sm:$0xff]
        %v1103 = vld [vmem:[%s850 + $0x48] sm:$0xff]
        %v1104 = vld [vmem:[%s850 + $0x50] sm:$0xff]
        %v1105 = vld [vmem:[%s850 + $0x58] sm:$0xff]
        %v1106 = vld [vmem:[%s850 + $0x60] sm:$0xff]
        %v1107 = vld [vmem:[%s850 + $0x68] sm:$0xff]
        %v1108 = vld [vmem:[%s850 + $0x70] sm:$0xff]
        %v1109 = vld [vmem:[%s850 + $0x78] sm:$0xff]
        %v1110 = vld [vmem:[%s1003] sm:$0x3]
        %v1111 = vld [vmem:[%s859] sm:$0xf]
        %v1112 = vld [vmem:[%s859 + $0x4] sm:$0xf]
        %v1113 = vld [vmem:[%s859 + $0x8] sm:$0xf]
        %v1114 = vld [vmem:[%s859 + $0xc] sm:$0xf]
        %v1115 = vld [vmem:[%s859 + $0x10] sm:$0xf]
        %v1116 = vld [vmem:[%s859 + $0x14] sm:$0xf]
        %v1117 = vld [vmem:[%s859 + $0x18] sm:$0xf]
        %v1118 = vld [vmem:[%s859 + $0x1c] sm:$0xf]
        %v1119 = vld [vmem:[%s859 + $0x20] sm:$0xf]
        %v1120 = vld [vmem:[%s859 + $0x24] sm:$0xf]
        %v1121 = vld [vmem:[%s859 + $0x28] sm:$0xf]
        %v1122 = vld [vmem:[%s859 + $0x2c] sm:$0xf]
        %v1123 = vld [vmem:[%s859 + $0x30] sm:$0xf]
        %v1124 = vld [vmem:[%s859 + $0x34] sm:$0xf]
        %v1125 = vld [vmem:[%s859 + $0x38] sm:$0xf]
        %v1126 = vld [vmem:[%s859 + $0x3c] sm:$0xf]
        %v1127 = vld [vmem:[%s859 + $0x40] sm:$0xf]
        %v1128 = vld [vmem:[%s859 + $0x44] sm:$0xf]
        %v1129 = vld [vmem:[%s859 + $0x48] sm:$0xf]
        %v1130 = vld [vmem:[%s859 + $0x4c] sm:$0xf]
        %v1131 = vld [vmem:[%s859 + $0x50] sm:$0xf]
        %v1132 = vld [vmem:[%s859 + $0x54] sm:$0xf]
        %v1133 = vld [vmem:[%s859 + $0x58] sm:$0xf]
        %v1134 = vld [vmem:[%s859 + $0x5c] sm:$0xf]
        %v1135 = vld [vmem:[%s859 + $0x60] sm:$0xf]
        %v1136 = vld [vmem:[%s859 + $0x64] sm:$0xf]
        %v1137 = vld [vmem:[%s859 + $0x68] sm:$0xf]
        %v1138 = vld [vmem:[%s859 + $0x6c] sm:$0xf]
        %v1139 = vld [vmem:[%s859 + $0x70] sm:$0xf]
        %v1140 = vld [vmem:[%s859 + $0x74] sm:$0xf]
        %v1141 = vld [vmem:[%s859 + $0x78] sm:$0xf]
        %v1142 = vld [vmem:[%s859 + $0x7c] sm:$0xf]
        %v1143 = vld [vmem:[%s1006] sm:$0x1]
        %v1144 = vld [vmem:[#allocation2] sm:$0xff]
        %v1145 = vld [vmem:[#allocation2 + $0x8] sm:$0xff]
        %1146 = vadd.xlane.f32.xlu0 %v1144
        %v1147 = vpop.xlane.xlu0 %1146
        %1148 = vadd.xlane.f32.xlu0 %v1145
        %v1149 = vpop.xlane.xlu0 %1148
        %v1150 = vrcp.pop 128.0
        %v1151 = vmul.f32 %v1147, %v1150
        %v1152 = vmul.f32 %v1149, %v1150
        %v1153 = vsub.f32 %v1144, %v1151
        %v1154 = vsub.f32 %v1145, %v1152
        %v1155 = vmul.f32 %v1153, %v1153
        %v1156 = vmul.f32 %v1154, %v1154
        %1157 = vadd.xlane.f32.xlu0 %v1155
        %v1158 = vpop.xlane.xlu0 %1157
        %1159 = vadd.xlane.f32.xlu0 %v1156
        %v1160 = vpop.xlane.xlu0 %1159
        %v1161 = vmul.f32 %v1158, 0.007874016
        %v1162 = vmul.f32 %v1160, 0.007874016
        %v1163 = vrsqrt.pop %v1161
        %v1164 = vmul.f32 %v1161, %v1163
        %vm1165 = vcmp.eq.f32.partialorder %v1161, inf
        %v1166 = vsel %vm1165, %v1161, %v1164
        %vm1167 = vcmp.eq.f32.partialorder %v1161, 0.0
        %v1168 = vand.u32 %v1161, 2147483648
        %v1169 = vsel %vm1167, %v1168, %v1166
        %v1170 = vrsqrt.pop %v1162
        %v1171 = vmul.f32 %v1162, %v1170
        %vm1172 = vcmp.eq.f32.partialorder %v1162, inf
        %v1173 = vsel %vm1172, %v1162, %v1171
        %vm1174 = vcmp.eq.f32.partialorder %v1162, 0.0
        %v1175 = vand.u32 %v1162, 2147483648
        %v1176 = vsel %vm1174, %v1175, %v1173
        %v1177 = vadd.f32 %v1169, 1e-06
        %v1178 = vadd.f32 %v1176, 1e-06
        %v1179 = vrcp.pop %v1177
        %v1180 = vrcp.pop %v1178
        %v1182 = vlaneseq
        %v1183 = vshrl.u32 %v1182, 7
        %v1184 = vsub.s32 0, %v1183
        %v1185 = vrot.slane %v1022, %v1184
        %v1187 = vmul.f32 %v1185, %v1153
        %v1188 = vmul.f32 %v1185, %v1154
        %v1189 = vmul.f32 %v1187, %v1179
        %v1190 = vmul.f32 %v1188, %v1180
        %v1192 = vlaneseq
        %v1193 = vshrl.u32 %v1192, 7
        %v1194 = vsub.s32 0, %v1193
        %v1195 = vrot.slane %v1023, %v1194
        %v1197 = vadd.f32 %v1189, %v1195
        %v1198 = vadd.f32 %v1190, %v1195
        %v1199 = vpack.c.bf16 %v1198, %v1197
        %v1201 = vlaneseq
        %v1202 = vshrl.u32 %v1201, 7
        %v1203 = vsub.s32 0, %v1202
        %v1204 = vrot.slane %v1040, %v1203
        %v1222 = vunpack.c.l.b16 %v1024
        %v1223 = vunpack.c.l.b16 %v1025
        %v1224 = vunpack.c.l.b16 %v1026
        %v1225 = vunpack.c.l.b16 %v1027
        %v1226 = vunpack.c.l.b16 %v1028
        %v1227 = vunpack.c.l.b16 %v1029
        %v1228 = vunpack.c.l.b16 %v1030
        %v1229 = vunpack.c.l.b16 %v1031
        %v1230 = vunpack.c.l.b16 %v1032
        %v1231 = vunpack.c.l.b16 %v1033
        %v1232 = vunpack.c.l.b16 %v1034
        %v1233 = vunpack.c.l.b16 %v1035
        %v1234 = vunpack.c.l.b16 %v1036
        %v1235 = vunpack.c.l.b16 %v1037
        %v1236 = vunpack.c.l.b16 %v1038
        %v1237 = vunpack.c.l.b16 %v1039
        %v1238 = vpack.c.b16 %v1223, %v1222
        %v1239 = vpack.c.b16 %v1225, %v1224
        %v1240 = vpack.c.b16 %v1227, %v1226
        %v1241 = vpack.c.b16 %v1229, %v1228
        %v1242 = vpack.c.b16 %v1231, %v1230
        %v1243 = vpack.c.b16 %v1233, %v1232
        %v1244 = vpack.c.b16 %v1235, %v1234
        %v1245 = vpack.c.b16 %v1237, %v1236
        %1254 = vmatprep.subr.bf16.mxu0 0
        %1255 = vmatpush1.bf16.msra.mxu0 %v1238
        %1256 = vmatprep.subr.bf16.mxu0 0
        %1257 = vmatpush1.bf16.msra.mxu0 %v1239
        %1258 = vmatprep.subr.bf16.mxu0 0
        %1259 = vmatpush1.bf16.msra.mxu0 %v1240
        %1260 = vmatprep.subr.bf16.mxu0 0
        %1261 = vmatpush1.bf16.msra.mxu0 %v1241
        %1262 = vmatprep.subr.bf16.mxu0 0
        %1263 = vmatpush1.bf16.msra.mxu0 %v1242
        %1264 = vmatprep.subr.bf16.mxu0 0
        %1265 = vmatpush1.bf16.msra.mxu0 %v1243
        %1266 = vmatprep.subr.bf16.mxu0 0
        %1267 = vmatpush1.bf16.msra.mxu0 %v1244
        %1268 = vmatprep.subr.bf16.mxu0 0
        %1269 = vmatpush1.bf16.msra.mxu0 %v1245
        %1270 = vmatprep.subr.bf16.mxu0 0
        %1271 = vmatpush1.bf16.msra.mxu0 0
        %1272 = vmatprep.subr.bf16.mxu0 0
        %1273 = vmatpush1.bf16.msra.mxu0 0
        %1274 = vmatprep.subr.bf16.mxu0 0
        %1275 = vmatpush1.bf16.msra.mxu0 0
        %1276 = vmatprep.subr.bf16.mxu0 0
        %1277 = vmatpush1.bf16.msra.mxu0 0
        %1278 = vmatprep.subr.bf16.mxu0 0
        %1279 = vmatpush1.bf16.msra.mxu0 0
        %1280 = vmatprep.subr.bf16.mxu0 0
        %1281 = vmatpush1.bf16.msra.mxu0 0
        %1282 = vmatprep.subr.bf16.mxu0 0
        %1283 = vmatpush1.bf16.msra.mxu0 0
        %1284 = vmatprep.subr.bf16.mxu0 0
        %1285 = vmatpush1.bf16.msra.mxu0 0
        %1286 = vmatprep.mubr.bf16.mxu0 0
        %1287 = vmatmul.mubr.bf16.gmra.mrb[0].mxu0 %v1199
        %v1288 = vpop.f32.mrb[0].mxu0
        %v1289 = vadd.f32 %v1204, %v1288
        %v1290 = vpop.f32.mrb[0].mxu0
        %v1291 = vpop.f32.mrb[0].mxu0
        %v1292 = vadd.f32 %v1204, %v1291
        %v1293 = vpop.f32.mrb[0].mxu0
        %1294 = vdwg.mxu0
        %v1296 = vlaneseq
        %v1297 = vshrl.u32 %v1296, 7
        %v1298 = vsub.s32 0, %v1297
        %v1299 = vrot.slane %v1057, %v1298
        %v1317 = vunpack.c.l.b16 %v1041
        %v1318 = vunpack.c.l.b16 %v1042
        %v1319 = vunpack.c.l.b16 %v1043
        %v1320 = vunpack.c.l.b16 %v1044
        %v1321 = vunpack.c.l.b16 %v1045
        %v1322 = vunpack.c.l.b16 %v1046
        %v1323 = vunpack.c.l.b16 %v1047
        %v1324 = vunpack.c.l.b16 %v1048
        %v1325 = vunpack.c.l.b16 %v1049
        %v1326 = vunpack.c.l.b16 %v1050
        %v1327 = vunpack.c.l.b16 %v1051
        %v1328 = vunpack.c.l.b16 %v1052
        %v1329 = vunpack.c.l.b16 %v1053
        %v1330 = vunpack.c.l.b16 %v1054
        %v1331 = vunpack.c.l.b16 %v1055
        %v1332 = vunpack.c.l.b16 %v1056
        %v1333 = vpack.c.b16 %v1318, %v1317
        %v1334 = vpack.c.b16 %v1320, %v1319
        %v1335 = vpack.c.b16 %v1322, %v1321
        %v1336 = vpack.c.b16 %v1324, %v1323
        %v1337 = vpack.c.b16 %v1326, %v1325
        %v1338 = vpack.c.b16 %v1328, %v1327
        %v1339 = vpack.c.b16 %v1330, %v1329
        %v1340 = vpack.c.b16 %v1332, %v1331
        %1349 = vmatprep.subr.bf16.mxu0 0
        %1350 = vmatpush1.bf16.msra.mxu0 %v1333
        %1351 = vmatprep.subr.bf16.mxu0 0
        %1352 = vmatpush1.bf16.msra.mxu0 %v1334
        %1353 = vmatprep.subr.bf16.mxu0 0
        %1354 = vmatpush1.bf16.msra.mxu0 %v1335
        %1355 = vmatprep.subr.bf16.mxu0 0
        %1356 = vmatpush1.bf16.msra.mxu0 %v1336
        %1357 = vmatprep.subr.bf16.mxu0 0
        %1358 = vmatpush1.bf16.msra.mxu0 %v1337
        %1359 = vmatprep.subr.bf16.mxu0 0
        %1360 = vmatpush1.bf16.msra.mxu0 %v1338
        %1361 = vmatprep.subr.bf16.mxu0 0
        %1362 = vmatpush1.bf16.msra.mxu0 %v1339
        %1363 = vmatprep.subr.bf16.mxu0 0
        %1364 = vmatpush1.bf16.msra.mxu0 %v1340
        %1365 = vmatprep.subr.bf16.mxu0 0
        %1366 = vmatpush1.bf16.msra.mxu0 0
        %1367 = vmatprep.subr.bf16.mxu0 0
        %1368 = vmatpush1.bf16.msra.mxu0 0
        %1369 = vmatprep.subr.bf16.mxu0 0
        %1370 = vmatpush1.bf16.msra.mxu0 0
        %1371 = vmatprep.subr.bf16.mxu0 0
        %1372 = vmatpush1.bf16.msra.mxu0 0
        %1373 = vmatprep.subr.bf16.mxu0 0
        %1374 = vmatpush1.bf16.msra.mxu0 0
        %1375 = vmatprep.subr.bf16.mxu0 0
        %1376 = vmatpush1.bf16.msra.mxu0 0
        %1377 = vmatprep.subr.bf16.mxu0 0
        %1378 = vmatpush1.bf16.msra.mxu0 0
        %1379 = vmatprep.subr.bf16.mxu0 0
        %1380 = vmatpush1.bf16.msra.mxu0 0
        %1381 = vmatprep.mubr.bf16.mxu0 0
        %1382 = vmatmul.mubr.bf16.gmra.mrb[0].mxu0 %v1199
        %v1383 = vpop.f32.mrb[0].mxu0
        %v1384 = vadd.f32 %v1299, %v1383
        %v1385 = vpop.f32.mrb[0].mxu0
        %v1386 = vpop.f32.mrb[0].mxu0
        %v1387 = vadd.f32 %v1299, %v1386
        %v1388 = vpop.f32.mrb[0].mxu0
        %1389 = vdwg.mxu0
        %v1391 = vlaneseq
        %v1392 = vshrl.u32 %v1391, 7
        %v1393 = vsub.s32 0, %v1392
        %v1394 = vrot.slane %v1074, %v1393
        %v1412 = vunpack.c.l.b16 %v1058
        %v1413 = vunpack.c.l.b16 %v1059
        %v1414 = vunpack.c.l.b16 %v1060
        %v1415 = vunpack.c.l.b16 %v1061
        %v1416 = vunpack.c.l.b16 %v1062
        %v1417 = vunpack.c.l.b16 %v1063
        %v1418 = vunpack.c.l.b16 %v1064
        %v1419 = vunpack.c.l.b16 %v1065
        %v1420 = vunpack.c.l.b16 %v1066
        %v1421 = vunpack.c.l.b16 %v1067
        %v1422 = vunpack.c.l.b16 %v1068
        %v1423 = vunpack.c.l.b16 %v1069
        %v1424 = vunpack.c.l.b16 %v1070
        %v1425 = vunpack.c.l.b16 %v1071
        %v1426 = vunpack.c.l.b16 %v1072
        %v1427 = vunpack.c.l.b16 %v1073
        %v1428 = vpack.c.b16 %v1413, %v1412
        %v1429 = vpack.c.b16 %v1415, %v1414
        %v1430 = vpack.c.b16 %v1417, %v1416
        %v1431 = vpack.c.b16 %v1419, %v1418
        %v1432 = vpack.c.b16 %v1421, %v1420
        %v1433 = vpack.c.b16 %v1423, %v1422
        %v1434 = vpack.c.b16 %v1425, %v1424
        %v1435 = vpack.c.b16 %v1427, %v1426
        %1444 = vmatprep.subr.bf16.mxu0 0
        %1445 = vmatpush1.bf16.msra.mxu0 %v1428
        %1446 = vmatprep.subr.bf16.mxu0 0
        %1447 = vmatpush1.bf16.msra.mxu0 %v1429
        %1448 = vmatprep.subr.bf16.mxu0 0
        %1449 = vmatpush1.bf16.msra.mxu0 %v1430
        %1450 = vmatprep.subr.bf16.mxu0 0
        %1451 = vmatpush1.bf16.msra.mxu0 %v1431
        %1452 = vmatprep.subr.bf16.mxu0 0
        %1453 = vmatpush1.bf16.msra.mxu0 %v1432
        %1454 = vmatprep.subr.bf16.mxu0 0
        %1455 = vmatpush1.bf16.msra.mxu0 %v1433
        %1456 = vmatprep.subr.bf16.mxu0 0
        %1457 = vmatpush1.bf16.msra.mxu0 %v1434
        %1458 = vmatprep.subr.bf16.mxu0 0
        %1459 = vmatpush1.bf16.msra.mxu0 %v1435
        %1460 = vmatprep.subr.bf16.mxu0 0
        %1461 = vmatpush1.bf16.msra.mxu0 0
        %1462 = vmatprep.subr.bf16.mxu0 0
        %1463 = vmatpush1.bf16.msra.mxu0 0
        %1464 = vmatprep.subr.bf16.mxu0 0
        %1465 = vmatpush1.bf16.msra.mxu0 0
        %1466 = vmatprep.subr.bf16.mxu0 0
        %1467 = vmatpush1.bf16.msra.mxu0 0
        %1468 = vmatprep.subr.bf16.mxu0 0
        %1469 = vmatpush1.bf16.msra.mxu0 0
        %1470 = vmatprep.subr.bf16.mxu0 0
        %1471 = vmatpush1.bf16.msra.mxu0 0
        %1472 = vmatprep.subr.bf16.mxu0 0
        %1473 = vmatpush1.bf16.msra.mxu0 0
        %1474 = vmatprep.subr.bf16.mxu0 0
        %1475 = vmatpush1.bf16.msra.mxu0 0
        %1476 = vmatprep.mubr.bf16.mxu0 0
        %1477 = vmatmul.mubr.bf16.gmra.mrb[0].mxu0 %v1199
        %v1478 = vpop.f32.mrb[0].mxu0
        %v1479 = vadd.f32 %v1394, %v1478
        %v1480 = vpop.f32.mrb[0].mxu0
        %v1481 = vpop.f32.mrb[0].mxu0
        %v1482 = vadd.f32 %v1394, %v1481
        %v1483 = vpop.f32.mrb[0].mxu0
        %1484 = vdwg.mxu0
        %v1485 = vmul.f32 %v1289, 0.25
        %v1486 = vmul.f32 %v1292, 0.25
        %v1487 = vpack.c.bf16 %v1486, %v1485
        %v1489 = vunpack.c.l.b16 %v1487
        %v1490 = vunpack.c.h.b16 %v1487
        %v1491 = vpack.c.b16 %v1489, %v1489
        %v1492 = vpack.c.b16 %v1490, %v1490
        %v1493 = vpack.c.bf16 %v1482, %v1479
        %v1495 = vunpack.c.l.b16 %v1493
        %v1496 = vunpack.c.h.b16 %v1493
        %v1497 = vpack.c.b16 %v1495, %v1495
        %v1498 = vpack.c.b16 %v1496, %v1496
        %1499 = vxpose.xlu0.b32.start [1/16] %v1384, 128
        %1500 = vxpose.xlu0.b32.cont [2/16] 0.0, 128
        %1501 = vxpose.xlu0.b32.cont [3/16] 0.0, 128
        %1502 = vxpose.xlu0.b32.cont [4/16] 0.0, 128
        %1503 = vxpose.xlu0.b32.cont [5/16] 0.0, 128
        %1504 = vxpose.xlu0.b32.cont [6/16] 0.0, 128
        %1505 = vxpose.xlu0.b32.cont [7/16] 0.0, 128
        %1506 = vxpose.xlu0.b32.cont [8/16] 0.0, 128
        %1507 = vxpose.xlu0.b32.cont [9/16] 0.0, 128
        %1508 = vxpose.xlu0.b32.cont [10/16] 0.0, 128
        %1509 = vxpose.xlu0.b32.cont [11/16] 0.0, 128
        %1510 = vxpose.xlu0.b32.cont [12/16] 0.0, 128
        %1511 = vxpose.xlu0.b32.cont [13/16] 0.0, 128
        %1512 = vxpose.xlu0.b32.cont [14/16] 0.0, 128
        %1513 = vxpose.xlu0.b32.cont [15/16] 0.0, 128
        %1514 = vxpose.xlu0.b32.end [16/16] 0.0, 128
        %v1515 = vpop.trf.xlu0
        %v1516 = vpop.trf.xlu0
        %v1517 = vpop.trf.xlu0
        %v1518 = vpop.trf.xlu0
        %v1519 = vpop.trf.xlu0
        %v1520 = vpop.trf.xlu0
        %v1521 = vpop.trf.xlu0
        %v1522 = vpop.trf.xlu0
        %v1523 = vpop.trf.xlu0
        %v1524 = vpop.trf.xlu0
        %v1525 = vpop.trf.xlu0
        %v1526 = vpop.trf.xlu0
        %v1527 = vpop.trf.xlu0
        %v1528 = vpop.trf.xlu0
        %v1529 = vpop.trf.xlu0
        %v1530 = vpop.trf.xlu0
        %1531 = vxpose.xlu0.b32.start [1/16] %v1387, 128
        %1532 = vxpose.xlu0.b32.cont [2/16] 0.0, 128
        %1533 = vxpose.xlu0.b32.cont [3/16] 0.0, 128
        %1534 = vxpose.xlu0.b32.cont [4/16] 0.0, 128
        %1535 = vxpose.xlu0.b32.cont [5/16] 0.0, 128
        %1536 = vxpose.xlu0.b32.cont [6/16] 0.0, 128
        %1537 = vxpose.xlu0.b32.cont [7/16] 0.0, 128
        %1538 = vxpose.xlu0.b32.cont [8/16] 0.0, 128
        %1539 = vxpose.xlu0.b32.cont [9/16] 0.0, 128
        %1540 = vxpose.xlu0.b32.cont [10/16] 0.0, 128
        %1541 = vxpose.xlu0.b32.cont [11/16] 0.0, 128
        %1542 = vxpose.xlu0.b32.cont [12/16] 0.0, 128
        %1543 = vxpose.xlu0.b32.cont [13/16] 0.0, 128
        %1544 = vxpose.xlu0.b32.cont [14/16] 0.0, 128
        %1545 = vxpose.xlu0.b32.cont [15/16] 0.0, 128
        %1546 = vxpose.xlu0.b32.end [16/16] 0.0, 128
        %v1547 = vpop.trf.xlu0
        %v1548 = vpop.trf.xlu0
        %v1549 = vpop.trf.xlu0
        %v1550 = vpop.trf.xlu0
        %v1551 = vpop.trf.xlu0
        %v1552 = vpop.trf.xlu0
        %v1553 = vpop.trf.xlu0
        %v1554 = vpop.trf.xlu0
        %v1555 = vpop.trf.xlu0
        %v1556 = vpop.trf.xlu0
        %v1557 = vpop.trf.xlu0
        %v1558 = vpop.trf.xlu0
        %v1559 = vpop.trf.xlu0
        %v1560 = vpop.trf.xlu0
        %v1561 = vpop.trf.xlu0
        %v1562 = vpop.trf.xlu0
        %v1563 = vpack.c.bf16 %v1516, %v1515
        %v1564 = vpack.c.bf16 %v1518, %v1517
        %v1565 = vpack.c.bf16 %v1520, %v1519
        %v1566 = vpack.c.bf16 %v1522, %v1521
        %v1567 = vpack.c.bf16 %v1524, %v1523
        %v1568 = vpack.c.bf16 %v1526, %v1525
        %v1569 = vpack.c.bf16 %v1528, %v1527
        %v1570 = vpack.c.bf16 %v1530, %v1529
        %v1571 = vpack.c.bf16 %v1548, %v1547
        %v1572 = vpack.c.bf16 %v1550, %v1549
        %v1573 = vpack.c.bf16 %v1552, %v1551
        %v1574 = vpack.c.bf16 %v1554, %v1553
        %v1575 = vpack.c.bf16 %v1556, %v1555
        %v1576 = vpack.c.bf16 %v1558, %v1557
        %v1577 = vpack.c.bf16 %v1560, %v1559
        %v1578 = vpack.c.bf16 %v1562, %v1561
        %v1581 = vlaneseq
        %v1582 = vshrl.u32 %v1581, 7
        %v1583 = vsub.s32 0, %v1582
        %v1584 = vrot.slane %v1020, %v1583
        %v1585 = vlaneseq
        %v1586 = vshrl.u32 %v1585, 7
        %v1587 = vsub.s32 0, %v1586
        %v1588 = vrot.slane %v1021, %v1587
        %vm1591 = vcmask 130048
        %v1593 = vsel %vm1591, %v1491, 0
        %1595 = vmatprep.subr.bf16.mxu0 0
        %1596 = vmatpush1.bf16.msra.mxu0 %v1563
        %1597 = vmatprep.subr.bf16.mxu0 0
        %1598 = vmatpush1.bf16.msra.mxu0 0
        %1599 = vmatprep.subr.bf16.mxu0 0
        %1600 = vmatpush1.bf16.msra.mxu0 0
        %1601 = vmatprep.subr.bf16.mxu0 0
        %1602 = vmatpush1.bf16.msra.mxu0 0
        %1603 = vmatprep.subr.bf16.mxu0 0
        %1604 = vmatpush1.bf16.msra.mxu0 0
        %1605 = vmatprep.subr.bf16.mxu0 0
        %1606 = vmatpush1.bf16.msra.mxu0 0
        %1607 = vmatprep.subr.bf16.mxu0 0
        %1608 = vmatpush1.bf16.msra.mxu0 0
        %1609 = vmatprep.subr.bf16.mxu0 0
        %1610 = vmatpush1.bf16.msra.mxu0 0
        %1611 = vmatprep.subr.bf16.mxu0 0
        %1612 = vmatpush1.bf16.msra.mxu0 0
        %1613 = vmatprep.subr.bf16.mxu0 0
        %1614 = vmatpush1.bf16.msra.mxu0 0
        %1615 = vmatprep.subr.bf16.mxu0 0
        %1616 = vmatpush1.bf16.msra.mxu0 0
        %1617 = vmatprep.subr.bf16.mxu0 0
        %1618 = vmatpush1.bf16.msra.mxu0 0
        %1619 = vmatprep.subr.bf16.mxu0 0
        %1620 = vmatpush1.bf16.msra.mxu0 0
        %1621 = vmatprep.subr.bf16.mxu0 0
        %1622 = vmatpush1.bf16.msra.mxu0 0
        %1623 = vmatprep.subr.bf16.mxu0 0
        %1624 = vmatpush1.bf16.msra.mxu0 0
        %1625 = vmatprep.subr.bf16.mxu0 0
        %1626 = vmatpush1.bf16.msra.mxu0 0
        %1627 = vmatprep.mubr.bf16.mxu0 0
        %1628 = vmatmul.mubr.bf16.gmra.mrb[0].mxu0 %v1593
        %v1629 = vpop.f32.mrb[0].mxu0
        %v1630 = vadd.f32 %v1584, %v1629
        %v1631 = vpop.f32.mrb[0].mxu0
        %v1632 = vpop.f32.mrb[0].mxu0
        %v1633 = vpop.f32.mrb[0].mxu0
        %1634 = vdwg.mxu0
        %v1636 = vsel %vm1591, %v1492, 0
        %1638 = vmatprep.subr.bf16.mxu0 0
        %1639 = vmatpush1.bf16.msra.mxu0 %v1571
        %1640 = vmatprep.subr.bf16.mxu0 0
        %1641 = vmatpush1.bf16.msra.mxu0 0
        %1642 = vmatprep.subr.bf16.mxu0 0
        %1643 = vmatpush1.bf16.msra.mxu0 0
        %1644 = vmatprep.subr.bf16.mxu0 0
        %1645 = vmatpush1.bf16.msra.mxu0 0
        %1646 = vmatprep.subr.bf16.mxu0 0
        %1647 = vmatpush1.bf16.msra.mxu0 0
        %1648 = vmatprep.subr.bf16.mxu0 0
        %1649 = vmatpush1.bf16.msra.mxu0 0
        %1650 = vmatprep.subr.bf16.mxu0 0
        %1651 = vmatpush1.bf16.msra.mxu0 0
        %1652 = vmatprep.subr.bf16.mxu0 0
        %1653 = vmatpush1.bf16.msra.mxu0 0
        %1654 = vmatprep.subr.bf16.mxu0 0
        %1655 = vmatpush1.bf16.msra.mxu0 0
        %1656 = vmatprep.subr.bf16.mxu0 0
        %1657 = vmatpush1.bf16.msra.mxu0 0
        %1658 = vmatprep.subr.bf16.mxu0 0
        %1659 = vmatpush1.bf16.msra.mxu0 0
        %1660 = vmatprep.subr.bf16.mxu0 0
        %1661 = vmatpush1.bf16.msra.mxu0 0
        %1662 = vmatprep.subr.bf16.mxu0 0
        %1663 = vmatpush1.bf16.msra.mxu0 0
        %1664 = vmatprep.subr.bf16.mxu0 0
        %1665 = vmatpush1.bf16.msra.mxu0 0
        %1666 = vmatprep.subr.bf16.mxu0 0
        %1667 = vmatpush1.bf16.msra.mxu0 0
        %1668 = vmatprep.subr.bf16.mxu0 0
        %1669 = vmatpush1.bf16.msra.mxu0 0
        %1670 = vmatprep.mubr.bf16.mxu0 0
        %1671 = vmatmul.mubr.bf16.gmra.mrb[0].mxu0 %v1636
        %v1672 = vpop.f32.mrb[0].mxu0
        %v1673 = vadd.f32 %v1588, %v1672
        %v1674 = vpop.f32.mrb[0].mxu0
        %v1675 = vpop.f32.mrb[0].mxu0
        %v1676 = vpop.f32.mrb[0].mxu0
        %1677 = vdwg.mxu0
        %vm1678 = vcmask 64512
        %v1679 = vsel %vm1678, %v1630, -inf
        %1680 = vmax.xlane.f32.xlu0 %v1679
        %v1681 = vpop.xlane.xlu0 %1680
        %v1682 = vsel %vm1678, %v1673, -inf
        %1683 = vmax.xlane.f32.xlu0 %v1682
        %v1684 = vpop.xlane.xlu0 %1683
        %v1685 = vsub.f32 %v1630, %v1681
        %v1686 = vsub.f32 %v1673, %v1684
        %v1687 = vmul.f32 %v1685, 1.442695
        %v1688 = vpow.pop %v1687
        %v1689 = vmul.f32 %v1686, 1.442695
        %v1690 = vpow.pop %v1689
        %v1691 = vsel %vm1678, %v1688, 0.0
        %1692 = vadd.xlane.f32.xlu0 %v1691
        %v1693 = vpop.xlane.xlu0 %1692
        %v1694 = vsel %vm1678, %v1690, 0.0
        %1695 = vadd.xlane.f32.xlu0 %v1694
        %v1696 = vpop.xlane.xlu0 %1695
        %v1697 = vrcp.pop %v1693
        %v1698 = vrcp.pop %v1696
        %v1699 = vmul.f32 %v1688, %v1697
        %v1700 = vmul.f32 %v1690, %v1698
        %v1701 = vpack.c.bf16 %v1699, %v1699
        %v1702 = vpack.c.bf16 %v1700, %v1700
        %v1704 = vsel %vm1678, %v1701, 0
        %vm1706 = vcmask 1043456
        %v1708 = vsel %vm1706, %v1497, 0
        %1710 = vmatprep.subr.bf16.mxu0 0
        %1711 = vmatpush1.bf16.msra.mxu0 %v1708
        %1712 = vmatprep.subr.bf16.mxu0 0
        %1713 = vmatpush1.bf16.msra.mxu0 0
        %1714 = vmatprep.subr.bf16.mxu0 0
        %1715 = vmatpush1.bf16.msra.mxu0 0
        %1716 = vmatprep.subr.bf16.mxu0 0
        %1717 = vmatpush1.bf16.msra.mxu0 0
        %1718 = vmatprep.subr.bf16.mxu0 0
        %1719 = vmatpush1.bf16.msra.mxu0 0
        %1720 = vmatprep.subr.bf16.mxu0 0
        %1721 = vmatpush1.bf16.msra.mxu0 0
        %1722 = vmatprep.subr.bf16.mxu0 0
        %1723 = vmatpush1.bf16.msra.mxu0 0
        %1724 = vmatprep.subr.bf16.mxu0 0
        %1725 = vmatpush1.bf16.msra.mxu0 0
        %1726 = vmatprep.subr.bf16.mxu0 0
        %1727 = vmatpush1.bf16.msra.mxu0 0
        %1728 = vmatprep.subr.bf16.mxu0 0
        %1729 = vmatpush1.bf16.msra.mxu0 0
        %1730 = vmatprep.subr.bf16.mxu0 0
        %1731 = vmatpush1.bf16.msra.mxu0 0
        %1732 = vmatprep.subr.bf16.mxu0 0
        %1733 = vmatpush1.bf16.msra.mxu0 0
        %1734 = vmatprep.subr.bf16.mxu0 0
        %1735 = vmatpush1.bf16.msra.mxu0 0
        %1736 = vmatprep.subr.bf16.mxu0 0
        %1737 = vmatpush1.bf16.msra.mxu0 0
        %1738 = vmatprep.subr.bf16.mxu0 0
        %1739 = vmatpush1.bf16.msra.mxu0 0
        %1740 = vmatprep.subr.bf16.mxu0 0
        %1741 = vmatpush1.bf16.msra.mxu0 0
        %1742 = vmatprep.mubr.bf16.mxu0 0
        %1743 = vmatmul.mubr.bf16.gmra.mrb[0].mxu0 %v1704
        %v1744 = vpop.f32.mrb[0].mxu0
        %v1745 = vadd.f32 0.0, %v1744
        %v1746 = vpop.f32.mrb[0].mxu0
        %v1747 = vpop.f32.mrb[0].mxu0
        %v1748 = vpop.f32.mrb[0].mxu0
        %1749 = vdwg.mxu0
        %v1751 = vsel %vm1678, %v1702, 0
        %v1754 = vsel %vm1706, %v1498, 0
        %1756 = vmatprep.subr.bf16.mxu0 0
        %1757 = vmatpush1.bf16.msra.mxu0 %v1754
        %1758 = vmatprep.subr.bf16.mxu0 0
        %1759 = vmatpush1.bf16.msra.mxu0 0
        %1760 = vmatprep.subr.bf16.mxu0 0
        %1761 = vmatpush1.bf16.msra.mxu0 0
        %1762 = vmatprep.subr.bf16.mxu0 0
        %1763 = vmatpush1.bf16.msra.mxu0 0
        %1764 = vmatprep.subr.bf16.mxu0 0
        %1765 = vmatpush1.bf16.msra.mxu0 0
        %1766 = vmatprep.subr.bf16.mxu0 0
        %1767 = vmatpush1.bf16.msra.mxu0 0
        %1768 = vmatprep.subr.bf16.mxu0 0
        %1769 = vmatpush1.bf16.msra.mxu0 0
        %1770 = vmatprep.subr.bf16.mxu0 0
        %1771 = vmatpush1.bf16.msra.mxu0 0
        %1772 = vmatprep.subr.bf16.mxu0 0
        %1773 = vmatpush1.bf16.msra.mxu0 0
        %1774 = vmatprep.subr.bf16.mxu0 0
        %1775 = vmatpush1.bf16.msra.mxu0 0
        %1776 = vmatprep.subr.bf16.mxu0 0
        %1777 = vmatpush1.bf16.msra.mxu0 0
        %1778 = vmatprep.subr.bf16.mxu0 0
        %1779 = vmatpush1.bf16.msra.mxu0 0
        %1780 = vmatprep.subr.bf16.mxu0 0
        %1781 = vmatpush1.bf16.msra.mxu0 0
        %1782 = vmatprep.subr.bf16.mxu0 0
        %1783 = vmatpush1.bf16.msra.mxu0 0
        %1784 = vmatprep.subr.bf16.mxu0 0
        %1785 = vmatpush1.bf16.msra.mxu0 0
        %1786 = vmatprep.subr.bf16.mxu0 0
        %1787 = vmatpush1.bf16.msra.mxu0 0
        %1788 = vmatprep.mubr.bf16.mxu0 0
        %1789 = vmatmul.mubr.bf16.gmra.mrb[0].mxu0 %v1751
        %v1790 = vpop.f32.mrb[0].mxu0
        %v1791 = vadd.f32 0.0, %v1790
        %v1792 = vpop.f32.mrb[0].mxu0
        %v1793 = vpop.f32.mrb[0].mxu0
        %v1794 = vpop.f32.mrb[0].mxu0
        %1795 = vdwg.mxu0
        %v1796 = vpack.c.bf16 %v1791, %v1745
        %1797 = vrot.lane.b32.xlu0 %v1491, 112
        %v1798 = vpop.permute.xlu0 %1797
        %v1800 = vsel %vm1591, %v1798, 0
        %1802 = vmatprep.subr.bf16.mxu0 0
        %1803 = vmatpush1.bf16.msra.mxu0 %v1564
        %1804 = vmatprep.subr.bf16.mxu0 0
        %1805 = vmatpush1.bf16.msra.mxu0 0
        %1806 = vmatprep.subr.bf16.mxu0 0
        %1807 = vmatpush1.bf16.msra.mxu0 0
        %1808 = vmatprep.subr.bf16.mxu0 0
        %1809 = vmatpush1.bf16.msra.mxu0 0
        %1810 = vmatprep.subr.bf16.mxu0 0
        %1811 = vmatpush1.bf16.msra.mxu0 0
        %1812 = vmatprep.subr.bf16.mxu0 0
        %1813 = vmatpush1.bf16.msra.mxu0 0
        %1814 = vmatprep.subr.bf16.mxu0 0
        %1815 = vmatpush1.bf16.msra.mxu0 0
        %1816 = vmatprep.subr.bf16.mxu0 0
        %1817 = vmatpush1.bf16.msra.mxu0 0
        %1818 = vmatprep.subr.bf16.mxu0 0
        %1819 = vmatpush1.bf16.msra.mxu0 0
        %1820 = vmatprep.subr.bf16.mxu0 0
        %1821 = vmatpush1.bf16.msra.mxu0 0
        %1822 = vmatprep.subr.bf16.mxu0 0
        %1823 = vmatpush1.bf16.msra.mxu0 0
        %1824 = vmatprep.subr.bf16.mxu0 0
        %1825 = vmatpush1.bf16.msra.mxu0 0
        %1826 = vmatprep.subr.bf16.mxu0 0
        %1827 = vmatpush1.bf16.msra.mxu0 0
        %1828 = vmatprep.subr.bf16.mxu0 0
        %1829 = vmatpush1.bf16.msra.mxu0 0
        %1830 = vmatprep.subr.bf16.mxu0 0
        %1831 = vmatpush1.bf16.msra.mxu0 0
        %1832 = vmatprep.subr.bf16.mxu0 0
        %1833 = vmatpush1.bf16.msra.mxu0 0
        %1834 = vmatprep.mubr.bf16.mxu0 0
        %1835 = vmatmul.mubr.bf16.gmra.mrb[0].mxu0 %v1800
        %v1836 = vpop.f32.mrb[0].mxu0
        %v1837 = vadd.f32 %v1584, %v1836
        %v1838 = vpop.f32.mrb[0].mxu0
        %v1839 = vpop.f32.mrb[0].mxu0
        %v1840 = vpop.f32.mrb[0].mxu0
        %1841 = vdwg.mxu0
        %1842 = vrot.lane.b32.xlu0 %v1492, 112
        %v1843 = vpop.permute.xlu0 %1842
        %v1845 = vsel %vm1591, %v1843, 0
        %1847 = vmatprep.subr.bf16.mxu0 0
        %1848 = vmatpush1.bf16.msra.mxu0 %v1572
        %1849 = vmatprep.subr.bf16.mxu0 0
        %1850 = vmatpush1.bf16.msra.mxu0 0
        %1851 = vmatprep.subr.bf16.mxu0 0
        %1852 = vmatpush1.bf16.msra.mxu0 0
        %1853 = vmatprep.subr.bf16.mxu0 0
        %1854 = vmatpush1.bf16.msra.mxu0 0
        %1855 = vmatprep.subr.bf16.mxu0 0
        %1856 = vmatpush1.bf16.msra.mxu0 0
        %1857 = vmatprep.subr.bf16.mxu0 0
        %1858 = vmatpush1.bf16.msra.mxu0 0
        %1859 = vmatprep.subr.bf16.mxu0 0
        %1860 = vmatpush1.bf16.msra.mxu0 0
        %1861 = vmatprep.subr.bf16.mxu0 0
        %1862 = vmatpush1.bf16.msra.mxu0 0
        %1863 = vmatprep.subr.bf16.mxu0 0
        %1864 = vmatpush1.bf16.msra.mxu0 0
        %1865 = vmatprep.subr.bf16.mxu0 0
        %1866 = vmatpush1.bf16.msra.mxu0 0
        %1867 = vmatprep.subr.bf16.mxu0 0
        %1868 = vmatpush1.bf16.msra.mxu0 0
        %1869 = vmatprep.subr.bf16.mxu0 0
        %1870 = vmatpush1.bf16.msra.mxu0 0
        %1871 = vmatprep.subr.bf16.mxu0 0
        %1872 = vmatpush1.bf16.msra.mxu0 0
        %1873 = vmatprep.subr.bf16.mxu0 0
        %1874 = vmatpush1.bf16.msra.mxu0 0
        %1875 = vmatprep.subr.bf16.mxu0 0
        %1876 = vmatpush1.bf16.msra.mxu0 0
        %1877 = vmatprep.subr.bf16.mxu0 0
        %1878 = vmatpush1.bf16.msra.mxu0 0
        %1879 = vmatprep.mubr.bf16.mxu0 0
        %1880 = vmatmul.mubr.bf16.gmra.mrb[0].mxu0 %v1845
        %v1881 = vpop.f32.mrb[0].mxu0
        %v1882 = vadd.f32 %v1588, %v1881
        %v1883 = vpop.f32.mrb[0].mxu0
        %v1884 = vpop.f32.mrb[0].mxu0
        %v1885 = vpop.f32.mrb[0].mxu0
        %1886 = vdwg.mxu0
        %v1887 = vsel %vm1678, %v1837, -inf
        %1888 = vmax.xlane.f32.xlu0 %v1887
        %v1889 = vpop.xlane.xlu0 %1888
        %v1890 = vsel %vm1678, %v1882, -inf
        %1891 = vmax.xlane.f32.xlu0 %v1890
        %v1892 = vpop.xlane.xlu0 %1891
        %v1893 = vsub.f32 %v1837, %v1889
        %v1894 = vsub.f32 %v1882, %v1892
        %v1895 = vmul.f32 %v1893, 1.442695
        %v1896 = vpow.pop %v1895
        %v1897 = vmul.f32 %v1894, 1.442695
        %v1898 = vpow.pop %v1897
        %v1899 = vsel %vm1678, %v1896, 0.0
        %1900 = vadd.xlane.f32.xlu0 %v1899
        %v1901 = vpop.xlane.xlu0 %1900
        %v1902 = vsel %vm1678, %v1898, 0.0
        %1903 = vadd.xlane.f32.xlu0 %v1902
        %v1904 = vpop.xlane.xlu0 %1903
        %v1905 = vrcp.pop %v1901
        %v1906 = vrcp.pop %v1904
        %v1907 = vmul.f32 %v1896, %v1905
        %v1908 = vmul.f32 %v1898, %v1906
        %v1909 = vpack.c.bf16 %v1907, %v1907
        %v1910 = vpack.c.bf16 %v1908, %v1908
        %1911 = vrot.lane.b32.xlu0 %v1497, 112
        %v1912 = vpop.permute.xlu0 %1911
        %v1914 = vsel %vm1678, %v1909, 0
        %v1917 = vsel %vm1706, %v1912, 0
        %1919 = vmatprep.subr.bf16.mxu0 0
        %1920 = vmatpush1.bf16.msra.mxu0 %v1917
        %1921 = vmatprep.subr.bf16.mxu0 0
        %1922 = vmatpush1.bf16.msra.mxu0 0
        %1923 = vmatprep.subr.bf16.mxu0 0
        %1924 = vmatpush1.bf16.msra.mxu0 0
        %1925 = vmatprep.subr.bf16.mxu0 0
        %1926 = vmatpush1.bf16.msra.mxu0 0
        %1927 = vmatprep.subr.bf16.mxu0 0
        %1928 = vmatpush1.bf16.msra.mxu0 0
        %1929 = vmatprep.subr.bf16.mxu0 0
        %1930 = vmatpush1.bf16.msra.mxu0 0
        %1931 = vmatprep.subr.bf16.mxu0 0
        %1932 = vmatpush1.bf16.msra.mxu0 0
        %1933 = vmatprep.subr.bf16.mxu0 0
        %1934 = vmatpush1.bf16.msra.mxu0 0
        %1935 = vmatprep.subr.bf16.mxu0 0
        %1936 = vmatpush1.bf16.msra.mxu0 0
        %1937 = vmatprep.subr.bf16.mxu0 0
        %1938 = vmatpush1.bf16.msra.mxu0 0
        %1939 = vmatprep.subr.bf16.mxu0 0
        %1940 = vmatpush1.bf16.msra.mxu0 0
        %1941 = vmatprep.subr.bf16.mxu0 0
        %1942 = vmatpush1.bf16.msra.mxu0 0
        %1943 = vmatprep.subr.bf16.mxu0 0
        %1944 = vmatpush1.bf16.msra.mxu0 0
        %1945 = vmatprep.subr.bf16.mxu0 0
        %1946 = vmatpush1.bf16.msra.mxu0 0
        %1947 = vmatprep.subr.bf16.mxu0 0
        %1948 = vmatpush1.bf16.msra.mxu0 0
        %1949 = vmatprep.subr.bf16.mxu0 0
        %1950 = vmatpush1.bf16.msra.mxu0 0
        %1951 = vmatprep.mubr.bf16.mxu0 0
        %1952 = vmatmul.mubr.bf16.gmra.mrb[0].mxu0 %v1914
        %v1953 = vpop.f32.mrb[0].mxu0
        %v1954 = vadd.f32 0.0, %v1953
        %v1955 = vpop.f32.mrb[0].mxu0
        %v1956 = vpop.f32.mrb[0].mxu0
        %v1957 = vpop.f32.mrb[0].mxu0
        %1958 = vdwg.mxu0
        %1959 = vrot.lane.b32.xlu0 %v1498, 112
        %v1960 = vpop.permute.xlu0 %1959
        %v1962 = vsel %vm1678, %v1910, 0
        %v1965 = vsel %vm1706, %v1960, 0
        %1967 = vmatprep.subr.bf16.mxu0 0
        %1968 = vmatpush1.bf16.msra.mxu0 %v1965
        %1969 = vmatprep.subr.bf16.mxu0 0
        %1970 = vmatpush1.bf16.msra.mxu0 0
        %1971 = vmatprep.subr.bf16.mxu0 0
        %1972 = vmatpush1.bf16.msra.mxu0 0
        %1973 = vmatprep.subr.bf16.mxu0 0
        %1974 = vmatpush1.bf16.msra.mxu0 0
        %1975 = vmatprep.subr.bf16.mxu0 0
        %1976 = vmatpush1.bf16.msra.mxu0 0
        %1977 = vmatprep.subr.bf16.mxu0 0
        %1978 = vmatpush1.bf16.msra.mxu0 0
        %1979 = vmatprep.subr.bf16.mxu0 0
        %1980 = vmatpush1.bf16.msra.mxu0 0
        %1981 = vmatprep.subr.bf16.mxu0 0
        %1982 = vmatpush1.bf16.msra.mxu0 0
        %1983 = vmatprep.subr.bf16.mxu0 0
        %1984 = vmatpush1.bf16.msra.mxu0 0
        %1985 = vmatprep.subr.bf16.mxu0 0
        %1986 = vmatpush1.bf16.msra.mxu0 0
        %1987 = vmatprep.subr.bf16.mxu0 0
        %1988 = vmatpush1.bf16.msra.mxu0 0
        %1989 = vmatprep.subr.bf16.mxu0 0
        %1990 = vmatpush1.bf16.msra.mxu0 0
        %1991 = vmatprep.subr.bf16.mxu0 0
        %1992 = vmatpush1.bf16.msra.mxu0 0
        %1993 = vmatprep.subr.bf16.mxu0 0
        %1994 = vmatpush1.bf16.msra.mxu0 0
        %1995 = vmatprep.subr.bf16.mxu0 0
        %1996 = vmatpush1.bf16.msra.mxu0 0
        %1997 = vmatprep.subr.bf16.mxu0 0
        %1998 = vmatpush1.bf16.msra.mxu0 0
        %1999 = vmatprep.mubr.bf16.mxu0 0
        %2000 = vmatmul.mubr.bf16.gmra.mrb[0].mxu0 %v1962
        %v2001 = vpop.f32.mrb[0].mxu0
        %v2002 = vadd.f32 0.0, %v2001
        %v2003 = vpop.f32.mrb[0].mxu0
        %v2004 = vpop.f32.mrb[0].mxu0
        %v2005 = vpop.f32.mrb[0].mxu0
        %2006 = vdwg.mxu0
        %v2007 = vpack.c.bf16 %v2002, %v1954
        %v2010 = vunpack.c.l.b16 %v1077
        %v2011 = vunpack.c.l.b16 %v1078
        %v2012 = vpack.c.b16 %v2011, %v2010
        %v2015 = vsel %vm1591, %v2007, 0
        %2017 = vmatprep.subr.bf16.mxu0 0
        %2018 = vmatpush1.bf16.msra.mxu0 %v2012
        %2019 = vmatprep.subr.bf16.mxu0 0
        %2020 = vmatpush1.bf16.msra.mxu0 0
        %2021 = vmatprep.subr.bf16.mxu0 0
        %2022 = vmatpush1.bf16.msra.mxu0 0
        %2023 = vmatprep.subr.bf16.mxu0 0
        %2024 = vmatpush1.bf16.msra.mxu0 0
        %2025 = vmatprep.subr.bf16.mxu0 0
        %2026 = vmatpush1.bf16.msra.mxu0 0
        %2027 = vmatprep.subr.bf16.mxu0 0
        %2028 = vmatpush1.bf16.msra.mxu0 0
        %2029 = vmatprep.subr.bf16.mxu0 0
        %2030 = vmatpush1.bf16.msra.mxu0 0
        %2031 = vmatprep.subr.bf16.mxu0 0
        %2032 = vmatpush1.bf16.msra.mxu0 0
        %2033 = vmatprep.subr.bf16.mxu0 0
        %2034 = vmatpush1.bf16.msra.mxu0 0
        %2035 = vmatprep.subr.bf16.mxu0 0
        %2036 = vmatpush1.bf16.msra.mxu0 0
        %2037 = vmatprep.subr.bf16.mxu0 0
        %2038 = vmatpush1.bf16.msra.mxu0 0
        %2039 = vmatprep.subr.bf16.mxu0 0
        %2040 = vmatpush1.bf16.msra.mxu0 0
        %2041 = vmatprep.subr.bf16.mxu0 0
        %2042 = vmatpush1.bf16.msra.mxu0 0
        %2043 = vmatprep.subr.bf16.mxu0 0
        %2044 = vmatpush1.bf16.msra.mxu0 0
        %2045 = vmatprep.subr.bf16.mxu0 0
        %2046 = vmatpush1.bf16.msra.mxu0 0
        %2047 = vmatprep.subr.bf16.mxu0 0
        %2048 = vmatpush1.bf16.msra.mxu0 0
        %2049 = vmatprep.mubr.bf16.mxu0 0
        %2050 = vmatmul.mubr.bf16.gmra.mrb[0].mxu0 %v2015
        %v2051 = vpop.f32.mrb[0].mxu0
        %v2052 = vadd.f32 0.0, %v2051
        %v2053 = vpop.f32.mrb[0].mxu0
        %v2054 = vpop.f32.mrb[0].mxu0
        %v2055 = vadd.f32 0.0, %v2054
        %v2056 = vpop.f32.mrb[0].mxu0
        %2057 = vdwg.mxu0
        %v2060 = vunpack.c.l.b16 %v1075
        %v2061 = vunpack.c.l.b16 %v1076
        %v2062 = vpack.c.b16 %v2061, %v2060
        %v2065 = vsel %vm1591, %v1796, 0
        %2067 = vmatprep.subr.bf16.mxu0 0
        %2068 = vmatpush1.bf16.msra.mxu0 %v2062
        %2069 = vmatprep.subr.bf16.mxu0 0
        %2070 = vmatpush1.bf16.msra.mxu0 0
        %2071 = vmatprep.subr.bf16.mxu0 0
        %2072 = vmatpush1.bf16.msra.mxu0 0
        %2073 = vmatprep.subr.bf16.mxu0 0
        %2074 = vmatpush1.bf16.msra.mxu0 0
        %2075 = vmatprep.subr.bf16.mxu0 0
        %2076 = vmatpush1.bf16.msra.mxu0 0
        %2077 = vmatprep.subr.bf16.mxu0 0
        %2078 = vmatpush1.bf16.msra.mxu0 0
        %2079 = vmatprep.subr.bf16.mxu0 0
        %2080 = vmatpush1.bf16.msra.mxu0 0
        %2081 = vmatprep.subr.bf16.mxu0 0
        %2082 = vmatpush1.bf16.msra.mxu0 0
        %2083 = vmatprep.subr.bf16.mxu0 0
        %2084 = vmatpush1.bf16.msra.mxu0 0
        %2085 = vmatprep.subr.bf16.mxu0 0
        %2086 = vmatpush1.bf16.msra.mxu0 0
        %2087 = vmatprep.subr.bf16.mxu0 0
        %2088 = vmatpush1.bf16.msra.mxu0 0
        %2089 = vmatprep.subr.bf16.mxu0 0
        %2090 = vmatpush1.bf16.msra.mxu0 0
        %2091 = vmatprep.subr.bf16.mxu0 0
        %2092 = vmatpush1.bf16.msra.mxu0 0
        %2093 = vmatprep.subr.bf16.mxu0 0
        %2094 = vmatpush1.bf16.msra.mxu0 0
        %2095 = vmatprep.subr.bf16.mxu0 0
        %2096 = vmatpush1.bf16.msra.mxu0 0
        %2097 = vmatprep.subr.bf16.mxu0 0
        %2098 = vmatpush1.bf16.msra.mxu0 0
        %2099 = vmatprep.mubr.bf16.mxu0 0
        %2100 = vmatmul.mubr.bf16.gmra.mrb[0].mxu0 %v2065
        %v2101 = vpop.f32.mrb[0].mxu0
        %v2102 = vadd.f32 %v2052, %v2101
        %v2103 = vpop.f32.mrb[0].mxu0
        %v2104 = vpop.f32.mrb[0].mxu0
        %v2105 = vadd.f32 %v2055, %v2104
        %v2106 = vpop.f32.mrb[0].mxu0
        %2107 = vdwg.mxu0
        %2108 = vrot.lane.b32.xlu0 %v1491, 96
        %v2109 = vpop.permute.xlu0 %2108
        %v2111 = vsel %vm1591, %v2109, 0
        %2113 = vmatprep.subr.bf16.mxu0 0
        %2114 = vmatpush1.bf16.msra.mxu0 %v1565
        %2115 = vmatprep.subr.bf16.mxu0 0
        %2116 = vmatpush1.bf16.msra.mxu0 0
        %2117 = vmatprep.subr.bf16.mxu0 0
        %2118 = vmatpush1.bf16.msra.mxu0 0
        %2119 = vmatprep.subr.bf16.mxu0 0
        %2120 = vmatpush1.bf16.msra.mxu0 0
        %2121 = vmatprep.subr.bf16.mxu0 0
        %2122 = vmatpush1.bf16.msra.mxu0 0
        %2123 = vmatprep.subr.bf16.mxu0 0
        %2124 = vmatpush1.bf16.msra.mxu0 0
        %2125 = vmatprep.subr.bf16.mxu0 0
        %2126 = vmatpush1.bf16.msra.mxu0 0
        %2127 = vmatprep.subr.bf16.mxu0 0
        %2128 = vmatpush1.bf16.msra.mxu0 0
        %2129 = vmatprep.subr.bf16.mxu0 0
        %2130 = vmatpush1.bf16.msra.mxu0 0
        %2131 = vmatprep.subr.bf16.mxu0 0
        %2132 = vmatpush1.bf16.msra.mxu0 0
        %2133 = vmatprep.subr.bf16.mxu0 0
        %2134 = vmatpush1.bf16.msra.mxu0 0
        %2135 = vmatprep.subr.bf16.mxu0 0
        %2136 = vmatpush1.bf16.msra.mxu0 0
        %2137 = vmatprep.subr.bf16.mxu0 0
        %2138 = vmatpush1.bf16.msra.mxu0 0
        %2139 = vmatprep.subr.bf16.mxu0 0
        %2140 = vmatpush1.bf16.msra.mxu0 0
        %2141 = vmatprep.subr.bf16.mxu0 0
        %2142 = vmatpush1.bf16.msra.mxu0 0
        %2143 = vmatprep.subr.bf16.mxu0 0
        %2144 = vmatpush1.bf16.msra.mxu0 0
        %2145 = vmatprep.mubr.bf16.mxu0 0
        %2146 = vmatmul.mubr.bf16.gmra.mrb[0].mxu0 %v2111
        %v2147 = vpop.f32.mrb[0].mxu0
        %v2148 = vadd.f32 %v1584, %v2147
        %v2149 = vpop.f32.mrb[0].mxu0
        %v2150 = vpop.f32.mrb[0].mxu0
        %v2151 = vpop.f32.mrb[0].mxu0
        %2152 = vdwg.mxu0
        %2153 = vrot.lane.b32.xlu0 %v1492, 96
        %v2154 = vpop.permute.xlu0 %2153
        %v2156 = vsel %vm1591, %v2154, 0
        %2158 = vmatprep.subr.bf16.mxu0 0
        %2159 = vmatpush1.bf16.msra.mxu0 %v1573
        %2160 = vmatprep.subr.bf16.mxu0 0
        %2161 = vmatpush1.bf16.msra.mxu0 0
        %2162 = vmatprep.subr.bf16.mxu0 0
        %2163 = vmatpush1.bf16.msra.mxu0 0
        %2164 = vmatprep.subr.bf16.mxu0 0
        %2165 = vmatpush1.bf16.msra.mxu0 0
        %2166 = vmatprep.subr.bf16.mxu0 0
        %2167 = vmatpush1.bf16.msra.mxu0 0
        %2168 = vmatprep.subr.bf16.mxu0 0
        %2169 = vmatpush1.bf16.msra.mxu0 0
        %2170 = vmatprep.subr.bf16.mxu0 0
        %2171 = vmatpush1.bf16.msra.mxu0 0
        %2172 = vmatprep.subr.bf16.mxu0 0
        %2173 = vmatpush1.bf16.msra.mxu0 0
        %2174 = vmatprep.subr.bf16.mxu0 0
        %2175 = vmatpush1.bf16.msra.mxu0 0
        %2176 = vmatprep.subr.bf16.mxu0 0
        %2177 = vmatpush1.bf16.msra.mxu0 0
        %2178 = vmatprep.subr.bf16.mxu0 0
        %2179 = vmatpush1.bf16.msra.mxu0 0
        %2180 = vmatprep.subr.bf16.mxu0 0
        %2181 = vmatpush1.bf16.msra.mxu0 0
        %2182 = vmatprep.subr.bf16.mxu0 0
        %2183 = vmatpush1.bf16.msra.mxu0 0
        %2184 = vmatprep.subr.bf16.mxu0 0
        %2185 = vmatpush1.bf16.msra.mxu0 0
        %2186 = vmatprep.subr.bf16.mxu0 0
        %2187 = vmatpush1.bf16.msra.mxu0 0
        %2188 = vmatprep.subr.bf16.mxu0 0
        %2189 = vmatpush1.bf16.msra.mxu0 0
        %2190 = vmatprep.mubr.bf16.mxu0 0
        %2191 = vmatmul.mubr.bf16.gmra.mrb[0].mxu0 %v2156
        %v2192 = vpop.f32.mrb[0].mxu0
        %v2193 = vadd.f32 %v1588, %v2192
        %v2194 = vpop.f32.mrb[0].mxu0
        %v2195 = vpop.f32.mrb[0].mxu0
        %v2196 = vpop.f32.mrb[0].mxu0
        %2197 = vdwg.mxu0
        %v2198 = vsel %vm1678, %v2148, -inf
        %2199 = vmax.xlane.f32.xlu0 %v2198
        %v2200 = vpop.xlane.xlu0 %2199
        %v2201 = vsel %vm1678, %v2193, -inf
        %2202 = vmax.xlane.f32.xlu0 %v2201
        %v2203 = vpop.xlane.xlu0 %2202
        %v2204 = vsub.f32 %v2148, %v2200
        %v2205 = vsub.f32 %v2193, %v2203
        %v2206 = vmul.f32 %v2204, 1.442695
        %v2207 = vpow.pop %v2206
        %v2208 = vmul.f32 %v2205, 1.442695
        %v2209 = vpow.pop %v2208
        %v2210 = vsel %vm1678, %v2207, 0.0
        %2211 = vadd.xlane.f32.xlu0 %v2210
        %v2212 = vpop.xlane.xlu0 %2211
        %v2213 = vsel %vm1678, %v2209, 0.0
        %2214 = vadd.xlane.f32.xlu0 %v2213
        %v2215 = vpop.xlane.xlu0 %2214
        %v2216 = vrcp.pop %v2212
        %v2217 = vrcp.pop %v2215
        %v2218 = vmul.f32 %v2207, %v2216
        %v2219 = vmul.f32 %v2209, %v2217
        %v2220 = vpack.c.bf16 %v2218, %v2218
        %v2221 = vpack.c.bf16 %v2219, %v2219
        %2222 = vrot.lane.b32.xlu0 %v1497, 96
        %v2223 = vpop.permute.xlu0 %2222
        %v2225 = vsel %vm1678, %v2220, 0
        %v2228 = vsel %vm1706, %v2223, 0
        %2230 = vmatprep.subr.bf16.mxu0 0
        %2231 = vmatpush1.bf16.msra.mxu0 %v2228
        %2232 = vmatprep.subr.bf16.mxu0 0
        %2233 = vmatpush1.bf16.msra.mxu0 0
        %2234 = vmatprep.subr.bf16.mxu0 0
        %2235 = vmatpush1.bf16.msra.mxu0 0
        %2236 = vmatprep.subr.bf16.mxu0 0
        %2237 = vmatpush1.bf16.msra.mxu0 0
        %2238 = vmatprep.subr.bf16.mxu0 0
        %2239 = vmatpush1.bf16.msra.mxu0 0
        %2240 = vmatprep.subr.bf16.mxu0 0
        %2241 = vmatpush1.bf16.msra.mxu0 0
        %2242 = vmatprep.subr.bf16.mxu0 0
        %2243 = vmatpush1.bf16.msra.mxu0 0
        %2244 = vmatprep.subr.bf16.mxu0 0
        %2245 = vmatpush1.bf16.msra.mxu0 0
        %2246 = vmatprep.subr.bf16.mxu0 0
        %2247 = vmatpush1.bf16.msra.mxu0 0
        %2248 = vmatprep.subr.bf16.mxu0 0
        %2249 = vmatpush1.bf16.msra.mxu0 0
        %2250 = vmatprep.subr.bf16.mxu0 0
        %2251 = vmatpush1.bf16.msra.mxu0 0
        %2252 = vmatprep.subr.bf16.mxu0 0
        %2253 = vmatpush1.bf16.msra.mxu0 0
        %2254 = vmatprep.subr.bf16.mxu0 0
        %2255 = vmatpush1.bf16.msra.mxu0 0
        %2256 = vmatprep.subr.bf16.mxu0 0
        %2257 = vmatpush1.bf16.msra.mxu0 0
        %2258 = vmatprep.subr.bf16.mxu0 0
        %2259 = vmatpush1.bf16.msra.mxu0 0
        %2260 = vmatprep.subr.bf16.mxu0 0
        %2261 = vmatpush1.bf16.msra.mxu0 0
        %2262 = vmatprep.mubr.bf16.mxu0 0
        %2263 = vmatmul.mubr.bf16.gmra.mrb[0].mxu0 %v2225
        %v2264 = vpop.f32.mrb[0].mxu0
        %v2265 = vadd.f32 0.0, %v2264
        %v2266 = vpop.f32.mrb[0].mxu0
        %v2267 = vpop.f32.mrb[0].mxu0
        %v2268 = vpop.f32.mrb[0].mxu0
        %2269 = vdwg.mxu0
        %2270 = vrot.lane.b32.xlu0 %v1498, 96
        %v2271 = vpop.permute.xlu0 %2270
        %v2273 = vsel %vm1678, %v2221, 0
        %v2276 = vsel %vm1706, %v2271, 0
        %2278 = vmatprep.subr.bf16.mxu0 0
        %2279 = vmatpush1.bf16.msra.mxu0 %v2276
        %2280 = vmatprep.subr.bf16.mxu0 0
        %2281 = vmatpush1.bf16.msra.mxu0 0
        %2282 = vmatprep.subr.bf16.mxu0 0
        %2283 = vmatpush1.bf16.msra.mxu0 0
        %2284 = vmatprep.subr.bf16.mxu0 0
        %2285 = vmatpush1.bf16.msra.mxu0 0
        %2286 = vmatprep.subr.bf16.mxu0 0
        %2287 = vmatpush1.bf16.msra.mxu0 0
        %2288 = vmatprep.subr.bf16.mxu0 0
        %2289 = vmatpush1.bf16.msra.mxu0 0
        %2290 = vmatprep.subr.bf16.mxu0 0
        %2291 = vmatpush1.bf16.msra.mxu0 0
        %2292 = vmatprep.subr.bf16.mxu0 0
        %2293 = vmatpush1.bf16.msra.mxu0 0
        %2294 = vmatprep.subr.bf16.mxu0 0
        %2295 = vmatpush1.bf16.msra.mxu0 0
        %2296 = vmatprep.subr.bf16.mxu0 0
        %2297 = vmatpush1.bf16.msra.mxu0 0
        %2298 = vmatprep.subr.bf16.mxu0 0
        %2299 = vmatpush1.bf16.msra.mxu0 0
        %2300 = vmatprep.subr.bf16.mxu0 0
        %2301 = vmatpush1.bf16.msra.mxu0 0
        %2302 = vmatprep.subr.bf16.mxu0 0
        %2303 = vmatpush1.bf16.msra.mxu0 0
        %2304 = vmatprep.subr.bf16.mxu0 0
        %2305 = vmatpush1.bf16.msra.mxu0 0
        %2306 = vmatprep.subr.bf16.mxu0 0
        %2307 = vmatpush1.bf16.msra.mxu0 0
        %2308 = vmatprep.subr.bf16.mxu0 0
        %2309 = vmatpush1.bf16.msra.mxu0 0
        %2310 = vmatprep.mubr.bf16.mxu0 0
        %2311 = vmatmul.mubr.bf16.gmra.mrb[0].mxu0 %v2273
        %v2312 = vpop.f32.mrb[0].mxu0
        %v2313 = vadd.f32 0.0, %v2312
        %v2314 = vpop.f32.mrb[0].mxu0
        %v2315 = vpop.f32.mrb[0].mxu0
        %v2316 = vpop.f32.mrb[0].mxu0
        %2317 = vdwg.mxu0
        %v2318 = vpack.c.bf16 %v2313, %v2265
        %v2321 = vunpack.c.l.b16 %v1079
        %v2322 = vunpack.c.l.b16 %v1080
        %v2323 = vpack.c.b16 %v2322, %v2321
        %v2326 = vsel %vm1591, %v2318, 0
        %2328 = vmatprep.subr.bf16.mxu0 0
        %2329 = vmatpush1.bf16.msra.mxu0 %v2323
        %2330 = vmatprep.subr.bf16.mxu0 0
        %2331 = vmatpush1.bf16.msra.mxu0 0
        %2332 = vmatprep.subr.bf16.mxu0 0
        %2333 = vmatpush1.bf16.msra.mxu0 0
        %2334 = vmatprep.subr.bf16.mxu0 0
        %2335 = vmatpush1.bf16.msra.mxu0 0
        %2336 = vmatprep.subr.bf16.mxu0 0
        %2337 = vmatpush1.bf16.msra.mxu0 0
        %2338 = vmatprep.subr.bf16.mxu0 0
        %2339 = vmatpush1.bf16.msra.mxu0 0
        %2340 = vmatprep.subr.bf16.mxu0 0
        %2341 = vmatpush1.bf16.msra.mxu0 0
        %2342 = vmatprep.subr.bf16.mxu0 0
        %2343 = vmatpush1.bf16.msra.mxu0 0
        %2344 = vmatprep.subr.bf16.mxu0 0
        %2345 = vmatpush1.bf16.msra.mxu0 0
        %2346 = vmatprep.subr.bf16.mxu0 0
        %2347 = vmatpush1.bf16.msra.mxu0 0
        %2348 = vmatprep.subr.bf16.mxu0 0
        %2349 = vmatpush1.bf16.msra.mxu0 0
        %2350 = vmatprep.subr.bf16.mxu0 0
        %2351 = vmatpush1.bf16.msra.mxu0 0
        %2352 = vmatprep.subr.bf16.mxu0 0
        %2353 = vmatpush1.bf16.msra.mxu0 0
        %2354 = vmatprep.subr.bf16.mxu0 0
        %2355 = vmatpush1.bf16.msra.mxu0 0
        %2356 = vmatprep.subr.bf16.mxu0 0
        %2357 = vmatpush1.bf16.msra.mxu0 0
        %2358 = vmatprep.subr.bf16.mxu0 0
        %2359 = vmatpush1.bf16.msra.mxu0 0
        %2360 = vmatprep.mubr.bf16.mxu0 0
        %2361 = vmatmul.mubr.bf16.gmra.mrb[0].mxu0 %v2326
        %v2362 = vpop.f32.mrb[0].mxu0
        %v2363 = vadd.f32 0.0, %v2362
        %v2364 = vpop.f32.mrb[0].mxu0
        %v2365 = vpop.f32.mrb[0].mxu0
        %v2366 = vadd.f32 0.0, %v2365
        %v2367 = vpop.f32.mrb[0].mxu0
        %2368 = vdwg.mxu0
        %v2369 = vadd.f32 %v2102, %v2363
        %v2370 = vadd.f32 %v2105, %v2366
        %2371 = vrot.lane.b32.xlu0 %v1491, 80
        %v2372 = vpop.permute.xlu0 %2371
        %v2374 = vsel %vm1591, %v2372, 0
        %2376 = vmatprep.subr.bf16.mxu0 0
        %2377 = vmatpush1.bf16.msra.mxu0 %v1566
        %2378 = vmatprep.subr.bf16.mxu0 0
        %2379 = vmatpush1.bf16.msra.mxu0 0
        %2380 = vmatprep.subr.bf16.mxu0 0
        %2381 = vmatpush1.bf16.msra.mxu0 0
        %2382 = vmatprep.subr.bf16.mxu0 0
        %2383 = vmatpush1.bf16.msra.mxu0 0
        %2384 = vmatprep.subr.bf16.mxu0 0
        %2385 = vmatpush1.bf16.msra.mxu0 0
        %2386 = vmatprep.subr.bf16.mxu0 0
        %2387 = vmatpush1.bf16.msra.mxu0 0
        %2388 = vmatprep.subr.bf16.mxu0 0
        %2389 = vmatpush1.bf16.msra.mxu0 0
        %2390 = vmatprep.subr.bf16.mxu0 0
        %2391 = vmatpush1.bf16.msra.mxu0 0
        %2392 = vmatprep.subr.bf16.mxu0 0
        %2393 = vmatpush1.bf16.msra.mxu0 0
        %2394 = vmatprep.subr.bf16.mxu0 0
        %2395 = vmatpush1.bf16.msra.mxu0 0
        %2396 = vmatprep.subr.bf16.mxu0 0
        %2397 = vmatpush1.bf16.msra.mxu0 0
        %2398 = vmatprep.subr.bf16.mxu0 0
        %2399 = vmatpush1.bf16.msra.mxu0 0
        %2400 = vmatprep.subr.bf16.mxu0 0
        %2401 = vmatpush1.bf16.msra.mxu0 0
        %2402 = vmatprep.subr.bf16.mxu0 0
        %2403 = vmatpush1.bf16.msra.mxu0 0
        %2404 = vmatprep.subr.bf16.mxu0 0
        %2405 = vmatpush1.bf16.msra.mxu0 0
        %2406 = vmatprep.subr.bf16.mxu0 0
        %2407 = vmatpush1.bf16.msra.mxu0 0
        %2408 = vmatprep.mubr.bf16.mxu0 0
        %2409 = vmatmul.mubr.bf16.gmra.mrb[0].mxu0 %v2374
        %v2410 = vpop.f32.mrb[0].mxu0
        %v2411 = vadd.f32 %v1584, %v2410
        %v2412 = vpop.f32.mrb[0].mxu0
        %v2413 = vpop.f32.mrb[0].mxu0
        %v2414 = vpop.f32.mrb[0].mxu0
        %2415 = vdwg.mxu0
        %2416 = vrot.lane.b32.xlu0 %v1492, 80
        %v2417 = vpop.permute.xlu0 %2416
        %v2419 = vsel %vm1591, %v2417, 0
        %2421 = vmatprep.subr.bf16.mxu0 0
        %2422 = vmatpush1.bf16.msra.mxu0 %v1574
        %2423 = vmatprep.subr.bf16.mxu0 0
        %2424 = vmatpush1.bf16.msra.mxu0 0
        %2425 = vmatprep.subr.bf16.mxu0 0
        %2426 = vmatpush1.bf16.msra.mxu0 0
        %2427 = vmatprep.subr.bf16.mxu0 0
        %2428 = vmatpush1.bf16.msra.mxu0 0
        %2429 = vmatprep.subr.bf16.mxu0 0
        %2430 = vmatpush1.bf16.msra.mxu0 0
        %2431 = vmatprep.subr.bf16.mxu0 0
        %2432 = vmatpush1.bf16.msra.mxu0 0
        %2433 = vmatprep.subr.bf16.mxu0 0
        %2434 = vmatpush1.bf16.msra.mxu0 0
        %2435 = vmatprep.subr.bf16.mxu0 0
        %2436 = vmatpush1.bf16.msra.mxu0 0
        %2437 = vmatprep.subr.bf16.mxu0 0
        %2438 = vmatpush1.bf16.msra.mxu0 0
        %2439 = vmatprep.subr.bf16.mxu0 0
        %2440 = vmatpush1.bf16.msra.mxu0 0
        %2441 = vmatprep.subr.bf16.mxu0 0
        %2442 = vmatpush1.bf16.msra.mxu0 0
        %2443 = vmatprep.subr.bf16.mxu0 0
        %2444 = vmatpush1.bf16.msra.mxu0 0
        %2445 = vmatprep.subr.bf16.mxu0 0
        %2446 = vmatpush1.bf16.msra.mxu0 0
        %2447 = vmatprep.subr.bf16.mxu0 0
        %2448 = vmatpush1.bf16.msra.mxu0 0
        %2449 = vmatprep.subr.bf16.mxu0 0
        %2450 = vmatpush1.bf16.msra.mxu0 0
        %2451 = vmatprep.subr.bf16.mxu0 0
        %2452 = vmatpush1.bf16.msra.mxu0 0
        %2453 = vmatprep.mubr.bf16.mxu0 0
        %2454 = vmatmul.mubr.bf16.gmra.mrb[0].mxu0 %v2419
        %v2455 = vpop.f32.mrb[0].mxu0
        %v2456 = vadd.f32 %v1588, %v2455
        %v2457 = vpop.f32.mrb[0].mxu0
        %v2458 = vpop.f32.mrb[0].mxu0
        %v2459 = vpop.f32.mrb[0].mxu0
        %2460 = vdwg.mxu0
        %v2461 = vsel %vm1678, %v2411, -inf
        %2462 = vmax.xlane.f32.xlu0 %v2461
        %v2463 = vpop.xlane.xlu0 %2462
        %v2464 = vsel %vm1678, %v2456, -inf
        %2465 = vmax.xlane.f32.xlu0 %v2464
        %v2466 = vpop.xlane.xlu0 %2465
        %v2467 = vsub.f32 %v2411, %v2463
        %v2468 = vsub.f32 %v2456, %v2466
        %v2469 = vmul.f32 %v2467, 1.442695
        %v2470 = vpow.pop %v2469
        %v2471 = vmul.f32 %v2468, 1.442695
        %v2472 = vpow.pop %v2471
        %v2473 = vsel %vm1678, %v2470, 0.0
        %2474 = vadd.xlane.f32.xlu0 %v2473
        %v2475 = vpop.xlane.xlu0 %2474
        %v2476 = vsel %vm1678, %v2472, 0.0
        %2477 = vadd.xlane.f32.xlu0 %v2476
        %v2478 = vpop.xlane.xlu0 %2477
        %v2479 = vrcp.pop %v2475
        %v2480 = vrcp.pop %v2478
        %v2481 = vmul.f32 %v2470, %v2479
        %v2482 = vmul.f32 %v2472, %v2480
        %v2483 = vpack.c.bf16 %v2481, %v2481
        %v2484 = vpack.c.bf16 %v2482, %v2482
        %2485 = vrot.lane.b32.xlu0 %v1497, 80
        %v2486 = vpop.permute.xlu0 %2485
        %v2488 = vsel %vm1678, %v2483, 0
        %v2491 = vsel %vm1706, %v2486, 0
        %2493 = vmatprep.subr.bf16.mxu0 0
        %2494 = vmatpush1.bf16.msra.mxu0 %v2491
        %2495 = vmatprep.subr.bf16.mxu0 0
        %2496 = vmatpush1.bf16.msra.mxu0 0
        %2497 = vmatprep.subr.bf16.mxu0 0
        %2498 = vmatpush1.bf16.msra.mxu0 0
        %2499 = vmatprep.subr.bf16.mxu0 0
        %2500 = vmatpush1.bf16.msra.mxu0 0
        %2501 = vmatprep.subr.bf16.mxu0 0
        %2502 = vmatpush1.bf16.msra.mxu0 0
        %2503 = vmatprep.subr.bf16.mxu0 0
        %2504 = vmatpush1.bf16.msra.mxu0 0
        %2505 = vmatprep.subr.bf16.mxu0 0
        %2506 = vmatpush1.bf16.msra.mxu0 0
        %2507 = vmatprep.subr.bf16.mxu0 0
        %2508 = vmatpush1.bf16.msra.mxu0 0
        %2509 = vmatprep.subr.bf16.mxu0 0
        %2510 = vmatpush1.bf16.msra.mxu0 0
        %2511 = vmatprep.subr.bf16.mxu0 0
        %2512 = vmatpush1.bf16.msra.mxu0 0
        %2513 = vmatprep.subr.bf16.mxu0 0
        %2514 = vmatpush1.bf16.msra.mxu0 0
        %2515 = vmatprep.subr.bf16.mxu0 0
        %2516 = vmatpush1.bf16.msra.mxu0 0
        %2517 = vmatprep.subr.bf16.mxu0 0
        %2518 = vmatpush1.bf16.msra.mxu0 0
        %2519 = vmatprep.subr.bf16.mxu0 0
        %2520 = vmatpush1.bf16.msra.mxu0 0
        %2521 = vmatprep.subr.bf16.mxu0 0
        %2522 = vmatpush1.bf16.msra.mxu0 0
        %2523 = vmatprep.subr.bf16.mxu0 0
        %2524 = vmatpush1.bf16.msra.mxu0 0
        %2525 = vmatprep.mubr.bf16.mxu0 0
        %2526 = vmatmul.mubr.bf16.gmra.mrb[0].mxu0 %v2488
        %v2527 = vpop.f32.mrb[0].mxu0
        %v2528 = vadd.f32 0.0, %v2527
        %v2529 = vpop.f32.mrb[0].mxu0
        %v2530 = vpop.f32.mrb[0].mxu0
        %v2531 = vpop.f32.mrb[0].mxu0
        %2532 = vdwg.mxu0
        %2533 = vrot.lane.b32.xlu0 %v1498, 80
        %v2534 = vpop.permute.xlu0 %2533
        %v2536 = vsel %vm1678, %v2484, 0
        %v2539 = vsel %vm1706, %v2534, 0
        %2541 = vmatprep.subr.bf16.mxu0 0
        %2542 = vmatpush1.bf16.msra.mxu0 %v2539
        %2543 = vmatprep.subr.bf16.mxu0 0
        %2544 = vmatpush1.bf16.msra.mxu0 0
        %2545 = vmatprep.subr.bf16.mxu0 0
        %2546 = vmatpush1.bf16.msra.mxu0 0
        %2547 = vmatprep.subr.bf16.mxu0 0
        %2548 = vmatpush1.bf16.msra.mxu0 0
        %2549 = vmatprep.subr.bf16.mxu0 0
        %2550 = vmatpush1.bf16.msra.mxu0 0
        %2551 = vmatprep.subr.bf16.mxu0 0
        %2552 = vmatpush1.bf16.msra.mxu0 0
        %2553 = vmatprep.subr.bf16.mxu0 0
        %2554 = vmatpush1.bf16.msra.mxu0 0
        %2555 = vmatprep.subr.bf16.mxu0 0
        %2556 = vmatpush1.bf16.msra.mxu0 0
        %2557 = vmatprep.subr.bf16.mxu0 0
        %2558 = vmatpush1.bf16.msra.mxu0 0
        %2559 = vmatprep.subr.bf16.mxu0 0
        %2560 = vmatpush1.bf16.msra.mxu0 0
        %2561 = vmatprep.subr.bf16.mxu0 0
        %2562 = vmatpush1.bf16.msra.mxu0 0
        %2563 = vmatprep.subr.bf16.mxu0 0
        %2564 = vmatpush1.bf16.msra.mxu0 0
        %2565 = vmatprep.subr.bf16.mxu0 0
        %2566 = vmatpush1.bf16.msra.mxu0 0
        %2567 = vmatprep.subr.bf16.mxu0 0
        %2568 = vmatpush1.bf16.msra.mxu0 0
        %2569 = vmatprep.subr.bf16.mxu0 0
        %2570 = vmatpush1.bf16.msra.mxu0 0
        %2571 = vmatprep.subr.bf16.mxu0 0
        %2572 = vmatpush1.bf16.msra.mxu0 0
        %2573 = vmatprep.mubr.bf16.mxu0 0
        %2574 = vmatmul.mubr.bf16.gmra.mrb[0].mxu0 %v2536
        %v2575 = vpop.f32.mrb[0].mxu0
        %v2576 = vadd.f32 0.0, %v2575
        %v2577 = vpop.f32.mrb[0].mxu0
        %v2578 = vpop.f32.mrb[0].mxu0
        %v2579 = vpop.f32.mrb[0].mxu0
        %2580 = vdwg.mxu0
        %v2581 = vpack.c.bf16 %v2576, %v2528
        %v2584 = vunpack.c.l.b16 %v1081
        %v2585 = vunpack.c.l.b16 %v1082
        %v2586 = vpack.c.b16 %v2585, %v2584
        %v2589 = vsel %vm1591, %v2581, 0
        %2591 = vmatprep.subr.bf16.mxu0 0
        %2592 = vmatpush1.bf16.msra.mxu0 %v2586
        %2593 = vmatprep.subr.bf16.mxu0 0
        %2594 = vmatpush1.bf16.msra.mxu0 0
        %2595 = vmatprep.subr.bf16.mxu0 0
        %2596 = vmatpush1.bf16.msra.mxu0 0
        %2597 = vmatprep.subr.bf16.mxu0 0
        %2598 = vmatpush1.bf16.msra.mxu0 0
        %2599 = vmatprep.subr.bf16.mxu0 0
        %2600 = vmatpush1.bf16.msra.mxu0 0
        %2601 = vmatprep.subr.bf16.mxu0 0
        %2602 = vmatpush1.bf16.msra.mxu0 0
        %2603 = vmatprep.subr.bf16.mxu0 0
        %2604 = vmatpush1.bf16.msra.mxu0 0
        %2605 = vmatprep.subr.bf16.mxu0 0
        %2606 = vmatpush1.bf16.msra.mxu0 0
        %2607 = vmatprep.subr.bf16.mxu0 0
        %2608 = vmatpush1.bf16.msra.mxu0 0
        %2609 = vmatprep.subr.bf16.mxu0 0
        %2610 = vmatpush1.bf16.msra.mxu0 0
        %2611 = vmatprep.subr.bf16.mxu0 0
        %2612 = vmatpush1.bf16.msra.mxu0 0
        %2613 = vmatprep.subr.bf16.mxu0 0
        %2614 = vmatpush1.bf16.msra.mxu0 0
        %2615 = vmatprep.subr.bf16.mxu0 0
        %2616 = vmatpush1.bf16.msra.mxu0 0
        %2617 = vmatprep.subr.bf16.mxu0 0
        %2618 = vmatpush1.bf16.msra.mxu0 0
        %2619 = vmatprep.subr.bf16.mxu0 0
        %2620 = vmatpush1.bf16.msra.mxu0 0
        %2621 = vmatprep.subr.bf16.mxu0 0
        %2622 = vmatpush1.bf16.msra.mxu0 0
        %2623 = vmatprep.mubr.bf16.mxu0 0
        %2624 = vmatmul.mubr.bf16.gmra.mrb[0].mxu0 %v2589
        %v2625 = vpop.f32.mrb[0].mxu0
        %v2626 = vadd.f32 0.0, %v2625
        %v2627 = vpop.f32.mrb[0].mxu0
        %v2628 = vpop.f32.mrb[0].mxu0
        %v2629 = vadd.f32 0.0, %v2628
        %v2630 = vpop.f32.mrb[0].mxu0
        %2631 = vdwg.mxu0
        %v2632 = vadd.f32 %v2369, %v2626
        %v2633 = vadd.f32 %v2370, %v2629
        %2634 = vrot.lane.b32.xlu0 %v1491, 64
        %v2635 = vpop.permute.xlu0 %2634
        %v2637 = vsel %vm1591, %v2635, 0
        %2639 = vmatprep.subr.bf16.mxu0 0
        %2640 = vmatpush1.bf16.msra.mxu0 %v1567
        %2641 = vmatprep.subr.bf16.mxu0 0
        %2642 = vmatpush1.bf16.msra.mxu0 0
        %2643 = vmatprep.subr.bf16.mxu0 0
        %2644 = vmatpush1.bf16.msra.mxu0 0
        %2645 = vmatprep.subr.bf16.mxu0 0
        %2646 = vmatpush1.bf16.msra.mxu0 0
        %2647 = vmatprep.subr.bf16.mxu0 0
        %2648 = vmatpush1.bf16.msra.mxu0 0
        %2649 = vmatprep.subr.bf16.mxu0 0
        %2650 = vmatpush1.bf16.msra.mxu0 0
        %2651 = vmatprep.subr.bf16.mxu0 0
        %2652 = vmatpush1.bf16.msra.mxu0 0
        %2653 = vmatprep.subr.bf16.mxu0 0
        %2654 = vmatpush1.bf16.msra.mxu0 0
        %2655 = vmatprep.subr.bf16.mxu0 0
        %2656 = vmatpush1.bf16.msra.mxu0 0
        %2657 = vmatprep.subr.bf16.mxu0 0
        %2658 = vmatpush1.bf16.msra.mxu0 0
        %2659 = vmatprep.subr.bf16.mxu0 0
        %2660 = vmatpush1.bf16.msra.mxu0 0
        %2661 = vmatprep.subr.bf16.mxu0 0
        %2662 = vmatpush1.bf16.msra.mxu0 0
        %2663 = vmatprep.subr.bf16.mxu0 0
        %2664 = vmatpush1.bf16.msra.mxu0 0
        %2665 = vmatprep.subr.bf16.mxu0 0
        %2666 = vmatpush1.bf16.msra.mxu0 0
        %2667 = vmatprep.subr.bf16.mxu0 0
        %2668 = vmatpush1.bf16.msra.mxu0 0
        %2669 = vmatprep.subr.bf16.mxu0 0
        %2670 = vmatpush1.bf16.msra.mxu0 0
        %2671 = vmatprep.mubr.bf16.mxu0 0
        %2672 = vmatmul.mubr.bf16.gmra.mrb[0].mxu0 %v2637
        %v2673 = vpop.f32.mrb[0].mxu0
        %v2674 = vadd.f32 %v1584, %v2673
        %v2675 = vpop.f32.mrb[0].mxu0
        %v2676 = vpop.f32.mrb[0].mxu0
        %v2677 = vpop.f32.mrb[0].mxu0
        %2678 = vdwg.mxu0
        %2679 = vrot.lane.b32.xlu0 %v1492, 64
        %v2680 = vpop.permute.xlu0 %2679
        %v2682 = vsel %vm1591, %v2680, 0
        %2684 = vmatprep.subr.bf16.mxu0 0
        %2685 = vmatpush1.bf16.msra.mxu0 %v1575
        %2686 = vmatprep.subr.bf16.mxu0 0
        %2687 = vmatpush1.bf16.msra.mxu0 0
        %2688 = vmatprep.subr.bf16.mxu0 0
        %2689 = vmatpush1.bf16.msra.mxu0 0
        %2690 = vmatprep.subr.bf16.mxu0 0
        %2691 = vmatpush1.bf16.msra.mxu0 0
        %2692 = vmatprep.subr.bf16.mxu0 0
        %2693 = vmatpush1.bf16.msra.mxu0 0
        %2694 = vmatprep.subr.bf16.mxu0 0
        %2695 = vmatpush1.bf16.msra.mxu0 0
        %2696 = vmatprep.subr.bf16.mxu0 0
        %2697 = vmatpush1.bf16.msra.mxu0 0
        %2698 = vmatprep.subr.bf16.mxu0 0
        %2699 = vmatpush1.bf16.msra.mxu0 0
        %2700 = vmatprep.subr.bf16.mxu0 0
        %2701 = vmatpush1.bf16.msra.mxu0 0
        %2702 = vmatprep.subr.bf16.mxu0 0
        %2703 = vmatpush1.bf16.msra.mxu0 0
        %2704 = vmatprep.subr.bf16.mxu0 0
        %2705 = vmatpush1.bf16.msra.mxu0 0
        %2706 = vmatprep.subr.bf16.mxu0 0
        %2707 = vmatpush1.bf16.msra.mxu0 0
        %2708 = vmatprep.subr.bf16.mxu0 0
        %2709 = vmatpush1.bf16.msra.mxu0 0
        %2710 = vmatprep.subr.bf16.mxu0 0
        %2711 = vmatpush1.bf16.msra.mxu0 0
        %2712 = vmatprep.subr.bf16.mxu0 0
        %2713 = vmatpush1.bf16.msra.mxu0 0
        %2714 = vmatprep.subr.bf16.mxu0 0
        %2715 = vmatpush1.bf16.msra.mxu0 0
        %2716 = vmatprep.mubr.bf16.mxu0 0
        %2717 = vmatmul.mubr.bf16.gmra.mrb[0].mxu0 %v2682
        %v2718 = vpop.f32.mrb[0].mxu0
        %v2719 = vadd.f32 %v1588, %v2718
        %v2720 = vpop.f32.mrb[0].mxu0
        %v2721 = vpop.f32.mrb[0].mxu0
        %v2722 = vpop.f32.mrb[0].mxu0
        %2723 = vdwg.mxu0
        %v2724 = vsel %vm1678, %v2674, -inf
        %2725 = vmax.xlane.f32.xlu0 %v2724
        %v2726 = vpop.xlane.xlu0 %2725
        %v2727 = vsel %vm1678, %v2719, -inf
        %2728 = vmax.xlane.f32.xlu0 %v2727
        %v2729 = vpop.xlane.xlu0 %2728
        %v2730 = vsub.f32 %v2674, %v2726
        %v2731 = vsub.f32 %v2719, %v2729
        %v2732 = vmul.f32 %v2730, 1.442695
        %v2733 = vpow.pop %v2732
        %v2734 = vmul.f32 %v2731, 1.442695
        %v2735 = vpow.pop %v2734
        %v2736 = vsel %vm1678, %v2733, 0.0
        %2737 = vadd.xlane.f32.xlu0 %v2736
        %v2738 = vpop.xlane.xlu0 %2737
        %v2739 = vsel %vm1678, %v2735, 0.0
        %2740 = vadd.xlane.f32.xlu0 %v2739
        %v2741 = vpop.xlane.xlu0 %2740
        %v2742 = vrcp.pop %v2738
        %v2743 = vrcp.pop %v2741
        %v2744 = vmul.f32 %v2733, %v2742
        %v2745 = vmul.f32 %v2735, %v2743
        %v2746 = vpack.c.bf16 %v2744, %v2744
        %v2747 = vpack.c.bf16 %v2745, %v2745
        %2748 = vrot.lane.b32.xlu0 %v1497, 64
        %v2749 = vpop.permute.xlu0 %2748
        %v2751 = vsel %vm1678, %v2746, 0
        %v2754 = vsel %vm1706, %v2749, 0
        %2756 = vmatprep.subr.bf16.mxu0 0
        %2757 = vmatpush1.bf16.msra.mxu0 %v2754
        %2758 = vmatprep.subr.bf16.mxu0 0
        %2759 = vmatpush1.bf16.msra.mxu0 0
        %2760 = vmatprep.subr.bf16.mxu0 0
        %2761 = vmatpush1.bf16.msra.mxu0 0
        %2762 = vmatprep.subr.bf16.mxu0 0
        %2763 = vmatpush1.bf16.msra.mxu0 0
        %2764 = vmatprep.subr.bf16.mxu0 0
        %2765 = vmatpush1.bf16.msra.mxu0 0
        %2766 = vmatprep.subr.bf16.mxu0 0
        %2767 = vmatpush1.bf16.msra.mxu0 0
        %2768 = vmatprep.subr.bf16.mxu0 0
        %2769 = vmatpush1.bf16.msra.mxu0 0
        %2770 = vmatprep.subr.bf16.mxu0 0
        %2771 = vmatpush1.bf16.msra.mxu0 0
        %2772 = vmatprep.subr.bf16.mxu0 0
        %2773 = vmatpush1.bf16.msra.mxu0 0
        %2774 = vmatprep.subr.bf16.mxu0 0
        %2775 = vmatpush1.bf16.msra.mxu0 0
        %2776 = vmatprep.subr.bf16.mxu0 0
        %2777 = vmatpush1.bf16.msra.mxu0 0
        %2778 = vmatprep.subr.bf16.mxu0 0
        %2779 = vmatpush1.bf16.msra.mxu0 0
        %2780 = vmatprep.subr.bf16.mxu0 0
        %2781 = vmatpush1.bf16.msra.mxu0 0
        %2782 = vmatprep.subr.bf16.mxu0 0
        %2783 = vmatpush1.bf16.msra.mxu0 0
        %2784 = vmatprep.subr.bf16.mxu0 0
        %2785 = vmatpush1.bf16.msra.mxu0 0
        %2786 = vmatprep.subr.bf16.mxu0 0
        %2787 = vmatpush1.bf16.msra.mxu0 0
        %2788 = vmatprep.mubr.bf16.mxu0 0
        %2789 = vmatmul.mubr.bf16.gmra.mrb[0].mxu0 %v2751
        %v2790 = vpop.f32.mrb[0].mxu0
        %v2791 = vadd.f32 0.0, %v2790
        %v2792 = vpop.f32.mrb[0].mxu0
        %v2793 = vpop.f32.mrb[0].mxu0
        %v2794 = vpop.f32.mrb[0].mxu0
        %2795 = vdwg.mxu0
        %2796 = vrot.lane.b32.xlu0 %v1498, 64
        %v2797 = vpop.permute.xlu0 %2796
        %v2799 = vsel %vm1678, %v2747, 0
        %v2802 = vsel %vm1706, %v2797, 0
        %2804 = vmatprep.subr.bf16.mxu0 0
        %2805 = vmatpush1.bf16.msra.mxu0 %v2802
        %2806 = vmatprep.subr.bf16.mxu0 0
        %2807 = vmatpush1.bf16.msra.mxu0 0
        %2808 = vmatprep.subr.bf16.mxu0 0
        %2809 = vmatpush1.bf16.msra.mxu0 0
        %2810 = vmatprep.subr.bf16.mxu0 0
        %2811 = vmatpush1.bf16.msra.mxu0 0
        %2812 = vmatprep.subr.bf16.mxu0 0
        %2813 = vmatpush1.bf16.msra.mxu0 0
        %2814 = vmatprep.subr.bf16.mxu0 0
        %2815 = vmatpush1.bf16.msra.mxu0 0
        %2816 = vmatprep.subr.bf16.mxu0 0
        %2817 = vmatpush1.bf16.msra.mxu0 0
        %2818 = vmatprep.subr.bf16.mxu0 0
        %2819 = vmatpush1.bf16.msra.mxu0 0
        %2820 = vmatprep.subr.bf16.mxu0 0
        %2821 = vmatpush1.bf16.msra.mxu0 0
        %2822 = vmatprep.subr.bf16.mxu0 0
        %2823 = vmatpush1.bf16.msra.mxu0 0
        %2824 = vmatprep.subr.bf16.mxu0 0
        %2825 = vmatpush1.bf16.msra.mxu0 0
        %2826 = vmatprep.subr.bf16.mxu0 0
        %2827 = vmatpush1.bf16.msra.mxu0 0
        %2828 = vmatprep.subr.bf16.mxu0 0
        %2829 = vmatpush1.bf16.msra.mxu0 0
        %2830 = vmatprep.subr.bf16.mxu0 0
        %2831 = vmatpush1.bf16.msra.mxu0 0
        %2832 = vmatprep.subr.bf16.mxu0 0
        %2833 = vmatpush1.bf16.msra.mxu0 0
        %2834 = vmatprep.subr.bf16.mxu0 0
        %2835 = vmatpush1.bf16.msra.mxu0 0
        %2836 = vmatprep.mubr.bf16.mxu0 0
        %2837 = vmatmul.mubr.bf16.gmra.mrb[0].mxu0 %v2799
        %v2838 = vpop.f32.mrb[0].mxu0
        %v2839 = vadd.f32 0.0, %v2838
        %v2840 = vpop.f32.mrb[0].mxu0
        %v2841 = vpop.f32.mrb[0].mxu0
        %v2842 = vpop.f32.mrb[0].mxu0
        %2843 = vdwg.mxu0
        %v2844 = vpack.c.bf16 %v2839, %v2791
        %v2847 = vunpack.c.l.b16 %v1083
        %v2848 = vunpack.c.l.b16 %v1084
        %v2849 = vpack.c.b16 %v2848, %v2847
        %v2852 = vsel %vm1591, %v2844, 0
        %2854 = vmatprep.subr.bf16.mxu0 0
        %2855 = vmatpush1.bf16.msra.mxu0 %v2849
        %2856 = vmatprep.subr.bf16.mxu0 0
        %2857 = vmatpush1.bf16.msra.mxu0 0
        %2858 = vmatprep.subr.bf16.mxu0 0
        %2859 = vmatpush1.bf16.msra.mxu0 0
        %2860 = vmatprep.subr.bf16.mxu0 0
        %2861 = vmatpush1.bf16.msra.mxu0 0
        %2862 = vmatprep.subr.bf16.mxu0 0
        %2863 = vmatpush1.bf16.msra.mxu0 0
        %2864 = vmatprep.subr.bf16.mxu0 0
        %2865 = vmatpush1.bf16.msra.mxu0 0
        %2866 = vmatprep.subr.bf16.mxu0 0
        %2867 = vmatpush1.bf16.msra.mxu0 0
        %2868 = vmatprep.subr.bf16.mxu0 0
        %2869 = vmatpush1.bf16.msra.mxu0 0
        %2870 = vmatprep.subr.bf16.mxu0 0
        %2871 = vmatpush1.bf16.msra.mxu0 0
        %2872 = vmatprep.subr.bf16.mxu0 0
        %2873 = vmatpush1.bf16.msra.mxu0 0
        %2874 = vmatprep.subr.bf16.mxu0 0
        %2875 = vmatpush1.bf16.msra.mxu0 0
        %2876 = vmatprep.subr.bf16.mxu0 0
        %2877 = vmatpush1.bf16.msra.mxu0 0
        %2878 = vmatprep.subr.bf16.mxu0 0
        %2879 = vmatpush1.bf16.msra.mxu0 0
        %2880 = vmatprep.subr.bf16.mxu0 0
        %2881 = vmatpush1.bf16.msra.mxu0 0
        %2882 = vmatprep.subr.bf16.mxu0 0
        %2883 = vmatpush1.bf16.msra.mxu0 0
        %2884 = vmatprep.subr.bf16.mxu0 0
        %2885 = vmatpush1.bf16.msra.mxu0 0
        %2886 = vmatprep.mubr.bf16.mxu0 0
        %2887 = vmatmul.mubr.bf16.gmra.mrb[0].mxu0 %v2852
        %v2888 = vpop.f32.mrb[0].mxu0
        %v2889 = vadd.f32 0.0, %v2888
        %v2890 = vpop.f32.mrb[0].mxu0
        %v2891 = vpop.f32.mrb[0].mxu0
        %v2892 = vadd.f32 0.0, %v2891
        %v2893 = vpop.f32.mrb[0].mxu0
        %2894 = vdwg.mxu0
        %v2895 = vadd.f32 %v2632, %v2889
        %v2896 = vadd.f32 %v2633, %v2892
        %2897 = vrot.lane.b32.xlu0 %v1491, 48
        %v2898 = vpop.permute.xlu0 %2897
        %v2900 = vsel %vm1591, %v2898, 0
        %2902 = vmatprep.subr.bf16.mxu0 0
        %2903 = vmatpush1.bf16.msra.mxu0 %v1568
        %2904 = vmatprep.subr.bf16.mxu0 0
        %2905 = vmatpush1.bf16.msra.mxu0 0
        %2906 = vmatprep.subr.bf16.mxu0 0
        %2907 = vmatpush1.bf16.msra.mxu0 0
        %2908 = vmatprep.subr.bf16.mxu0 0
        %2909 = vmatpush1.bf16.msra.mxu0 0
        %2910 = vmatprep.subr.bf16.mxu0 0
        %2911 = vmatpush1.bf16.msra.mxu0 0
        %2912 = vmatprep.subr.bf16.mxu0 0
        %2913 = vmatpush1.bf16.msra.mxu0 0
        %2914 = vmatprep.subr.bf16.mxu0 0
        %2915 = vmatpush1.bf16.msra.mxu0 0
        %2916 = vmatprep.subr.bf16.mxu0 0
        %2917 = vmatpush1.bf16.msra.mxu0 0
        %2918 = vmatprep.subr.bf16.mxu0 0
        %2919 = vmatpush1.bf16.msra.mxu0 0
        %2920 = vmatprep.subr.bf16.mxu0 0
        %2921 = vmatpush1.bf16.msra.mxu0 0
        %2922 = vmatprep.subr.bf16.mxu0 0
        %2923 = vmatpush1.bf16.msra.mxu0 0
        %2924 = vmatprep.subr.bf16.mxu0 0
        %2925 = vmatpush1.bf16.msra.mxu0 0
        %2926 = vmatprep.subr.bf16.mxu0 0
        %2927 = vmatpush1.bf16.msra.mxu0 0
        %2928 = vmatprep.subr.bf16.mxu0 0
        %2929 = vmatpush1.bf16.msra.mxu0 0
        %2930 = vmatprep.subr.bf16.mxu0 0
        %2931 = vmatpush1.bf16.msra.mxu0 0
        %2932 = vmatprep.subr.bf16.mxu0 0
        %2933 = vmatpush1.bf16.msra.mxu0 0
        %2934 = vmatprep.mubr.bf16.mxu0 0
        %2935 = vmatmul.mubr.bf16.gmra.mrb[0].mxu0 %v2900
        %v2936 = vpop.f32.mrb[0].mxu0
        %v2937 = vadd.f32 %v1584, %v2936
        %v2938 = vpop.f32.mrb[0].mxu0
        %v2939 = vpop.f32.mrb[0].mxu0
        %v2940 = vpop.f32.mrb[0].mxu0
        %2941 = vdwg.mxu0
        %2942 = vrot.lane.b32.xlu0 %v1492, 48
        %v2943 = vpop.permute.xlu0 %2942
        %v2945 = vsel %vm1591, %v2943, 0
        %2947 = vmatprep.subr.bf16.mxu0 0
        %2948 = vmatpush1.bf16.msra.mxu0 %v1576
        %2949 = vmatprep.subr.bf16.mxu0 0
        %2950 = vmatpush1.bf16.msra.mxu0 0
        %2951 = vmatprep.subr.bf16.mxu0 0
        %2952 = vmatpush1.bf16.msra.mxu0 0
        %2953 = vmatprep.subr.bf16.mxu0 0
        %2954 = vmatpush1.bf16.msra.mxu0 0
        %2955 = vmatprep.subr.bf16.mxu0 0
        %2956 = vmatpush1.bf16.msra.mxu0 0
        %2957 = vmatprep.subr.bf16.mxu0 0
        %2958 = vmatpush1.bf16.msra.mxu0 0
        %2959 = vmatprep.subr.bf16.mxu0 0
        %2960 = vmatpush1.bf16.msra.mxu0 0
        %2961 = vmatprep.subr.bf16.mxu0 0
        %2962 = vmatpush1.bf16.msra.mxu0 0
        %2963 = vmatprep.subr.bf16.mxu0 0
        %2964 = vmatpush1.bf16.msra.mxu0 0
        %2965 = vmatprep.subr.bf16.mxu0 0
        %2966 = vmatpush1.bf16.msra.mxu0 0
        %2967 = vmatprep.subr.bf16.mxu0 0
        %2968 = vmatpush1.bf16.msra.mxu0 0
        %2969 = vmatprep.subr.bf16.mxu0 0
        %2970 = vmatpush1.bf16.msra.mxu0 0
        %2971 = vmatprep.subr.bf16.mxu0 0
        %2972 = vmatpush1.bf16.msra.mxu0 0
        %2973 = vmatprep.subr.bf16.mxu0 0
        %2974 = vmatpush1.bf16.msra.mxu0 0
        %2975 = vmatprep.subr.bf16.mxu0 0
        %2976 = vmatpush1.bf16.msra.mxu0 0
        %2977 = vmatprep.subr.bf16.mxu0 0
        %2978 = vmatpush1.bf16.msra.mxu0 0
        %2979 = vmatprep.mubr.bf16.mxu0 0
        %2980 = vmatmul.mubr.bf16.gmra.mrb[0].mxu0 %v2945
        %v2981 = vpop.f32.mrb[0].mxu0
        %v2982 = vadd.f32 %v1588, %v2981
        %v2983 = vpop.f32.mrb[0].mxu0
        %v2984 = vpop.f32.mrb[0].mxu0
        %v2985 = vpop.f32.mrb[0].mxu0
        %2986 = vdwg.mxu0
        %v2987 = vsel %vm1678, %v2937, -inf
        %2988 = vmax.xlane.f32.xlu0 %v2987
        %v2989 = vpop.xlane.xlu0 %2988
        %v2990 = vsel %vm1678, %v2982, -inf
        %2991 = vmax.xlane.f32.xlu0 %v2990
        %v2992 = vpop.xlane.xlu0 %2991
        %v2993 = vsub.f32 %v2937, %v2989
        %v2994 = vsub.f32 %v2982, %v2992
        %v2995 = vmul.f32 %v2993, 1.442695
        %v2996 = vpow.pop %v2995
        %v2997 = vmul.f32 %v2994, 1.442695
        %v2998 = vpow.pop %v2997
        %v2999 = vsel %vm1678, %v2996, 0.0
        %3000 = vadd.xlane.f32.xlu0 %v2999
        %v3001 = vpop.xlane.xlu0 %3000
        %v3002 = vsel %vm1678, %v2998, 0.0
        %3003 = vadd.xlane.f32.xlu0 %v3002
        %v3004 = vpop.xlane.xlu0 %3003
        %v3005 = vrcp.pop %v3001
        %v3006 = vrcp.pop %v3004
        %v3007 = vmul.f32 %v2996, %v3005
        %v3008 = vmul.f32 %v2998, %v3006
        %v3009 = vpack.c.bf16 %v3007, %v3007
        %v3010 = vpack.c.bf16 %v3008, %v3008
        %3011 = vrot.lane.b32.xlu0 %v1497, 48
        %v3012 = vpop.permute.xlu0 %3011
        %v3014 = vsel %vm1678, %v3009, 0
        %v3017 = vsel %vm1706, %v3012, 0
        %3019 = vmatprep.subr.bf16.mxu0 0
        %3020 = vmatpush1.bf16.msra.mxu0 %v3017
        %3021 = vmatprep.subr.bf16.mxu0 0
        %3022 = vmatpush1.bf16.msra.mxu0 0
        %3023 = vmatprep.subr.bf16.mxu0 0
        %3024 = vmatpush1.bf16.msra.mxu0 0
        %3025 = vmatprep.subr.bf16.mxu0 0
        %3026 = vmatpush1.bf16.msra.mxu0 0
        %3027 = vmatprep.subr.bf16.mxu0 0
        %3028 = vmatpush1.bf16.msra.mxu0 0
        %3029 = vmatprep.subr.bf16.mxu0 0
        %3030 = vmatpush1.bf16.msra.mxu0 0
        %3031 = vmatprep.subr.bf16.mxu0 0
        %3032 = vmatpush1.bf16.msra.mxu0 0
        %3033 = vmatprep.subr.bf16.mxu0 0
        %3034 = vmatpush1.bf16.msra.mxu0 0
        %3035 = vmatprep.subr.bf16.mxu0 0
        %3036 = vmatpush1.bf16.msra.mxu0 0
        %3037 = vmatprep.subr.bf16.mxu0 0
        %3038 = vmatpush1.bf16.msra.mxu0 0
        %3039 = vmatprep.subr.bf16.mxu0 0
        %3040 = vmatpush1.bf16.msra.mxu0 0
        %3041 = vmatprep.subr.bf16.mxu0 0
        %3042 = vmatpush1.bf16.msra.mxu0 0
        %3043 = vmatprep.subr.bf16.mxu0 0
        %3044 = vmatpush1.bf16.msra.mxu0 0
        %3045 = vmatprep.subr.bf16.mxu0 0
        %3046 = vmatpush1.bf16.msra.mxu0 0
        %3047 = vmatprep.subr.bf16.mxu0 0
        %3048 = vmatpush1.bf16.msra.mxu0 0
        %3049 = vmatprep.subr.bf16.mxu0 0
        %3050 = vmatpush1.bf16.msra.mxu0 0
        %3051 = vmatprep.mubr.bf16.mxu0 0
        %3052 = vmatmul.mubr.bf16.gmra.mrb[0].mxu0 %v3014
        %v3053 = vpop.f32.mrb[0].mxu0
        %v3054 = vadd.f32 0.0, %v3053
        %v3055 = vpop.f32.mrb[0].mxu0
        %v3056 = vpop.f32.mrb[0].mxu0
        %v3057 = vpop.f32.mrb[0].mxu0
        %3058 = vdwg.mxu0
        %3059 = vrot.lane.b32.xlu0 %v1498, 48
        %v3060 = vpop.permute.xlu0 %3059
        %v3062 = vsel %vm1678, %v3010, 0
        %v3065 = vsel %vm1706, %v3060, 0
        %3067 = vmatprep.subr.bf16.mxu0 0
        %3068 = vmatpush1.bf16.msra.mxu0 %v3065
        %3069 = vmatprep.subr.bf16.mxu0 0
        %3070 = vmatpush1.bf16.msra.mxu0 0
        %3071 = vmatprep.subr.bf16.mxu0 0
        %3072 = vmatpush1.bf16.msra.mxu0 0
        %3073 = vmatprep.subr.bf16.mxu0 0
        %3074 = vmatpush1.bf16.msra.mxu0 0
        %3075 = vmatprep.subr.bf16.mxu0 0
        %3076 = vmatpush1.bf16.msra.mxu0 0
        %3077 = vmatprep.subr.bf16.mxu0 0
        %3078 = vmatpush1.bf16.msra.mxu0 0
        %3079 = vmatprep.subr.bf16.mxu0 0
        %3080 = vmatpush1.bf16.msra.mxu0 0
        %3081 = vmatprep.subr.bf16.mxu0 0
        %3082 = vmatpush1.bf16.msra.mxu0 0
        %3083 = vmatprep.subr.bf16.mxu0 0
        %3084 = vmatpush1.bf16.msra.mxu0 0
        %3085 = vmatprep.subr.bf16.mxu0 0
        %3086 = vmatpush1.bf16.msra.mxu0 0
        %3087 = vmatprep.subr.bf16.mxu0 0
        %3088 = vmatpush1.bf16.msra.mxu0 0
        %3089 = vmatprep.subr.bf16.mxu0 0
        %3090 = vmatpush1.bf16.msra.mxu0 0
        %3091 = vmatprep.subr.bf16.mxu0 0
        %3092 = vmatpush1.bf16.msra.mxu0 0
        %3093 = vmatprep.subr.bf16.mxu0 0
        %3094 = vmatpush1.bf16.msra.mxu0 0
        %3095 = vmatprep.subr.bf16.mxu0 0
        %3096 = vmatpush1.bf16.msra.mxu0 0
        %3097 = vmatprep.subr.bf16.mxu0 0
        %3098 = vmatpush1.bf16.msra.mxu0 0
        %3099 = vmatprep.mubr.bf16.mxu0 0
        %3100 = vmatmul.mubr.bf16.gmra.mrb[0].mxu0 %v3062
        %v3101 = vpop.f32.mrb[0].mxu0
        %v3102 = vadd.f32 0.0, %v3101
        %v3103 = vpop.f32.mrb[0].mxu0
        %v3104 = vpop.f32.mrb[0].mxu0
        %v3105 = vpop.f32.mrb[0].mxu0
        %3106 = vdwg.mxu0
        %v3107 = vpack.c.bf16 %v3102, %v3054
        %v3110 = vunpack.c.l.b16 %v1085
        %v3111 = vunpack.c.l.b16 %v1086
        %v3112 = vpack.c.b16 %v3111, %v3110
        %v3115 = vsel %vm1591, %v3107, 0
        %3117 = vmatprep.subr.bf16.mxu0 0
        %3118 = vmatpush1.bf16.msra.mxu0 %v3112
        %3119 = vmatprep.subr.bf16.mxu0 0
        %3120 = vmatpush1.bf16.msra.mxu0 0
        %3121 = vmatprep.subr.bf16.mxu0 0
        %3122 = vmatpush1.bf16.msra.mxu0 0
        %3123 = vmatprep.subr.bf16.mxu0 0
        %3124 = vmatpush1.bf16.msra.mxu0 0
        %3125 = vmatprep.subr.bf16.mxu0 0
        %3126 = vmatpush1.bf16.msra.mxu0 0
        %3127 = vmatprep.subr.bf16.mxu0 0
        %3128 = vmatpush1.bf16.msra.mxu0 0
        %3129 = vmatprep.subr.bf16.mxu0 0
        %3130 = vmatpush1.bf16.msra.mxu0 0
        %3131 = vmatprep.subr.bf16.mxu0 0
        %3132 = vmatpush1.bf16.msra.mxu0 0
        %3133 = vmatprep.subr.bf16.mxu0 0
        %3134 = vmatpush1.bf16.msra.mxu0 0
        %3135 = vmatprep.subr.bf16.mxu0 0
        %3136 = vmatpush1.bf16.msra.mxu0 0
        %3137 = vmatprep.subr.bf16.mxu0 0
        %3138 = vmatpush1.bf16.msra.mxu0 0
        %3139 = vmatprep.subr.bf16.mxu0 0
        %3140 = vmatpush1.bf16.msra.mxu0 0
        %3141 = vmatprep.subr.bf16.mxu0 0
        %3142 = vmatpush1.bf16.msra.mxu0 0
        %3143 = vmatprep.subr.bf16.mxu0 0
        %3144 = vmatpush1.bf16.msra.mxu0 0
        %3145 = vmatprep.subr.bf16.mxu0 0
        %3146 = vmatpush1.bf16.msra.mxu0 0
        %3147 = vmatprep.subr.bf16.mxu0 0
        %3148 = vmatpush1.bf16.msra.mxu0 0
        %3149 = vmatprep.mubr.bf16.mxu0 0
        %3150 = vmatmul.mubr.bf16.gmra.mrb[0].mxu0 %v3115
        %v3151 = vpop.f32.mrb[0].mxu0
        %v3152 = vadd.f32 0.0, %v3151
        %v3153 = vpop.f32.mrb[0].mxu0
        %v3154 = vpop.f32.mrb[0].mxu0
        %v3155 = vadd.f32 0.0, %v3154
        %v3156 = vpop.f32.mrb[0].mxu0
        %3157 = vdwg.mxu0
        %v3158 = vadd.f32 %v2895, %v3152
        %v3159 = vadd.f32 %v2896, %v3155
        %3160 = vrot.lane.b32.xlu0 %v1491, 32
        %v3161 = vpop.permute.xlu0 %3160
        %v3163 = vsel %vm1591, %v3161, 0
        %3165 = vmatprep.subr.bf16.mxu0 0
        %3166 = vmatpush1.bf16.msra.mxu0 %v1569
        %3167 = vmatprep.subr.bf16.mxu0 0
        %3168 = vmatpush1.bf16.msra.mxu0 0
        %3169 = vmatprep.subr.bf16.mxu0 0
        %3170 = vmatpush1.bf16.msra.mxu0 0
        %3171 = vmatprep.subr.bf16.mxu0 0
        %3172 = vmatpush1.bf16.msra.mxu0 0
        %3173 = vmatprep.subr.bf16.mxu0 0
        %3174 = vmatpush1.bf16.msra.mxu0 0
        %3175 = vmatprep.subr.bf16.mxu0 0
        %3176 = vmatpush1.bf16.msra.mxu0 0
        %3177 = vmatprep.subr.bf16.mxu0 0
        %3178 = vmatpush1.bf16.msra.mxu0 0
        %3179 = vmatprep.subr.bf16.mxu0 0
        %3180 = vmatpush1.bf16.msra.mxu0 0
        %3181 = vmatprep.subr.bf16.mxu0 0
        %3182 = vmatpush1.bf16.msra.mxu0 0
        %3183 = vmatprep.subr.bf16.mxu0 0
        %3184 = vmatpush1.bf16.msra.mxu0 0
        %3185 = vmatprep.subr.bf16.mxu0 0
        %3186 = vmatpush1.bf16.msra.mxu0 0
        %3187 = vmatprep.subr.bf16.mxu0 0
        %3188 = vmatpush1.bf16.msra.mxu0 0
        %3189 = vmatprep.subr.bf16.mxu0 0
        %3190 = vmatpush1.bf16.msra.mxu0 0
        %3191 = vmatprep.subr.bf16.mxu0 0
        %3192 = vmatpush1.bf16.msra.mxu0 0
        %3193 = vmatprep.subr.bf16.mxu0 0
        %3194 = vmatpush1.bf16.msra.mxu0 0
        %3195 = vmatprep.subr.bf16.mxu0 0
        %3196 = vmatpush1.bf16.msra.mxu0 0
        %3197 = vmatprep.mubr.bf16.mxu0 0
        %3198 = vmatmul.mubr.bf16.gmra.mrb[0].mxu0 %v3163
        %v3199 = vpop.f32.mrb[0].mxu0
        %v3200 = vadd.f32 %v1584, %v3199
        %v3201 = vpop.f32.mrb[0].mxu0
        %v3202 = vpop.f32.mrb[0].mxu0
        %v3203 = vpop.f32.mrb[0].mxu0
        %3204 = vdwg.mxu0
        %3205 = vrot.lane.b32.xlu0 %v1492, 32
        %v3206 = vpop.permute.xlu0 %3205
        %v3208 = vsel %vm1591, %v3206, 0
        %3210 = vmatprep.subr.bf16.mxu0 0
        %3211 = vmatpush1.bf16.msra.mxu0 %v1577
        %3212 = vmatprep.subr.bf16.mxu0 0
        %3213 = vmatpush1.bf16.msra.mxu0 0
        %3214 = vmatprep.subr.bf16.mxu0 0
        %3215 = vmatpush1.bf16.msra.mxu0 0
        %3216 = vmatprep.subr.bf16.mxu0 0
        %3217 = vmatpush1.bf16.msra.mxu0 0
        %3218 = vmatprep.subr.bf16.mxu0 0
        %3219 = vmatpush1.bf16.msra.mxu0 0
        %3220 = vmatprep.subr.bf16.mxu0 0
        %3221 = vmatpush1.bf16.msra.mxu0 0
        %3222 = vmatprep.subr.bf16.mxu0 0
        %3223 = vmatpush1.bf16.msra.mxu0 0
        %3224 = vmatprep.subr.bf16.mxu0 0
        %3225 = vmatpush1.bf16.msra.mxu0 0
        %3226 = vmatprep.subr.bf16.mxu0 0
        %3227 = vmatpush1.bf16.msra.mxu0 0
        %3228 = vmatprep.subr.bf16.mxu0 0
        %3229 = vmatpush1.bf16.msra.mxu0 0
        %3230 = vmatprep.subr.bf16.mxu0 0
        %3231 = vmatpush1.bf16.msra.mxu0 0
        %3232 = vmatprep.subr.bf16.mxu0 0
        %3233 = vmatpush1.bf16.msra.mxu0 0
        %3234 = vmatprep.subr.bf16.mxu0 0
        %3235 = vmatpush1.bf16.msra.mxu0 0
        %3236 = vmatprep.subr.bf16.mxu0 0
        %3237 = vmatpush1.bf16.msra.mxu0 0
        %3238 = vmatprep.subr.bf16.mxu0 0
        %3239 = vmatpush1.bf16.msra.mxu0 0
        %3240 = vmatprep.subr.bf16.mxu0 0
        %3241 = vmatpush1.bf16.msra.mxu0 0
        %3242 = vmatprep.mubr.bf16.mxu0 0
        %3243 = vmatmul.mubr.bf16.gmra.mrb[0].mxu0 %v3208
        %v3244 = vpop.f32.mrb[0].mxu0
        %v3245 = vadd.f32 %v1588, %v3244
        %v3246 = vpop.f32.mrb[0].mxu0
        %v3247 = vpop.f32.mrb[0].mxu0
        %v3248 = vpop.f32.mrb[0].mxu0
        %3249 = vdwg.mxu0
        %v3250 = vsel %vm1678, %v3200, -inf
        %3251 = vmax.xlane.f32.xlu0 %v3250
        %v3252 = vpop.xlane.xlu0 %3251
        %v3253 = vsel %vm1678, %v3245, -inf
        %3254 = vmax.xlane.f32.xlu0 %v3253
        %v3255 = vpop.xlane.xlu0 %3254
        %v3256 = vsub.f32 %v3200, %v3252
        %v3257 = vsub.f32 %v3245, %v3255
        %v3258 = vmul.f32 %v3256, 1.442695
        %v3259 = vpow.pop %v3258
        %v3260 = vmul.f32 %v3257, 1.442695
        %v3261 = vpow.pop %v3260
        %v3262 = vsel %vm1678, %v3259, 0.0
        %3263 = vadd.xlane.f32.xlu0 %v3262
        %v3264 = vpop.xlane.xlu0 %3263
        %v3265 = vsel %vm1678, %v3261, 0.0
        %3266 = vadd.xlane.f32.xlu0 %v3265
        %v3267 = vpop.xlane.xlu0 %3266
        %v3268 = vrcp.pop %v3264
        %v3269 = vrcp.pop %v3267
        %v3270 = vmul.f32 %v3259, %v3268
        %v3271 = vmul.f32 %v3261, %v3269
        %v3272 = vpack.c.bf16 %v3270, %v3270
        %v3273 = vpack.c.bf16 %v3271, %v3271
        %3274 = vrot.lane.b32.xlu0 %v1497, 32
        %v3275 = vpop.permute.xlu0 %3274
        %v3277 = vsel %vm1678, %v3272, 0
        %v3280 = vsel %vm1706, %v3275, 0
        %3282 = vmatprep.subr.bf16.mxu0 0
        %3283 = vmatpush1.bf16.msra.mxu0 %v3280
        %3284 = vmatprep.subr.bf16.mxu0 0
        %3285 = vmatpush1.bf16.msra.mxu0 0
        %3286 = vmatprep.subr.bf16.mxu0 0
        %3287 = vmatpush1.bf16.msra.mxu0 0
        %3288 = vmatprep.subr.bf16.mxu0 0
        %3289 = vmatpush1.bf16.msra.mxu0 0
        %3290 = vmatprep.subr.bf16.mxu0 0
        %3291 = vmatpush1.bf16.msra.mxu0 0
        %3292 = vmatprep.subr.bf16.mxu0 0
        %3293 = vmatpush1.bf16.msra.mxu0 0
        %3294 = vmatprep.subr.bf16.mxu0 0
        %3295 = vmatpush1.bf16.msra.mxu0 0
        %3296 = vmatprep.subr.bf16.mxu0 0
        %3297 = vmatpush1.bf16.msra.mxu0 0
        %3298 = vmatprep.subr.bf16.mxu0 0
        %3299 = vmatpush1.bf16.msra.mxu0 0
        %3300 = vmatprep.subr.bf16.mxu0 0
        %3301 = vmatpush1.bf16.msra.mxu0 0
        %3302 = vmatprep.subr.bf16.mxu0 0
        %3303 = vmatpush1.bf16.msra.mxu0 0
        %3304 = vmatprep.subr.bf16.mxu0 0
        %3305 = vmatpush1.bf16.msra.mxu0 0
        %3306 = vmatprep.subr.bf16.mxu0 0
        %3307 = vmatpush1.bf16.msra.mxu0 0
        %3308 = vmatprep.subr.bf16.mxu0 0
        %3309 = vmatpush1.bf16.msra.mxu0 0
        %3310 = vmatprep.subr.bf16.mxu0 0
        %3311 = vmatpush1.bf16.msra.mxu0 0
        %3312 = vmatprep.subr.bf16.mxu0 0
        %3313 = vmatpush1.bf16.msra.mxu0 0
        %3314 = vmatprep.mubr.bf16.mxu0 0
        %3315 = vmatmul.mubr.bf16.gmra.mrb[0].mxu0 %v3277
        %v3316 = vpop.f32.mrb[0].mxu0
        %v3317 = vadd.f32 0.0, %v3316
        %v3318 = vpop.f32.mrb[0].mxu0
        %v3319 = vpop.f32.mrb[0].mxu0
        %v3320 = vpop.f32.mrb[0].mxu0
        %3321 = vdwg.mxu0
        %3322 = vrot.lane.b32.xlu0 %v1498, 32
        %v3323 = vpop.permute.xlu0 %3322
        %v3325 = vsel %vm1678, %v3273, 0
        %v3328 = vsel %vm1706, %v3323, 0
        %3330 = vmatprep.subr.bf16.mxu0 0
        %3331 = vmatpush1.bf16.msra.mxu0 %v3328
        %3332 = vmatprep.subr.bf16.mxu0 0
        %3333 = vmatpush1.bf16.msra.mxu0 0
        %3334 = vmatprep.subr.bf16.mxu0 0
        %3335 = vmatpush1.bf16.msra.mxu0 0
        %3336 = vmatprep.subr.bf16.mxu0 0
        %3337 = vmatpush1.bf16.msra.mxu0 0
        %3338 = vmatprep.subr.bf16.mxu0 0
        %3339 = vmatpush1.bf16.msra.mxu0 0
        %3340 = vmatprep.subr.bf16.mxu0 0
        %3341 = vmatpush1.bf16.msra.mxu0 0
        %3342 = vmatprep.subr.bf16.mxu0 0
        %3343 = vmatpush1.bf16.msra.mxu0 0
        %3344 = vmatprep.subr.bf16.mxu0 0
        %3345 = vmatpush1.bf16.msra.mxu0 0
        %3346 = vmatprep.subr.bf16.mxu0 0
        %3347 = vmatpush1.bf16.msra.mxu0 0
        %3348 = vmatprep.subr.bf16.mxu0 0
        %3349 = vmatpush1.bf16.msra.mxu0 0
        %3350 = vmatprep.subr.bf16.mxu0 0
        %3351 = vmatpush1.bf16.msra.mxu0 0
        %3352 = vmatprep.subr.bf16.mxu0 0
        %3353 = vmatpush1.bf16.msra.mxu0 0
        %3354 = vmatprep.subr.bf16.mxu0 0
        %3355 = vmatpush1.bf16.msra.mxu0 0
        %3356 = vmatprep.subr.bf16.mxu0 0
        %3357 = vmatpush1.bf16.msra.mxu0 0
        %3358 = vmatprep.subr.bf16.mxu0 0
        %3359 = vmatpush1.bf16.msra.mxu0 0
        %3360 = vmatprep.subr.bf16.mxu0 0
        %3361 = vmatpush1.bf16.msra.mxu0 0
        %3362 = vmatprep.mubr.bf16.mxu0 0
        %3363 = vmatmul.mubr.bf16.gmra.mrb[0].mxu0 %v3325
        %v3364 = vpop.f32.mrb[0].mxu0
        %v3365 = vadd.f32 0.0, %v3364
        %v3366 = vpop.f32.mrb[0].mxu0
        %v3367 = vpop.f32.mrb[0].mxu0
        %v3368 = vpop.f32.mrb[0].mxu0
        %3369 = vdwg.mxu0
        %v3370 = vpack.c.bf16 %v3365, %v3317
        %v3373 = vunpack.c.l.b16 %v1087
        %v3374 = vunpack.c.l.b16 %v1088
        %v3375 = vpack.c.b16 %v3374, %v3373
        %v3378 = vsel %vm1591, %v3370, 0
        %3380 = vmatprep.subr.bf16.mxu0 0
        %3381 = vmatpush1.bf16.msra.mxu0 %v3375
        %3382 = vmatprep.subr.bf16.mxu0 0
        %3383 = vmatpush1.bf16.msra.mxu0 0
        %3384 = vmatprep.subr.bf16.mxu0 0
        %3385 = vmatpush1.bf16.msra.mxu0 0
        %3386 = vmatprep.subr.bf16.mxu0 0
        %3387 = vmatpush1.bf16.msra.mxu0 0
        %3388 = vmatprep.subr.bf16.mxu0 0
        %3389 = vmatpush1.bf16.msra.mxu0 0
        %3390 = vmatprep.subr.bf16.mxu0 0
        %3391 = vmatpush1.bf16.msra.mxu0 0
        %3392 = vmatprep.subr.bf16.mxu0 0
        %3393 = vmatpush1.bf16.msra.mxu0 0
        %3394 = vmatprep.subr.bf16.mxu0 0
        %3395 = vmatpush1.bf16.msra.mxu0 0
        %3396 = vmatprep.subr.bf16.mxu0 0
        %3397 = vmatpush1.bf16.msra.mxu0 0
        %3398 = vmatprep.subr.bf16.mxu0 0
        %3399 = vmatpush1.bf16.msra.mxu0 0
        %3400 = vmatprep.subr.bf16.mxu0 0
        %3401 = vmatpush1.bf16.msra.mxu0 0
        %3402 = vmatprep.subr.bf16.mxu0 0
        %3403 = vmatpush1.bf16.msra.mxu0 0
        %3404 = vmatprep.subr.bf16.mxu0 0
        %3405 = vmatpush1.bf16.msra.mxu0 0
        %3406 = vmatprep.subr.bf16.mxu0 0
        %3407 = vmatpush1.bf16.msra.mxu0 0
        %3408 = vmatprep.subr.bf16.mxu0 0
        %3409 = vmatpush1.bf16.msra.mxu0 0
        %3410 = vmatprep.subr.bf16.mxu0 0
        %3411 = vmatpush1.bf16.msra.mxu0 0
        %3412 = vmatprep.mubr.bf16.mxu0 0
        %3413 = vmatmul.mubr.bf16.gmra.mrb[0].mxu0 %v3378
        %v3414 = vpop.f32.mrb[0].mxu0
        %v3415 = vadd.f32 0.0, %v3414
        %v3416 = vpop.f32.mrb[0].mxu0
        %v3417 = vpop.f32.mrb[0].mxu0
        %v3418 = vadd.f32 0.0, %v3417
        %v3419 = vpop.f32.mrb[0].mxu0
        %3420 = vdwg.mxu0
        %v3421 = vadd.f32 %v3158, %v3415
        %v3422 = vadd.f32 %v3159, %v3418
        %3423 = vrot.lane.b32.xlu0 %v1491, 16
        %v3424 = vpop.permute.xlu0 %3423
        %v3426 = vsel %vm1591, %v3424, 0
        %3428 = vmatprep.subr.bf16.mxu0 0
        %3429 = vmatpush1.bf16.msra.mxu0 %v1570
        %3430 = vmatprep.subr.bf16.mxu0 0
        %3431 = vmatpush1.bf16.msra.mxu0 0
        %3432 = vmatprep.subr.bf16.mxu0 0
        %3433 = vmatpush1.bf16.msra.mxu0 0
        %3434 = vmatprep.subr.bf16.mxu0 0
        %3435 = vmatpush1.bf16.msra.mxu0 0
        %3436 = vmatprep.subr.bf16.mxu0 0
        %3437 = vmatpush1.bf16.msra.mxu0 0
        %3438 = vmatprep.subr.bf16.mxu0 0
        %3439 = vmatpush1.bf16.msra.mxu0 0
        %3440 = vmatprep.subr.bf16.mxu0 0
        %3441 = vmatpush1.bf16.msra.mxu0 0
        %3442 = vmatprep.subr.bf16.mxu0 0
        %3443 = vmatpush1.bf16.msra.mxu0 0
        %3444 = vmatprep.subr.bf16.mxu0 0
        %3445 = vmatpush1.bf16.msra.mxu0 0
        %3446 = vmatprep.subr.bf16.mxu0 0
        %3447 = vmatpush1.bf16.msra.mxu0 0
        %3448 = vmatprep.subr.bf16.mxu0 0
        %3449 = vmatpush1.bf16.msra.mxu0 0
        %3450 = vmatprep.subr.bf16.mxu0 0
        %3451 = vmatpush1.bf16.msra.mxu0 0
        %3452 = vmatprep.subr.bf16.mxu0 0
        %3453 = vmatpush1.bf16.msra.mxu0 0
        %3454 = vmatprep.subr.bf16.mxu0 0
        %3455 = vmatpush1.bf16.msra.mxu0 0
        %3456 = vmatprep.subr.bf16.mxu0 0
        %3457 = vmatpush1.bf16.msra.mxu0 0
        %3458 = vmatprep.subr.bf16.mxu0 0
        %3459 = vmatpush1.bf16.msra.mxu0 0
        %3460 = vmatprep.mubr.bf16.mxu0 0
        %3461 = vmatmul.mubr.bf16.gmra.mrb[0].mxu0 %v3426
        %v3462 = vpop.f32.mrb[0].mxu0
        %v3463 = vadd.f32 %v1584, %v3462
        %v3464 = vpop.f32.mrb[0].mxu0
        %v3465 = vpop.f32.mrb[0].mxu0
        %v3466 = vpop.f32.mrb[0].mxu0
        %3467 = vdwg.mxu0
        %3468 = vrot.lane.b32.xlu0 %v1492, 16
        %v3469 = vpop.permute.xlu0 %3468
        %v3471 = vsel %vm1591, %v3469, 0
        %3473 = vmatprep.subr.bf16.mxu0 0
        %3474 = vmatpush1.bf16.msra.mxu0 %v1578
        %3475 = vmatprep.subr.bf16.mxu0 0
        %3476 = vmatpush1.bf16.msra.mxu0 0
        %3477 = vmatprep.subr.bf16.mxu0 0
        %3478 = vmatpush1.bf16.msra.mxu0 0
        %3479 = vmatprep.subr.bf16.mxu0 0
        %3480 = vmatpush1.bf16.msra.mxu0 0
        %3481 = vmatprep.subr.bf16.mxu0 0
        %3482 = vmatpush1.bf16.msra.mxu0 0
        %3483 = vmatprep.subr.bf16.mxu0 0
        %3484 = vmatpush1.bf16.msra.mxu0 0
        %3485 = vmatprep.subr.bf16.mxu0 0
        %3486 = vmatpush1.bf16.msra.mxu0 0
        %3487 = vmatprep.subr.bf16.mxu0 0
        %3488 = vmatpush1.bf16.msra.mxu0 0
        %3489 = vmatprep.subr.bf16.mxu0 0
        %3490 = vmatpush1.bf16.msra.mxu0 0
        %3491 = vmatprep.subr.bf16.mxu0 0
        %3492 = vmatpush1.bf16.msra.mxu0 0
        %3493 = vmatprep.subr.bf16.mxu0 0
        %3494 = vmatpush1.bf16.msra.mxu0 0
        %3495 = vmatprep.subr.bf16.mxu0 0
        %3496 = vmatpush1.bf16.msra.mxu0 0
        %3497 = vmatprep.subr.bf16.mxu0 0
        %3498 = vmatpush1.bf16.msra.mxu0 0
        %3499 = vmatprep.subr.bf16.mxu0 0
        %3500 = vmatpush1.bf16.msra.mxu0 0
        %3501 = vmatprep.subr.bf16.mxu0 0
        %3502 = vmatpush1.bf16.msra.mxu0 0
        %3503 = vmatprep.subr.bf16.mxu0 0
        %3504 = vmatpush1.bf16.msra.mxu0 0
        %3505 = vmatprep.mubr.bf16.mxu0 0
        %3506 = vmatmul.mubr.bf16.gmra.mrb[0].mxu0 %v3471
        %v3507 = vpop.f32.mrb[0].mxu0
        %v3508 = vadd.f32 %v1588, %v3507
        %v3509 = vpop.f32.mrb[0].mxu0
        %v3510 = vpop.f32.mrb[0].mxu0
        %v3511 = vpop.f32.mrb[0].mxu0
        %3512 = vdwg.mxu0
        %v3513 = vsel %vm1678, %v3463, -inf
        %3514 = vmax.xlane.f32.xlu0 %v3513
        %v3515 = vpop.xlane.xlu0 %3514
        %v3516 = vsel %vm1678, %v3508, -inf
        %3517 = vmax.xlane.f32.xlu0 %v3516
        %v3518 = vpop.xlane.xlu0 %3517
        %v3519 = vsub.f32 %v3463, %v3515
        %v3520 = vsub.f32 %v3508, %v3518
        %v3521 = vmul.f32 %v3519, 1.442695
        %v3522 = vpow.pop %v3521
        %v3523 = vmul.f32 %v3520, 1.442695
        %v3524 = vpow.pop %v3523
        %v3525 = vsel %vm1678, %v3522, 0.0
        %3526 = vadd.xlane.f32.xlu0 %v3525
        %v3527 = vpop.xlane.xlu0 %3526
        %v3528 = vsel %vm1678, %v3524, 0.0
        %3529 = vadd.xlane.f32.xlu0 %v3528
        %v3530 = vpop.xlane.xlu0 %3529
        %v3531 = vrcp.pop %v3527
        %v3532 = vrcp.pop %v3530
        %v3533 = vmul.f32 %v3522, %v3531
        %v3534 = vmul.f32 %v3524, %v3532
        %v3535 = vpack.c.bf16 %v3533, %v3533
        %v3536 = vpack.c.bf16 %v3534, %v3534
        %3537 = vrot.lane.b32.xlu0 %v1497, 16
        %v3538 = vpop.permute.xlu0 %3537
        %v3540 = vsel %vm1678, %v3535, 0
        %v3543 = vsel %vm1706, %v3538, 0
        %3545 = vmatprep.subr.bf16.mxu0 0
        %3546 = vmatpush1.bf16.msra.mxu0 %v3543
        %3547 = vmatprep.subr.bf16.mxu0 0
        %3548 = vmatpush1.bf16.msra.mxu0 0
        %3549 = vmatprep.subr.bf16.mxu0 0
        %3550 = vmatpush1.bf16.msra.mxu0 0
        %3551 = vmatprep.subr.bf16.mxu0 0
        %3552 = vmatpush1.bf16.msra.mxu0 0
        %3553 = vmatprep.subr.bf16.mxu0 0
        %3554 = vmatpush1.bf16.msra.mxu0 0
        %3555 = vmatprep.subr.bf16.mxu0 0
        %3556 = vmatpush1.bf16.msra.mxu0 0
        %3557 = vmatprep.subr.bf16.mxu0 0
        %3558 = vmatpush1.bf16.msra.mxu0 0
        %3559 = vmatprep.subr.bf16.mxu0 0
        %3560 = vmatpush1.bf16.msra.mxu0 0
        %3561 = vmatprep.subr.bf16.mxu0 0
        %3562 = vmatpush1.bf16.msra.mxu0 0
        %3563 = vmatprep.subr.bf16.mxu0 0
        %3564 = vmatpush1.bf16.msra.mxu0 0
        %3565 = vmatprep.subr.bf16.mxu0 0
        %3566 = vmatpush1.bf16.msra.mxu0 0
        %3567 = vmatprep.subr.bf16.mxu0 0
        %3568 = vmatpush1.bf16.msra.mxu0 0
        %3569 = vmatprep.subr.bf16.mxu0 0
        %3570 = vmatpush1.bf16.msra.mxu0 0
        %3571 = vmatprep.subr.bf16.mxu0 0
        %3572 = vmatpush1.bf16.msra.mxu0 0
        %3573 = vmatprep.subr.bf16.mxu0 0
        %3574 = vmatpush1.bf16.msra.mxu0 0
        %3575 = vmatprep.subr.bf16.mxu0 0
        %3576 = vmatpush1.bf16.msra.mxu0 0
        %3577 = vmatprep.mubr.bf16.mxu0 0
        %3578 = vmatmul.mubr.bf16.gmra.mrb[0].mxu0 %v3540
        %v3579 = vpop.f32.mrb[0].mxu0
        %v3580 = vadd.f32 0.0, %v3579
        %v3581 = vpop.f32.mrb[0].mxu0
        %v3582 = vpop.f32.mrb[0].mxu0
        %v3583 = vpop.f32.mrb[0].mxu0
        %3584 = vdwg.mxu0
        %3585 = vrot.lane.b32.xlu0 %v1498, 16
        %v3586 = vpop.permute.xlu0 %3585
        %v3588 = vsel %vm1678, %v3536, 0
        %v3591 = vsel %vm1706, %v3586, 0
        %3593 = vmatprep.subr.bf16.mxu0 0
        %3594 = vmatpush1.bf16.msra.mxu0 %v3591
        %3595 = vmatprep.subr.bf16.mxu0 0
        %3596 = vmatpush1.bf16.msra.mxu0 0
        %3597 = vmatprep.subr.bf16.mxu0 0
        %3598 = vmatpush1.bf16.msra.mxu0 0
        %3599 = vmatprep.subr.bf16.mxu0 0
        %3600 = vmatpush1.bf16.msra.mxu0 0
        %3601 = vmatprep.subr.bf16.mxu0 0
        %3602 = vmatpush1.bf16.msra.mxu0 0
        %3603 = vmatprep.subr.bf16.mxu0 0
        %3604 = vmatpush1.bf16.msra.mxu0 0
        %3605 = vmatprep.subr.bf16.mxu0 0
        %3606 = vmatpush1.bf16.msra.mxu0 0
        %3607 = vmatprep.subr.bf16.mxu0 0
        %3608 = vmatpush1.bf16.msra.mxu0 0
        %3609 = vmatprep.subr.bf16.mxu0 0
        %3610 = vmatpush1.bf16.msra.mxu0 0
        %3611 = vmatprep.subr.bf16.mxu0 0
        %3612 = vmatpush1.bf16.msra.mxu0 0
        %3613 = vmatprep.subr.bf16.mxu0 0
        %3614 = vmatpush1.bf16.msra.mxu0 0
        %3615 = vmatprep.subr.bf16.mxu0 0
        %3616 = vmatpush1.bf16.msra.mxu0 0
        %3617 = vmatprep.subr.bf16.mxu0 0
        %3618 = vmatpush1.bf16.msra.mxu0 0
        %3619 = vmatprep.subr.bf16.mxu0 0
        %3620 = vmatpush1.bf16.msra.mxu0 0
        %3621 = vmatprep.subr.bf16.mxu0 0
        %3622 = vmatpush1.bf16.msra.mxu0 0
        %3623 = vmatprep.subr.bf16.mxu0 0
        %3624 = vmatpush1.bf16.msra.mxu0 0
        %3625 = vmatprep.mubr.bf16.mxu0 0
        %3626 = vmatmul.mubr.bf16.gmra.mrb[0].mxu0 %v3588
        %v3627 = vpop.f32.mrb[0].mxu0
        %v3628 = vadd.f32 0.0, %v3627
        %v3629 = vpop.f32.mrb[0].mxu0
        %v3630 = vpop.f32.mrb[0].mxu0
        %v3631 = vpop.f32.mrb[0].mxu0
        %3632 = vdwg.mxu0
        %v3633 = vpack.c.bf16 %v3628, %v3580
        %v3636 = vunpack.c.l.b16 %v1089
        %v3637 = vunpack.c.l.b16 %v1090
        %v3638 = vpack.c.b16 %v3637, %v3636
        %v3641 = vsel %vm1591, %v3633, 0
        %3643 = vmatprep.subr.bf16.mxu0 0
        %3644 = vmatpush1.bf16.msra.mxu0 %v3638
        %3645 = vmatprep.subr.bf16.mxu0 0
        %3646 = vmatpush1.bf16.msra.mxu0 0
        %3647 = vmatprep.subr.bf16.mxu0 0
        %3648 = vmatpush1.bf16.msra.mxu0 0
        %3649 = vmatprep.subr.bf16.mxu0 0
        %3650 = vmatpush1.bf16.msra.mxu0 0
        %3651 = vmatprep.subr.bf16.mxu0 0
        %3652 = vmatpush1.bf16.msra.mxu0 0
        %3653 = vmatprep.subr.bf16.mxu0 0
        %3654 = vmatpush1.bf16.msra.mxu0 0
        %3655 = vmatprep.subr.bf16.mxu0 0
        %3656 = vmatpush1.bf16.msra.mxu0 0
        %3657 = vmatprep.subr.bf16.mxu0 0
        %3658 = vmatpush1.bf16.msra.mxu0 0
        %3659 = vmatprep.subr.bf16.mxu0 0
        %3660 = vmatpush1.bf16.msra.mxu0 0
        %3661 = vmatprep.subr.bf16.mxu0 0
        %3662 = vmatpush1.bf16.msra.mxu0 0
        %3663 = vmatprep.subr.bf16.mxu0 0
        %3664 = vmatpush1.bf16.msra.mxu0 0
        %3665 = vmatprep.subr.bf16.mxu0 0
        %3666 = vmatpush1.bf16.msra.mxu0 0
        %3667 = vmatprep.subr.bf16.mxu0 0
        %3668 = vmatpush1.bf16.msra.mxu0 0
        %3669 = vmatprep.subr.bf16.mxu0 0
        %3670 = vmatpush1.bf16.msra.mxu0 0
        %3671 = vmatprep.subr.bf16.mxu0 0
        %3672 = vmatpush1.bf16.msra.mxu0 0
        %3673 = vmatprep.subr.bf16.mxu0 0
        %3674 = vmatpush1.bf16.msra.mxu0 0
        %3675 = vmatprep.mubr.bf16.mxu0 0
        %3676 = vmatmul.mubr.bf16.gmra.mrb[0].mxu0 %v3641
        %v3677 = vpop.f32.mrb[0].mxu0
        %v3678 = vadd.f32 0.0, %v3677
        %v3679 = vpop.f32.mrb[0].mxu0
        %v3680 = vpop.f32.mrb[0].mxu0
        %v3681 = vadd.f32 0.0, %v3680
        %v3682 = vpop.f32.mrb[0].mxu0
        %3683 = vdwg.mxu0
        %v3684 = vadd.f32 %v3421, %v3678
        %v3685 = vadd.f32 %v3422, %v3681
        %v3686 = vadd.f32 %v1144, %v3684
        %v3687 = vadd.f32 %v1145, %v3685
        %v3689 = vlaneseq
        %v3690 = vshrl.u32 %v3689, 7
        %v3691 = vsub.s32 0, %v3690
        %v3692 = vrot.slane %v1091, %v3691
        %v3694 = vadd.f32 %v3686, %v3692
        %v3695 = vadd.f32 %v3687, %v3692
        %3696 = vadd.xlane.f32.xlu0 %v3694
        %v3697 = vpop.xlane.xlu0 %3696
        %3698 = vadd.xlane.f32.xlu0 %v3695
        %v3699 = vpop.xlane.xlu0 %3698
        %v3700 = vmul.f32 %v3697, %v1150
        %v3701 = vmul.f32 %v3699, %v1150
        %v3702 = vsub.f32 %v3694, %v3700
        %v3703 = vsub.f32 %v3695, %v3701
        %v3704 = vmul.f32 %v3702, %v3702
        %v3705 = vmul.f32 %v3703, %v3703
        %3706 = vadd.xlane.f32.xlu0 %v3704
        %v3707 = vpop.xlane.xlu0 %3706
        %3708 = vadd.xlane.f32.xlu0 %v3705
        %v3709 = vpop.xlane.xlu0 %3708
        %v3710 = vmul.f32 %v3707, 0.007874016
        %v3711 = vmul.f32 %v3709, 0.007874016
        %v3712 = vrsqrt.pop %v3710
        %v3713 = vmul.f32 %v3710, %v3712
        %vm3714 = vcmp.eq.f32.partialorder %v3710, inf
        %v3715 = vsel %vm3714, %v3710, %v3713
        %vm3716 = vcmp.eq.f32.partialorder %v3710, 0.0
        %v3717 = vand.u32 %v3710, 2147483648
        %v3718 = vsel %vm3716, %v3717, %v3715
        %v3719 = vrsqrt.pop %v3711
        %v3720 = vmul.f32 %v3711, %v3719
        %vm3721 = vcmp.eq.f32.partialorder %v3711, inf
        %v3722 = vsel %vm3721, %v3711, %v3720
        %vm3723 = vcmp.eq.f32.partialorder %v3711, 0.0
        %v3724 = vand.u32 %v3711, 2147483648
        %v3725 = vsel %vm3723, %v3724, %v3722
        %v3726 = vadd.f32 %v3718, 1e-06
        %v3727 = vadd.f32 %v3725, 1e-06
        %v3728 = vrcp.pop %v3726
        %v3729 = vrcp.pop %v3727
        %v3731 = vlaneseq
        %v3732 = vshrl.u32 %v3731, 7
        %v3733 = vsub.s32 0, %v3732
        %v3734 = vrot.slane %v1092, %v3733
        %v3736 = vmul.f32 %v3734, %v3702
        %v3737 = vmul.f32 %v3734, %v3703
        %v3738 = vmul.f32 %v3736, %v3728
        %v3739 = vmul.f32 %v3737, %v3729
        %v3741 = vlaneseq
        %v3742 = vshrl.u32 %v3741, 7
        %v3743 = vsub.s32 0, %v3742
        %v3744 = vrot.slane %v1093, %v3743
        %v3746 = vadd.f32 %v3738, %v3744
        %v3747 = vadd.f32 %v3739, %v3744
        %v3748 = vpack.c.bf16 %v3747, %v3746
        %v3750 = vlaneseq
        %v3751 = vshrl.u32 %v3750, 7
        %v3752 = vsub.s32 0, %v3751
        %v3753 = vrot.slane %v1110, %v3752
        %v3754 = vlaneseq
        %v3755 = vshrl.u32 %v3754, 7
        %v3756 = vsub.s32 1, %v3755
        %v3757 = vrot.slane %v1110, %v3756
        %v3776 = vunpack.c.l.b16 %v1094
        %v3777 = vunpack.c.h.b16 %v1094
        %v3778 = vunpack.c.l.b16 %v1095
        %v3779 = vunpack.c.h.b16 %v1095
        %v3780 = vunpack.c.l.b16 %v1096
        %v3781 = vunpack.c.h.b16 %v1096
        %v3782 = vunpack.c.l.b16 %v1097
        %v3783 = vunpack.c.h.b16 %v1097
        %v3784 = vunpack.c.l.b16 %v1098
        %v3785 = vunpack.c.h.b16 %v1098
        %v3786 = vunpack.c.l.b16 %v1099
        %v3787 = vunpack.c.h.b16 %v1099
        %v3788 = vunpack.c.l.b16 %v1100
        %v3789 = vunpack.c.h.b16 %v1100
        %v3790 = vunpack.c.l.b16 %v1101
        %v3791 = vunpack.c.h.b16 %v1101
        %v3792 = vunpack.c.l.b16 %v1102
        %v3793 = vunpack.c.h.b16 %v1102
        %v3794 = vunpack.c.l.b16 %v1103
        %v3795 = vunpack.c.h.b16 %v1103
        %v3796 = vunpack.c.l.b16 %v1104
        %v3797 = vunpack.c.h.b16 %v1104
        %v3798 = vunpack.c.l.b16 %v1105
        %v3799 = vunpack.c.h.b16 %v1105
        %v3800 = vunpack.c.l.b16 %v1106
        %v3801 = vunpack.c.h.b16 %v1106
        %v3802 = vunpack.c.l.b16 %v1107
        %v3803 = vunpack.c.h.b16 %v1107
        %v3804 = vunpack.c.l.b16 %v1108
        %v3805 = vunpack.c.h.b16 %v1108
        %v3806 = vunpack.c.l.b16 %v1109
        %v3807 = vunpack.c.h.b16 %v1109
        %v3808 = vpack.c.b16 %v3778, %v3776
        %v3809 = vpack.c.b16 %v3779, %v3777
        %v3810 = vpack.c.b16 %v3782, %v3780
        %v3811 = vpack.c.b16 %v3783, %v3781
        %v3812 = vpack.c.b16 %v3786, %v3784
        %v3813 = vpack.c.b16 %v3787, %v3785
        %v3814 = vpack.c.b16 %v3790, %v3788
        %v3815 = vpack.c.b16 %v3791, %v3789
        %v3816 = vpack.c.b16 %v3794, %v3792
        %v3817 = vpack.c.b16 %v3795, %v3793
        %v3818 = vpack.c.b16 %v3798, %v3796
        %v3819 = vpack.c.b16 %v3799, %v3797
        %v3820 = vpack.c.b16 %v3802, %v3800
        %v3821 = vpack.c.b16 %v3803, %v3801
        %v3822 = vpack.c.b16 %v3806, %v3804
        %v3823 = vpack.c.b16 %v3807, %v3805
        %3840 = vmatprep.subr.bf16.mxu0 %v3809
        %3841 = vmatpush1.bf16.msra.mxu0 %v3808
        %3842 = vmatprep.subr.bf16.mxu0 %v3811
        %3843 = vmatpush1.bf16.msra.mxu0 %v3810
        %3844 = vmatprep.subr.bf16.mxu0 %v3813
        %3845 = vmatpush1.bf16.msra.mxu0 %v3812
        %3846 = vmatprep.subr.bf16.mxu0 %v3815
        %3847 = vmatpush1.bf16.msra.mxu0 %v3814
        %3848 = vmatprep.subr.bf16.mxu0 %v3817
        %3849 = vmatpush1.bf16.msra.mxu0 %v3816
        %3850 = vmatprep.subr.bf16.mxu0 %v3819
        %3851 = vmatpush1.bf16.msra.mxu0 %v3818
        %3852 = vmatprep.subr.bf16.mxu0 %v3821
        %3853 = vmatpush1.bf16.msra.mxu0 %v3820
        %3854 = vmatprep.subr.bf16.mxu0 %v3823
        %3855 = vmatpush1.bf16.msra.mxu0 %v3822
        %3856 = vmatprep.subr.bf16.mxu0 0
        %3857 = vmatpush1.bf16.msra.mxu0 0
        %3858 = vmatprep.subr.bf16.mxu0 0
        %3859 = vmatpush1.bf16.msra.mxu0 0
        %3860 = vmatprep.subr.bf16.mxu0 0
        %3861 = vmatpush1.bf16.msra.mxu0 0
        %3862 = vmatprep.subr.bf16.mxu0 0
        %3863 = vmatpush1.bf16.msra.mxu0 0
        %3864 = vmatprep.subr.bf16.mxu0 0
        %3865 = vmatpush1.bf16.msra.mxu0 0
        %3866 = vmatprep.subr.bf16.mxu0 0
        %3867 = vmatpush1.bf16.msra.mxu0 0
        %3868 = vmatprep.subr.bf16.mxu0 0
        %3869 = vmatpush1.bf16.msra.mxu0 0
        %3870 = vmatprep.subr.bf16.mxu0 0
        %3871 = vmatpush1.bf16.msra.mxu0 0
        %3872 = vmatprep.mubr.bf16.mxu0 0
        %3873 = vmatmul.mubr.bf16.gmra.mrb[0].mxu0 %v3748
        %v3874 = vpop.f32.mrb[0].mxu0
        %v3875 = vadd.f32 %v3753, %v3874
        %v3876 = vpop.f32.mrb[0].mxu0
        %v3877 = vadd.f32 %v3757, %v3876
        %v3878 = vpop.f32.mrb[0].mxu0
        %v3879 = vadd.f32 %v3753, %v3878
        %v3880 = vpop.f32.mrb[0].mxu0
        %v3881 = vadd.f32 %v3757, %v3880
        %3882 = vdwg.mxu0
        %v3883 = vmax.f32 %v3875, 0.0
        %v3884 = vmax.f32 %v3877, 0.0
        %v3885 = vmax.f32 %v3879, 0.0
        %v3886 = vmax.f32 %v3881, 0.0
        %v3887 = vpack.c.bf16 %v3885, %v3883
        %v3888 = vpack.c.bf16 %v3886, %v3884
        %v3921 = vunpack.c.l.b16 %v1111
        %v3922 = vunpack.c.l.b16 %v1112
        %v3923 = vunpack.c.l.b16 %v1113
        %v3924 = vunpack.c.l.b16 %v1114
        %v3925 = vunpack.c.l.b16 %v1115
        %v3926 = vunpack.c.l.b16 %v1116
        %v3927 = vunpack.c.l.b16 %v1117
        %v3928 = vunpack.c.l.b16 %v1118
        %v3929 = vunpack.c.l.b16 %v1119
        %v3930 = vunpack.c.l.b16 %v1120
        %v3931 = vunpack.c.l.b16 %v1121
        %v3932 = vunpack.c.l.b16 %v1122
        %v3933 = vunpack.c.l.b16 %v1123
        %v3934 = vunpack.c.l.b16 %v1124
        %v3935 = vunpack.c.l.b16 %v1125
        %v3936 = vunpack.c.l.b16 %v1126
        %v3937 = vunpack.c.l.b16 %v1127
        %v3938 = vunpack.c.l.b16 %v1128
        %v3939 = vunpack.c.l.b16 %v1129
        %v3940 = vunpack.c.l.b16 %v1130
        %v3941 = vunpack.c.l.b16 %v1131
        %v3942 = vunpack.c.l.b16 %v1132
        %v3943 = vunpack.c.l.b16 %v1133
        %v3944 = vunpack.c.l.b16 %v1134
        %v3945 = vunpack.c.l.b16 %v1135
        %v3946 = vunpack.c.l.b16 %v1136
        %v3947 = vunpack.c.l.b16 %v1137
        %v3948 = vunpack.c.l.b16 %v1138
        %v3949 = vunpack.c.l.b16 %v1139
        %v3950 = vunpack.c.l.b16 %v1140
        %v3951 = vunpack.c.l.b16 %v1141
        %v3952 = vunpack.c.l.b16 %v1142
        %v3953 = vpack.c.b16 %v3922, %v3921
        %v3954 = vpack.c.b16 %v3924, %v3923
        %v3955 = vpack.c.b16 %v3926, %v3925
        %v3956 = vpack.c.b16 %v3928, %v3927
        %v3957 = vpack.c.b16 %v3930, %v3929
        %v3958 = vpack.c.b16 %v3932, %v3931
        %v3959 = vpack.c.b16 %v3934, %v3933
        %v3960 = vpack.c.b16 %v3936, %v3935
        %v3961 = vpack.c.b16 %v3938, %v3937
        %v3962 = vpack.c.b16 %v3940, %v3939
        %v3963 = vpack.c.b16 %v3942, %v3941
        %v3964 = vpack.c.b16 %v3944, %v3943
        %v3965 = vpack.c.b16 %v3946, %v3945
        %v3966 = vpack.c.b16 %v3948, %v3947
        %v3967 = vpack.c.b16 %v3950, %v3949
        %v3968 = vpack.c.b16 %v3952, %v3951
        %3985 = vmatprep.subr.bf16.mxu0 0
        %3986 = vmatpush1.bf16.msra.mxu0 %v3953
        %3987 = vmatprep.subr.bf16.mxu0 0
        %3988 = vmatpush1.bf16.msra.mxu0 %v3954
        %3989 = vmatprep.subr.bf16.mxu0 0
        %3990 = vmatpush1.bf16.msra.mxu0 %v3955
        %3991 = vmatprep.subr.bf16.mxu0 0
        %3992 = vmatpush1.bf16.msra.mxu0 %v3956
        %3993 = vmatprep.subr.bf16.mxu0 0
        %3994 = vmatpush1.bf16.msra.mxu0 %v3957
        %3995 = vmatprep.subr.bf16.mxu0 0
        %3996 = vmatpush1.bf16.msra.mxu0 %v3958
        %3997 = vmatprep.subr.bf16.mxu0 0
        %3998 = vmatpush1.bf16.msra.mxu0 %v3959
        %3999 = vmatprep.subr.bf16.mxu0 0
        %4000 = vmatpush1.bf16.msra.mxu0 %v3960
        %4001 = vmatprep.subr.bf16.mxu0 0
        %4002 = vmatpush1.bf16.msra.mxu0 %v3961
        %4003 = vmatprep.subr.bf16.mxu0 0
        %4004 = vmatpush1.bf16.msra.mxu0 %v3962
        %4005 = vmatprep.subr.bf16.mxu0 0
        %4006 = vmatpush1.bf16.msra.mxu0 %v3963
        %4007 = vmatprep.subr.bf16.mxu0 0
        %4008 = vmatpush1.bf16.msra.mxu0 %v3964
        %4009 = vmatprep.subr.bf16.mxu0 0
        %4010 = vmatpush1.bf16.msra.mxu0 %v3965
        %4011 = vmatprep.subr.bf16.mxu0 0
        %4012 = vmatpush1.bf16.msra.mxu0 %v3966
        %4013 = vmatprep.subr.bf16.mxu0 0
        %4014 = vmatpush1.bf16.msra.mxu0 %v3967
        %4015 = vmatprep.subr.bf16.mxu0 0
        %4016 = vmatpush1.bf16.msra.mxu0 %v3968
        %4017 = vmatprep.mubr.bf16.mxu0 %v3888
        %4018 = vmatmul.mubr.bf16.gmra.mrb[0].mxu0 %v3887
        %v4019 = vpop.f32.mrb[0].mxu0
        %v4020 = vadd.f32 0.0, %v4019
        %v4021 = vpop.f32.mrb[0].mxu0
        %v4022 = vpop.f32.mrb[0].mxu0
        %v4023 = vadd.f32 0.0, %v4022
        %v4024 = vpop.f32.mrb[0].mxu0
        %4025 = vdwg.mxu0
        %v4026 = vadd.f32 %v3694, %v4020
        %v4027 = vadd.f32 %v3695, %v4023
        %v4029 = vlaneseq
        %v4030 = vshrl.u32 %v4029, 7
        %v4031 = vsub.s32 0, %v4030
        %v4032 = vrot.slane %v1143, %v4031
        %v4034 = vadd.f32 %v4026, %v4032
        %v4035 = vadd.f32 %v4027, %v4032
        %4036 = vst [vmem:[#allocation2] sm:$0xff] %v4034
        %4037 = vst [vmem:[#allocation2 + $0x8] sm:$0xff] %v4035
        %p4038 = scmp.eq.s32.totalorder %s43, 1
        // Predicated region
        $region133: #{transformer_forward.1} parent=107 // pred_check
          %p4039 = pneg %p4038
        $region134: #{transformer_forward.1} parent=107 // pred_check_branch
          %4041 = sbr.rel (%p4039) target = $region136
        $region135: #{transformer_forward.1} parent=107 // pred_region
          %v4042 = vld [vmem:[%s18] sm:$0x1]
          %v4043 = vld [vmem:[%s19] sm:$0x1]
          %4044 = vadd.xlane.f32.xlu0 %v4034
          %v4045 = vpop.xlane.xlu0 %4044
          %4046 = vadd.xlane.f32.xlu0 %v4035
          %v4047 = vpop.xlane.xlu0 %4046
          %v4048 = vmul.f32 %v4045, %v1150
          %v4049 = vmul.f32 %v4047, %v1150
          %v4050 = vsub.f32 %v4034, %v4048
          %v4051 = vsub.f32 %v4035, %v4049
          %v4052 = vmul.f32 %v4050, %v4050
          %v4053 = vmul.f32 %v4051, %v4051
          %4054 = vadd.xlane.f32.xlu0 %v4052
          %v4055 = vpop.xlane.xlu0 %4054
          %4056 = vadd.xlane.f32.xlu0 %v4053
          %v4057 = vpop.xlane.xlu0 %4056
          %v4058 = vmul.f32 %v4055, 0.007874016
          %v4059 = vmul.f32 %v4057, 0.007874016
          %v4060 = vrsqrt.pop %v4058
          %v4061 = vmul.f32 %v4058, %v4060
          %vm4062 = vcmp.eq.f32.partialorder %v4058, inf
          %v4063 = vsel %vm4062, %v4058, %v4061
          %vm4064 = vcmp.eq.f32.partialorder %v4058, 0.0
          %v4065 = vand.u32 %v4058, 2147483648
          %v4066 = vsel %vm4064, %v4065, %v4063
          %v4067 = vrsqrt.pop %v4059
          %v4068 = vmul.f32 %v4059, %v4067
          %vm4069 = vcmp.eq.f32.partialorder %v4059, inf
          %v4070 = vsel %vm4069, %v4059, %v4068
          %vm4071 = vcmp.eq.f32.partialorder %v4059, 0.0
          %v4072 = vand.u32 %v4059, 2147483648
          %v4073 = vsel %vm4071, %v4072, %v4070
          %v4074 = vadd.f32 %v4066, 1e-06
          %v4075 = vadd.f32 %v4073, 1e-06
          %v4076 = vrcp.pop %v4074
          %v4077 = vrcp.pop %v4075
          %v4079 = vlaneseq
          %v4080 = vshrl.u32 %v4079, 7
          %v4081 = vsub.s32 0, %v4080
          %v4082 = vrot.slane %v4042, %v4081
          %v4084 = vmul.f32 %v4082, %v4050
          %v4085 = vmul.f32 %v4082, %v4051
          %v4086 = vmul.f32 %v4084, %v4076
          %v4087 = vmul.f32 %v4085, %v4077
          %v4089 = vlaneseq
          %v4090 = vshrl.u32 %v4089, 7
          %v4091 = vsub.s32 0, %v4090
          %v4092 = vrot.slane %v4043, %v4091
          %v4094 = vadd.f32 %v4086, %v4092
          %v4095 = vadd.f32 %v4087, %v4092
          %4096 = vxpose.xlu0.b32.start [1/16] %v1016, 128
          %4097 = vxpose.xlu0.b32.cont [2/16] 0.0, 128
          %4098 = vxpose.xlu0.b32.cont [3/16] 0.0, 128
          %4099 = vxpose.xlu0.b32.cont [4/16] 0.0, 128
          %4100 = vxpose.xlu0.b32.cont [5/16] 0.0, 128
          %4101 = vxpose.xlu0.b32.cont [6/16] 0.0, 128
          %4102 = vxpose.xlu0.b32.cont [7/16] 0.0, 128
          %4103 = vxpose.xlu0.b32.cont [8/16] 0.0, 128
          %4104 = vxpose.xlu0.b32.cont [9/16] 0.0, 128
          %4105 = vxpose.xlu0.b32.cont [10/16] 0.0, 128
          %4106 = vxpose.xlu0.b32.cont [11/16] 0.0, 128
          %4107 = vxpose.xlu0.b32.cont [12/16] 0.0, 128
          %4108 = vxpose.xlu0.b32.cont [13/16] 0.0, 128
          %4109 = vxpose.xlu0.b32.cont [14/16] 0.0, 128
          %4110 = vxpose.xlu0.b32.cont [15/16] 0.0, 128
          %4111 = vxpose.xlu0.b32.end [16/16] 0.0, 128
          %v4112 = vpop.trf.xlu0
          %v4113 = vpop.trf.xlu0
          %v4114 = vpop.trf.xlu0
          %v4115 = vpop.trf.xlu0
          %v4116 = vpop.trf.xlu0
          %v4117 = vpop.trf.xlu0
          %v4118 = vpop.trf.xlu0
          %v4119 = vpop.trf.xlu0
          %v4120 = vpop.trf.xlu0
          %v4121 = vpop.trf.xlu0
          %v4122 = vpop.trf.xlu0
          %v4123 = vpop.trf.xlu0
          %v4124 = vpop.trf.xlu0
          %v4125 = vpop.trf.xlu0
          %v4126 = vpop.trf.xlu0
          %v4127 = vpop.trf.xlu0
          %4128 = vxpose.xlu0.b32.start [1/16] %v1017, 128
          %4129 = vxpose.xlu0.b32.cont [2/16] 0.0, 128
          %4130 = vxpose.xlu0.b32.cont [3/16] 0.0, 128
          %4131 = vxpose.xlu0.b32.cont [4/16] 0.0, 128
          %4132 = vxpose.xlu0.b32.cont [5/16] 0.0, 128
          %4133 = vxpose.xlu0.b32.cont [6/16] 0.0, 128
          %4134 = vxpose.xlu0.b32.cont [7/16] 0.0, 128
          %4135 = vxpose.xlu0.b32.cont [8/16] 0.0, 128
          %4136 = vxpose.xlu0.b32.cont [9/16] 0.0, 128
          %4137 = vxpose.xlu0.b32.cont [10/16] 0.0, 128
          %4138 = vxpose.xlu0.b32.cont [11/16] 0.0, 128
          %4139 = vxpose.xlu0.b32.cont [12/16] 0.0, 128
          %4140 = vxpose.xlu0.b32.cont [13/16] 0.0, 128
          %4141 = vxpose.xlu0.b32.cont [14/16] 0.0, 128
          %4142 = vxpose.xlu0.b32.cont [15/16] 0.0, 128
          %4143 = vxpose.xlu0.b32.end [16/16] 0.0, 128
          %v4144 = vpop.trf.xlu0
          %v4145 = vpop.trf.xlu0
          %v4146 = vpop.trf.xlu0
          %v4147 = vpop.trf.xlu0
          %v4148 = vpop.trf.xlu0
          %v4149 = vpop.trf.xlu0
          %v4150 = vpop.trf.xlu0
          %v4151 = vpop.trf.xlu0
          %v4152 = vpop.trf.xlu0
          %v4153 = vpop.trf.xlu0
          %v4154 = vpop.trf.xlu0
          %v4155 = vpop.trf.xlu0
          %v4156 = vpop.trf.xlu0
          %v4157 = vpop.trf.xlu0
          %v4158 = vpop.trf.xlu0
          %v4159 = vpop.trf.xlu0
          %4161 = vset.pattern.permute.xlu0 0
          %4162 = vperm.xlu0 %4161, %v4112
          %v4163 = vpop.permute.xlu0 %4162
          %4166 = vset.pattern.permute.xlu0 0
          %4167 = vperm.xlu0 %4166, %v4144
          %v4168 = vpop.permute.xlu0 %4167
          %v4170 = vmul.f32 %v4094, %v4163
          %v4171 = vmul.f32 %v4095, %v4168
          %v4172 = vrot.slane %v4170, 4
          %v4173 = vadd.f32 %v4170, %v4172
          %v4174 = vrot.slane %v4173, 2
          %v4175 = vadd.f32 %v4173, %v4174
          %v4176 = vrot.slane %v4175, 1
          %v4177 = vadd.f32 %v4175, %v4176
          %v4178 = vrot.slane %v4171, 4
          %v4179 = vadd.f32 %v4171, %v4178
          %v4180 = vrot.slane %v4179, 2
          %v4181 = vadd.f32 %v4179, %v4180
          %v4182 = vrot.slane %v4181, 1
          %v4183 = vadd.f32 %v4181, %v4182
          %vm4184 = vcmask 7168
          %v4185 = vsel %vm4184, %v4112, 0.0
          %v4186 = vrot.slane %v4185, 4
          %v4187 = vadd.f32 %v4185, %v4186
          %v4188 = vrot.slane %v4187, 2
          %v4189 = vadd.f32 %v4187, %v4188
          %v4190 = vrot.slane %v4189, 1
          %v4191 = vadd.f32 %v4189, %v4190
          %v4192 = vsel %vm4184, %v4144, 0.0
          %v4193 = vrot.slane %v4192, 4
          %v4194 = vadd.f32 %v4192, %v4193
          %v4195 = vrot.slane %v4194, 2
          %v4196 = vadd.f32 %v4194, %v4195
          %v4197 = vrot.slane %v4196, 1
          %v4198 = vadd.f32 %v4196, %v4197
          %v4199 = vmax.f32 %v4191, 1e-09
          %v4200 = vmax.f32 %v4198, 1e-09
          %v4201 = vrcp.pop %v4199
          %v4202 = vrcp.pop %v4200
          %4204 = vset.pattern.permute.xlu0 0
          %4205 = vperm.xlu0 %4204, %v4201
          %v4206 = vpop.permute.xlu0 %4205
          %4209 = vset.pattern.permute.xlu0 0
          %4210 = vperm.xlu0 %4209, %v4202
          %v4211 = vpop.permute.xlu0 %4210
          %v4213 = vmul.f32 %v4177, %v4206
          %v4214 = vmul.f32 %v4183, %v4211
          %v4215 = vpack.c.bf16 %v4213, %v4213
          %v4216 = vpack.c.bf16 %v4214, %v4214
          %v4217 = vld [vmem:[%s20] sm:$0xf]
          %v4218 = vld [vmem:[%s20 + $0x4] sm:$0xf]
          %v4219 = vld [vmem:[%s20 + $0x8] sm:$0xf]
          %v4220 = vld [vmem:[%s20 + $0xc] sm:$0xf]
          %v4221 = vld [vmem:[%s20 + $0x10] sm:$0xf]
          %v4222 = vld [vmem:[%s20 + $0x14] sm:$0xf]
          %v4223 = vld [vmem:[%s20 + $0x18] sm:$0xf]
          %v4224 = vld [vmem:[%s20 + $0x1c] sm:$0xf]
          %v4225 = vld [vmem:[%s20 + $0x20] sm:$0xf]
          %v4226 = vld [vmem:[%s20 + $0x24] sm:$0xf]
          %v4227 = vld [vmem:[%s20 + $0x28] sm:$0xf]
          %v4228 = vld [vmem:[%s20 + $0x2c] sm:$0xf]
          %v4229 = vld [vmem:[%s20 + $0x30] sm:$0xf]
          %v4230 = vld [vmem:[%s20 + $0x34] sm:$0xf]
          %v4231 = vld [vmem:[%s20 + $0x38] sm:$0xf]
          %v4232 = vld [vmem:[%s20 + $0x3c] sm:$0xf]
          %v4233 = vld [vmem:[%s21] sm:$0x1]
          %v4235 = vlaneseq
          %v4236 = vshrl.u32 %v4235, 7
          %v4237 = vsub.s32 0, %v4236
          %v4238 = vrot.slane %v4233, %v4237
          %v4242 = vunpack.c.l.b16 %v4215
          %v4243 = vunpack.c.l.b16 %v4216
          %vm4244 = vcmask 1041409
          %v4245 = vsel %vm4244, %v4243, %v4242
          %v4246 = vpack.c.b16 %v4245, %v4245
          %v4264 = vunpack.c.l.b16 %v4217
          %v4265 = vunpack.c.l.b16 %v4218
          %v4266 = vunpack.c.l.b16 %v4219
          %v4267 = vunpack.c.l.b16 %v4220
          %v4268 = vunpack.c.l.b16 %v4221
          %v4269 = vunpack.c.l.b16 %v4222
          %v4270 = vunpack.c.l.b16 %v4223
          %v4271 = vunpack.c.l.b16 %v4224
          %v4272 = vunpack.c.l.b16 %v4225
          %v4273 = vunpack.c.l.b16 %v4226
          %v4274 = vunpack.c.l.b16 %v4227
          %v4275 = vunpack.c.l.b16 %v4228
          %v4276 = vunpack.c.l.b16 %v4229
          %v4277 = vunpack.c.l.b16 %v4230
          %v4278 = vunpack.c.l.b16 %v4231
          %v4279 = vunpack.c.l.b16 %v4232
          %v4280 = vpack.c.b16 %v4265, %v4264
          %v4281 = vpack.c.b16 %v4267, %v4266
          %v4282 = vpack.c.b16 %v4269, %v4268
          %v4283 = vpack.c.b16 %v4271, %v4270
          %v4284 = vpack.c.b16 %v4273, %v4272
          %v4285 = vpack.c.b16 %v4275, %v4274
          %v4286 = vpack.c.b16 %v4277, %v4276
          %v4287 = vpack.c.b16 %v4279, %v4278
          %4296 = vmatprep.subr.bf16.mxu0 0
          %4297 = vmatpush1.bf16.msra.mxu0 %v4280
          %4298 = vmatprep.subr.bf16.mxu0 0
          %4299 = vmatpush1.bf16.msra.mxu0 %v4281
          %4300 = vmatprep.subr.bf16.mxu0 0
          %4301 = vmatpush1.bf16.msra.mxu0 %v4282
          %4302 = vmatprep.subr.bf16.mxu0 0
          %4303 = vmatpush1.bf16.msra.mxu0 %v4283
          %4304 = vmatprep.subr.bf16.mxu0 0
          %4305 = vmatpush1.bf16.msra.mxu0 %v4284
          %4306 = vmatprep.subr.bf16.mxu0 0
          %4307 = vmatpush1.bf16.msra.mxu0 %v4285
          %4308 = vmatprep.subr.bf16.mxu0 0
          %4309 = vmatpush1.bf16.msra.mxu0 %v4286
          %4310 = vmatprep.subr.bf16.mxu0 0
          %4311 = vmatpush1.bf16.msra.mxu0 %v4287
          %4312 = vmatprep.subr.bf16.mxu0 0
          %4313 = vmatpush1.bf16.msra.mxu0 0
          %4314 = vmatprep.subr.bf16.mxu0 0
          %4315 = vmatpush1.bf16.msra.mxu0 0
          %4316 = vmatprep.subr.bf16.mxu0 0
          %4317 = vmatpush1.bf16.msra.mxu0 0
          %4318 = vmatprep.subr.bf16.mxu0 0
          %4319 = vmatpush1.bf16.msra.mxu0 0
          %4320 = vmatprep.subr.bf16.mxu0 0
          %4321 = vmatpush1.bf16.msra.mxu0 0
          %4322 = vmatprep.subr.bf16.mxu0 0
          %4323 = vmatpush1.bf16.msra.mxu0 0
          %4324 = vmatprep.subr.bf16.mxu0 0
          %4325 = vmatpush1.bf16.msra.mxu0 0
          %4326 = vmatprep.subr.bf16.mxu0 0
          %4327 = vmatpush1.bf16.msra.mxu0 0
          %4328 = vmatprep.mubr.bf16.mxu0 0
          %4329 = vmatmul.mubr.bf16.gmra.mrb[0].mxu0 %v4246
          %v4330 = vpop.f32.mrb[0].mxu0
          %v4331 = vadd.f32 %v4238, %v4330
          %v4332 = vpop.f32.mrb[0].mxu0
          %v4333 = vpop.f32.mrb[0].mxu0
          %v4334 = vpop.f32.mrb[0].mxu0
          %4335 = vdwg.mxu0
          %vm4336 = vcmask 9216
          %4337 = vst.msk [vmem:[#allocation12] sm:$0x3] %vm4336, %v4331
        $region136: #{transformer_forward.1} parent=107 // pred_fallthru
          _
        // Predicated region
        $region137: #{transformer_forward.1} parent=107 // pred_check
          %p4338 = pneg %p598
        $region138: #{transformer_forward.1} parent=107 // pred_check_branch
          %4340 = sbr.rel (%p4338) target = $region140
        $region139: #{transformer_forward.1} parent=107 // pred_region
          %s4342 = ssub.s32 32, 32
          %4343 = vsyncadd [#allocation5], %s4342
          %s4345 = sshll.u32 [#allocation12], 4
          %s4346 = int_to_ptr.vmem [resolvable:$true] %s4345
          %4348 = dma.vmem_to_hbm [thread:$0]  %s4346, 32, %s22, [#allocation5]
        $region140: #{transformer_forward.1} parent=107 // pred_fallthru
          _
        // Predicated region
        $region141: #{transformer_forward.1} parent=107 // pred_check
          %p4349 = pneg %p598
        $region142: #{transformer_forward.1} parent=107 // pred_check_branch
          %4351 = sbr.rel (%p4349) target = $region144
        $region143: #{transformer_forward.1} parent=107 // pred_region
          %4352 = dma.done [#allocation5], 32
        $region144: #{transformer_forward.1} parent=107 // pred_fallthru
          _
      $region108: #{transformer_forward.1} parent=5 // pred_fallthru
        _
      %p4353 = scmp.le.s32.totalorder 2, %s38
      // Predicated region
      $region145: #{transformer_forward.1} parent=5 // pred_check
        %p4354 = pneg %p4353
      $region146: #{transformer_forward.1} parent=5 // pred_check_branch
        %4356 = sbr.rel (%p4354) target = $region148
      $region147: #{transformer_forward.1} parent=5 // pred_region
        %s4357 = ssub.s32 %s38, 2
      $region148: #{transformer_forward.1} parent=5 // pred_fallthru
        _
    $region6: #{transformer_forward.1} parent=1 // loop_footer
      %s42 = sadd.s32 1, %s38
    $region7: #{transformer_forward.1} parent=1 // loop_footer_branch
      %37 = sbr.rel target = $region3
    $region8: #{transformer_forward.1} parent=1 // loop_exit
      _
    %4358 = vsyncpa [#allocation4], 1
    %s4359 = scalar_lea.sflag [#allocation4], 1
    %4360 = vsyncpa %s4359, 1
    %4361 = vsyncpa [#allocation7], 1
    %s4362 = scalar_lea.sflag [#allocation7], 1
    %4363 = vsyncpa %s4362, 1
    %4364 = vsyncpa [#allocation10], 1
    %s4365 = scalar_lea.sflag [#allocation10], 1
    %4366 = vsyncpa %s4365, 1
    %4367 = vsyncpa [#allocation5], 1
    %s4368 = scalar_lea.sflag [#allocation5], 1
    %4369 = vsyncpa %s4368, 1

</llo_original>
